<compile_context>
chip_gen: v5e
topology: v5e:2x2
jax: 0.10.0
libtpu: 0.0.40
codegen_flags: <defaults>
</compile_context>

<pallas_src>
import jax
import jax.numpy as jnp
from jax.experimental import pallas as pl
from jax.experimental.pallas import tpu as pltpu

EPS = 1e-5


def _round_up(x, m):
    return ((x + m - 1) // m) * m


def base_pointnet_kernel(x_ref, w1_ref, t1_ref, w2_ref, t2_ref, w3_ref, t3_ref, out_ref):
    """Fused 3-layer per-point MLP (+ folded BN + ReLU) + passthrough concat.

    x_ref : (TM, 5)   f32    flattened (B*N, C) points
    w*_ref: (Cin,Cout) bf16  BN-scale-folded weights
    t*_ref: (1, Cout)  f32   folded BN/bias shift
    out_ref: (TM, 28)  f32   [x[:, :4] | relu-mlp(x)]
    """
    x = x_ref[...]                                             # (TM, 5) f32
    t1 = t1_ref[...]
    t2 = t2_ref[...]
    t3 = t3_ref[...]

    # layer 1: (TM,5) x (5,8) -> (TM,8)
    h = jnp.dot(x.astype(jnp.bfloat16), w1_ref[...],
                preferred_element_type=jnp.float32)
    h = jnp.maximum(h + t1, 0.0)

    # layer 2: (TM,8) x (8,16) -> (TM,16)
    h = jnp.dot(h.astype(jnp.bfloat16), w2_ref[...],
                preferred_element_type=jnp.float32)
    h = jnp.maximum(h + t2, 0.0)

    # layer 3: (TM,16) x (16,24) -> (TM,24)
    h = jnp.dot(h.astype(jnp.bfloat16), w3_ref[...],
                preferred_element_type=jnp.float32)
    h = jnp.maximum(h + t3, 0.0)

    # fused concat of passthrough features (exact f32 copy) + MLP features
    out_ref[...] = jnp.concatenate([x[:, :4], h], axis=-1)     # (TM, 28)


def _fold_layer(W, b, g, be, m, v):
    """Fold conv bias + inference BatchNorm into the weight matrix and a shift.

    W: (Cout, Cin, 1) torch Conv1d weight.  Returns (Cin, Cout) bf16, (1, Cout) f32.
    """
    s = g / jnp.sqrt(v + EPS)                                  # (Cout,)
    Wf = jnp.squeeze(W, -1).T * s[None, :]                     # (Cin, Cout)
    t = (b - m) * s + be                                       # (Cout,)
    return Wf.astype(jnp.bfloat16), t.reshape(1, -1).astype(jnp.float32)


def base_pointnet(in_mat, params, *, tm=8192):
    """in_mat: (B, N, 5) f32 -> (B, N, 28) f32."""
    B, N, C = in_mat.shape
    assert C == 5
    (W1, b1, g1, be1, m1, v1,
     W2, b2, g2, be2, m2, v2,
     W3, b3, g3, be3, m3, v3) = params

    # ---- glue (no compute of consequence): fold BN, flatten batch*points ----
    w1, t1 = _fold_layer(W1, b1, g1, be1, m1, v1)              # (5, 8),  (1, 8)
    w2, t2 = _fold_layer(W2, b2, g2, be2, m2, v2)              # (8, 16), (1, 16)
    w3, t3 = _fold_layer(W3, b3, g3, be3, m3, v3)              # (16,24), (1, 24)

    M = B * N
    x2d = in_mat.reshape(M, C).astype(jnp.float32)
    tm = min(tm, _round_up(M, 8))                              # adapt tile to tiny inputs
    Mp = _round_up(M, tm)
    if Mp != M:
        x2d = jnp.pad(x2d, ((0, Mp - M), (0, 0)))

    grid = (Mp // tm,)
    flops = 2 * Mp * (5 * 8 + 8 * 16 + 16 * 24)
    bytes_accessed = (Mp * 5 * 4 + Mp * 28 * 4
                      + (w1.size + w2.size + w3.size) * 2
                      + (t1.size + t2.size + t3.size) * 4)

    out = pl.pallas_call(
        base_pointnet_kernel,
        out_shape=jax.ShapeDtypeStruct((Mp, 28), jnp.float32),
        grid_spec=pltpu.PrefetchScalarGridSpec(
            num_scalar_prefetch=0,
            grid=grid,
            in_specs=[
                pl.BlockSpec((tm, 5), lambda i: (i, 0)),       # streamed points
                pl.BlockSpec((5, 8), lambda i: (0, 0)),        # VMEM-resident weights
                pl.BlockSpec((1, 8), lambda i: (0, 0)),
                pl.BlockSpec((8, 16), lambda i: (0, 0)),
                pl.BlockSpec((1, 16), lambda i: (0, 0)),
                pl.BlockSpec((16, 24), lambda i: (0, 0)),
                pl.BlockSpec((1, 24), lambda i: (0, 0)),
            ],
            out_specs=pl.BlockSpec((tm, 28), lambda i: (i, 0)),
        ),
        compiler_params=pltpu.CompilerParams(
            dimension_semantics=("parallel",),
        ),
        cost_estimate=pl.CostEstimate(
            flops=flops, transcendentals=0, bytes_accessed=bytes_accessed),
    )(x2d, w1, t1, w2, t2, w3, t3)

    return out[:M].reshape(B, N, 28)


# ----------------------- pure-JAX reference (for validation) -----------------------
def ref_forward(in_mat, params):
    (W1, b1, g1, be1, m1, v1,
     W2, b2, g2, be2, m2, v2,
     W3, b3, g3, be3, m3, v3) = params

    def layer(z, W, b, g, be, m, v):
        y = jnp.einsum('bnc,oc->bno', z, jnp.squeeze(W, -1),
                       precision=jax.lax.Precision.HIGHEST) + b
        y = (y - m) / jnp.sqrt(v + EPS) * g + be
        return jnp.maximum(y, 0.0)

    h = layer(in_mat, W1, b1, g1, be1, m1, v1)
    h = layer(h, W2, b2, g2, be2, m2, v2)
    h = layer(h, W3, b3, g3, be3, m3, v3)
    return jnp.concatenate([in_mat[:, :, :4], h], axis=-1)


def make_params(key):
    ks = jax.random.split(key, 18)

    def conv_p(kw, kb, cout, cin):
        W = jax.random.normal(kw, (cout, cin, 1), jnp.float32) / jnp.sqrt(cin)
        b = 0.05 * jax.random.normal(kb, (cout,), jnp.float32)
        return W, b

    def bn_p(k0, k1, k2, k3, c):
        g = 1.0 + 0.1 * jax.random.normal(k0, (c,), jnp.float32)
        be = 0.1 * jax.random.normal(k1, (c,), jnp.float32)
        m = 0.1 * jax.random.normal(k2, (c,), jnp.float32)
        v = 0.7 + 0.3 * jnp.abs(jax.random.normal(k3, (c,), jnp.float32))
        return g, be, m, v

    W1, b1 = conv_p(ks[0], ks[1], 8, 5)
    g1, be1, m1, v1 = bn_p(ks[2], ks[3], ks[4], ks[5], 8)
    W2, b2 = conv_p(ks[6], ks[7], 16, 8)
    g2, be2, m2, v2 = bn_p(ks[8], ks[9], ks[10], ks[11], 16)
    W3, b3 = conv_p(ks[12], ks[13], 24, 16)
    g3, be3, m3, v3 = bn_p(ks[14], ks[15], ks[16], ks[17], 24)
    return (W1, b1, g1, be1, m1, v1,
            W2, b2, g2, be2, m2, v2,
            W3, b3, g3, be3, m3, v3)


if __name__ == "__main__":
    key = jax.random.PRNGKey(0)
    kx, kp = jax.random.split(key)

    B, N = 2, 1000                     # small shapes; N not a tile multiple -> exercises padding
    in_mat = jax.random.normal(kx, (B, N, 5), jnp.float32)
    params = make_params(kp)

    out = jax.block_until_ready(base_pointnet(in_mat, params))
    ref = jax.block_until_ready(ref_forward(in_mat, params))

    assert out.shape == (B, N, 28)
    # bf16 MXU inputs with f32 accumulation -> tolerance sized accordingly.
    max_err = float(jnp.max(jnp.abs(out - ref)))
    assert jnp.allclose(out, ref, rtol=5e-2, atol=5e-2), max_err
    # Passthrough channels must be bit-exact.
    assert jnp.array_equal(out[:, :, :4], in_mat[:, :, :4])

    print("KERNEL_OK")
</pallas_src>

<mosaic_0001>
module attributes {stable_mosaic.version = 11 : i64} {
  func.func @base_pointnet_kernel(%arg0: i32, %arg1: memref<2000x5xf32, #tpu.memory_space<vmem>>, %arg2: memref<5x8xbf16, #tpu.memory_space<vmem>>, %arg3: memref<1x8xf32, #tpu.memory_space<vmem>>, %arg4: memref<8x16xbf16, #tpu.memory_space<vmem>>, %arg5: memref<1x16xf32, #tpu.memory_space<vmem>>, %arg6: memref<16x24xbf16, #tpu.memory_space<vmem>>, %arg7: memref<1x24xf32, #tpu.memory_space<vmem>>, %arg8: memref<2000x28xf32, #tpu.memory_space<vmem>>) attributes {dimension_semantics = [#tpu.dimension_semantics<parallel>], iteration_bounds = array<i64: 1>, scalar_prefetch = 0 : i64, scratch_operands = 0 : i64, tpu.core_type = #tpu.core_type<tc>, window_params = [{transform_indices = @transform_0, window_bounds = array<i64: 2000, 5>}, {pipeline_mode = #tpu.pipeline_mode<synchronous>, transform_indices = @transform_1, window_bounds = array<i64: 5, 8>}, {pipeline_mode = #tpu.pipeline_mode<synchronous>, transform_indices = @transform_2, window_bounds = array<i64: 1, 8>}, {pipeline_mode = #tpu.pipeline_mode<synchronous>, transform_indices = @transform_3, window_bounds = array<i64: 8, 16>}, {pipeline_mode = #tpu.pipeline_mode<synchronous>, transform_indices = @transform_4, window_bounds = array<i64: 1, 16>}, {pipeline_mode = #tpu.pipeline_mode<synchronous>, transform_indices = @transform_5, window_bounds = array<i64: 16, 24>}, {pipeline_mode = #tpu.pipeline_mode<synchronous>, transform_indices = @transform_6, window_bounds = array<i64: 1, 24>}, {transform_indices = @transform_7, window_bounds = array<i64: 2000, 28>}]} {
    %c0 = arith.constant 0 : index
    %c0_0 = arith.constant 0 : index
    %0 = vector.load %arg1[%c0, %c0_0] : memref<2000x5xf32, #tpu.memory_space<vmem>>, vector<2000x5xf32>
    %c0_1 = arith.constant 0 : index
    %c0_2 = arith.constant 0 : index
    %1 = vector.load %arg3[%c0_1, %c0_2] : memref<1x8xf32, #tpu.memory_space<vmem>>, vector<1x8xf32>
    %c0_3 = arith.constant 0 : index
    %c0_4 = arith.constant 0 : index
    %2 = vector.load %arg5[%c0_3, %c0_4] : memref<1x16xf32, #tpu.memory_space<vmem>>, vector<1x16xf32>
    %c0_5 = arith.constant 0 : index
    %c0_6 = arith.constant 0 : index
    %3 = vector.load %arg7[%c0_5, %c0_6] : memref<1x24xf32, #tpu.memory_space<vmem>>, vector<1x24xf32>
    %4 = arith.truncf %0 : vector<2000x5xf32> to vector<2000x5xbf16>
    %c0_7 = arith.constant 0 : index
    %c0_8 = arith.constant 0 : index
    %5 = vector.load %arg2[%c0_7, %c0_8] : memref<5x8xbf16, #tpu.memory_space<vmem>>, vector<5x8xbf16>
    %cst = arith.constant dense<0.000000e+00> : vector<2000x8xf32>
    %6 = tpu.matmul %4, %5, %cst {dimension_numbers = #tpu.dot_dimension_numbers<[1], [0], [0], [1], [0, 0, 1, 1], [], []>} : vector<2000x5xbf16>, vector<5x8xbf16>, vector<2000x8xf32> -> vector<2000x8xf32>
    %7 = vector.broadcast %1 : vector<1x8xf32> to vector<2000x8xf32>
    %8 = arith.addf %6, %7 : vector<2000x8xf32>
    %cst_9 = arith.constant 0.000000e+00 : f32
    %9 = vector.broadcast %cst_9 : f32 to vector<2000x8xf32>
    %10 = arith.maximumf %8, %9 : vector<2000x8xf32>
    %11 = arith.truncf %10 : vector<2000x8xf32> to vector<2000x8xbf16>
    %c0_10 = arith.constant 0 : index
    %c0_11 = arith.constant 0 : index
    %12 = vector.load %arg4[%c0_10, %c0_11] : memref<8x16xbf16, #tpu.memory_space<vmem>>, vector<8x16xbf16>
    %cst_12 = arith.constant dense<0.000000e+00> : vector<2000x16xf32>
    %13 = tpu.matmul %11, %12, %cst_12 {dimension_numbers = #tpu.dot_dimension_numbers<[1], [0], [0], [1], [0, 0, 1, 1], [], []>} : vector<2000x8xbf16>, vector<8x16xbf16>, vector<2000x16xf32> -> vector<2000x16xf32>
    %14 = vector.broadcast %2 : vector<1x16xf32> to vector<2000x16xf32>
    %15 = arith.addf %13, %14 : vector<2000x16xf32>
    %cst_13 = arith.constant 0.000000e+00 : f32
    %16 = vector.broadcast %cst_13 : f32 to vector<2000x16xf32>
    %17 = arith.maximumf %15, %16 : vector<2000x16xf32>
    %18 = arith.truncf %17 : vector<2000x16xf32> to vector<2000x16xbf16>
    %c0_14 = arith.constant 0 : index
    %c0_15 = arith.constant 0 : index
    %19 = vector.load %arg6[%c0_14, %c0_15] : memref<16x24xbf16, #tpu.memory_space<vmem>>, vector<16x24xbf16>
    %cst_16 = arith.constant dense<0.000000e+00> : vector<2000x24xf32>
    %20 = tpu.matmul %18, %19, %cst_16 {dimension_numbers = #tpu.dot_dimension_numbers<[1], [0], [0], [1], [0, 0, 1, 1], [], []>} : vector<2000x16xbf16>, vector<16x24xbf16>, vector<2000x24xf32> -> vector<2000x24xf32>
    %21 = vector.broadcast %3 : vector<1x24xf32> to vector<2000x24xf32>
    %22 = arith.addf %20, %21 : vector<2000x24xf32>
    %cst_17 = arith.constant 0.000000e+00 : f32
    %23 = vector.broadcast %cst_17 : f32 to vector<2000x24xf32>
    %24 = arith.maximumf %22, %23 : vector<2000x24xf32>
    %25 = vector.extract_strided_slice %0 {offsets = [0, 0], sizes = [2000, 4], strides = [1, 1]} : vector<2000x5xf32> to vector<2000x4xf32>
    %26 = tpu.concatenate %25, %24 in 1 : vector<2000x4xf32>, vector<2000x24xf32> -> vector<2000x28xf32>
    %c0_18 = arith.constant 0 : index
    %c0_19 = arith.constant 0 : index
    %27 = vector.load %arg8[%c0_18, %c0_19] : memref<2000x28xf32, #tpu.memory_space<vmem>>, vector<2000x28xf32>
    tpu.vector_store %arg8[%c0_18, %c0_19], %26 {strides = array<i32>} : memref<2000x28xf32, #tpu.memory_space<vmem>>, vector<2000x28xf32>,
    return
  }
  func.func @transform_0(%arg0: i32) -> (i32, i32) {
    %c0_i32 = arith.constant 0 : i32
    %c0_i32_0 = arith.constant 0 : i32
    return %arg0, %c0_i32 : i32, i32
  }
  func.func @transform_1(%arg0: i32) -> (i32, i32) {
    %c0_i32 = arith.constant 0 : i32
    %c0_i32_0 = arith.constant 0 : i32
    %c0_i32_1 = arith.constant 0 : i32
    return %c0_i32, %c0_i32_0 : i32, i32
  }
  func.func @transform_2(%arg0: i32) -> (i32, i32) {
    %c0_i32 = arith.constant 0 : i32
    %c0_i32_0 = arith.constant 0 : i32
    %c0_i32_1 = arith.constant 0 : i32
    return %c0_i32, %c0_i32_0 : i32, i32
  }
  func.func @transform_3(%arg0: i32) -> (i32, i32) {
    %c0_i32 = arith.constant 0 : i32
    %c0_i32_0 = arith.constant 0 : i32
    %c0_i32_1 = arith.constant 0 : i32
    return %c0_i32, %c0_i32_0 : i32, i32
  }
  func.func @transform_4(%arg0: i32) -> (i32, i32) {
    %c0_i32 = arith.constant 0 : i32
    %c0_i32_0 = arith.constant 0 : i32
    %c0_i32_1 = arith.constant 0 : i32
    return %c0_i32, %c0_i32_0 : i32, i32
  }
  func.func @transform_5(%arg0: i32) -> (i32, i32) {
    %c0_i32 = arith.constant 0 : i32
    %c0_i32_0 = arith.constant 0 : i32
    %c0_i32_1 = arith.constant 0 : i32
    return %c0_i32, %c0_i32_0 : i32, i32
  }
  func.func @transform_6(%arg0: i32) -> (i32, i32) {
    %c0_i32 = arith.constant 0 : i32
    %c0_i32_0 = arith.constant 0 : i32
    %c0_i32_1 = arith.constant 0 : i32
    return %c0_i32, %c0_i32_0 : i32, i32
  }
  func.func @transform_7(%arg0: i32) -> (i32, i32) {
    %c0_i32 = arith.constant 0 : i32
    %c0_i32_0 = arith.constant 0 : i32
    return %arg0, %c0_i32 : i32, i32
  }
}

</mosaic_0001>

<llo_original>
// kernel: tpu_custom_call.1
$region0: #{tpu_custom_call.1}
  #allocation0 [shape = 'u32[]', space=smem, size = 0x4, offset = 0x4, fixed_abs, tag = 'smem constant byte address 0x4 - core index']
  #allocation1 [shape = 'u32[72,128]{1,0:T(1,128)}', space=vmem, size = 0x9000, scoped, tag = 'internal scratch']
  %s0 = inlined_call_operand.vmem [shape: f32[2000,5], index: 0, kind: input, shape index: {}]
  %s1 = inlined_call_operand.vmem [shape: bf16[5,8], index: 1, kind: input, shape index: {}]
  %s2 = inlined_call_operand.vmem [shape: f32[1,8], index: 2, kind: input, shape index: {}]
  %s3 = inlined_call_operand.vmem [shape: bf16[8,16], index: 3, kind: input, shape index: {}]
  %s4 = inlined_call_operand.vmem [shape: f32[1,16], index: 4, kind: input, shape index: {}]
  %s5 = inlined_call_operand.vmem [shape: bf16[16,24], index: 5, kind: input, shape index: {}]
  %s6 = inlined_call_operand.vmem [shape: f32[1,24], index: 6, kind: input, shape index: {}]
  %s7 = inlined_call_operand.vmem [shape: f32[2000,28], index: 7, kind: output, shape index: {}]
  %s8 = sld [smem:[#allocation0]]
  $region38: #{tpu_custom_call.1} parent=0
    _
  %s10 = ssub.s32 1, %s8
  %s11 = scalar_select 0, %s10, %s8
  // Predicated region
  $region2: #{tpu_custom_call.1} parent=0 // pred_check
    _
  $region3: #{tpu_custom_call.1} parent=0 // pred_check_branch
    %13 = sbr.rel (0) target = $region5
  $region4: #{tpu_custom_call.1} parent=0 // pred_region
    _
  $region5: #{tpu_custom_call.1} parent=0 // pred_fallthru
    _
  // Predicated region
  $region6: #{tpu_custom_call.1} parent=0 // pred_check
    _
  $region7: #{tpu_custom_call.1} parent=0 // pred_check_branch
    %15 = sbr.rel (0) target = $region9
  $region8: #{tpu_custom_call.1} parent=0 // pred_region
    _
  $region9: #{tpu_custom_call.1} parent=0 // pred_fallthru
    _
  // Predicated region
  $region10: #{tpu_custom_call.1} parent=0 // pred_check
    _
  $region11: #{tpu_custom_call.1} parent=0 // pred_check_branch
    %17 = sbr.rel (0) target = $region13
  $region12: #{tpu_custom_call.1} parent=0 // pred_region
    _
  $region13: #{tpu_custom_call.1} parent=0 // pred_fallthru
    _
  // Predicated region
  $region14: #{tpu_custom_call.1} parent=0 // pred_check
    _
  $region15: #{tpu_custom_call.1} parent=0 // pred_check_branch
    %19 = sbr.rel (0) target = $region17
  $region16: #{tpu_custom_call.1} parent=0 // pred_region
    _
  $region17: #{tpu_custom_call.1} parent=0 // pred_fallthru
    _
  // Predicated region
  $region18: #{tpu_custom_call.1} parent=0 // pred_check
    _
  $region19: #{tpu_custom_call.1} parent=0 // pred_check_branch
    %21 = sbr.rel (0) target = $region21
  $region20: #{tpu_custom_call.1} parent=0 // pred_region
    _
  $region21: #{tpu_custom_call.1} parent=0 // pred_fallthru
    _
  // Predicated region
  $region22: #{tpu_custom_call.1} parent=0 // pred_check
    _
  $region23: #{tpu_custom_call.1} parent=0 // pred_check_branch
    %23 = sbr.rel (0) target = $region25
  $region24: #{tpu_custom_call.1} parent=0 // pred_region
    _
  $region25: #{tpu_custom_call.1} parent=0 // pred_fallthru
    _
  // Predicated region
  $region26: #{tpu_custom_call.1} parent=0 // pred_check
    _
  $region27: #{tpu_custom_call.1} parent=0 // pred_check_branch
    %25 = sbr.rel (0) target = $region29
  $region28: #{tpu_custom_call.1} parent=0 // pred_region
    _
  $region29: #{tpu_custom_call.1} parent=0 // pred_fallthru
    _
  %v27 = vld [vmem:[%s0] sm:$0xff]
  %v28 = vld [vmem:[%s0 + $0x8] sm:$0xff]
  %v29 = vld [vmem:[%s0 + $0x10] sm:$0xff]
  %v30 = vld [vmem:[%s0 + $0x18] sm:$0xff]
  %v31 = vld [vmem:[%s0 + $0x20] sm:$0xff]
  %v32 = vld [vmem:[%s0 + $0x28] sm:$0xff]
  %v33 = vld [vmem:[%s0 + $0x30] sm:$0xff]
  %v34 = vld [vmem:[%s0 + $0x38] sm:$0xff]
  %v35 = vld [vmem:[%s0 + $0x40] sm:$0xff]
  %v36 = vld [vmem:[%s0 + $0x48] sm:$0xff]
  %v37 = vld [vmem:[%s0 + $0x50] sm:$0xff]
  %v38 = vld [vmem:[%s0 + $0x58] sm:$0xff]
  %v39 = vld [vmem:[%s0 + $0x60] sm:$0xff]
  %v40 = vld [vmem:[%s0 + $0x68] sm:$0xff]
  %v41 = vld [vmem:[%s0 + $0x70] sm:$0xff]
  %v42 = vld [vmem:[%s0 + $0x78] sm:$0xff]
  %v43 = vld [vmem:[%s0 + $0x80] sm:$0xff]
  %v44 = vld [vmem:[%s0 + $0x88] sm:$0xff]
  %v45 = vld [vmem:[%s0 + $0x90] sm:$0xff]
  %v46 = vld [vmem:[%s0 + $0x98] sm:$0xff]
  %v47 = vld [vmem:[%s0 + $0xa0] sm:$0xff]
  %v48 = vld [vmem:[%s0 + $0xa8] sm:$0xff]
  %v49 = vld [vmem:[%s0 + $0xb0] sm:$0xff]
  %v50 = vld [vmem:[%s0 + $0xb8] sm:$0xff]
  %v51 = vld [vmem:[%s0 + $0xc0] sm:$0xff]
  %v52 = vld [vmem:[%s0 + $0xc8] sm:$0xff]
  %v53 = vld [vmem:[%s0 + $0xd0] sm:$0xff]
  %v54 = vld [vmem:[%s0 + $0xd8] sm:$0xff]
  %v55 = vld [vmem:[%s0 + $0xe0] sm:$0xff]
  %v56 = vld [vmem:[%s0 + $0xe8] sm:$0xff]
  %v57 = vld [vmem:[%s0 + $0xf0] sm:$0xff]
  %v58 = vld [vmem:[%s0 + $0xf8] sm:$0xff]
  %v59 = vld [vmem:[%s0 + $0x100] sm:$0xff]
  %v60 = vld [vmem:[%s0 + $0x108] sm:$0xff]
  %v61 = vld [vmem:[%s0 + $0x110] sm:$0xff]
  %v62 = vld [vmem:[%s0 + $0x118] sm:$0xff]
  %v63 = vld [vmem:[%s0 + $0x120] sm:$0xff]
  %v64 = vld [vmem:[%s0 + $0x128] sm:$0xff]
  %v65 = vld [vmem:[%s0 + $0x130] sm:$0xff]
  %v66 = vld [vmem:[%s0 + $0x138] sm:$0xff]
  %v67 = vld [vmem:[%s0 + $0x140] sm:$0xff]
  %v68 = vld [vmem:[%s0 + $0x148] sm:$0xff]
  %v69 = vld [vmem:[%s0 + $0x150] sm:$0xff]
  %v70 = vld [vmem:[%s0 + $0x158] sm:$0xff]
  %v71 = vld [vmem:[%s0 + $0x160] sm:$0xff]
  %v72 = vld [vmem:[%s0 + $0x168] sm:$0xff]
  %v73 = vld [vmem:[%s0 + $0x170] sm:$0xff]
  %v74 = vld [vmem:[%s0 + $0x178] sm:$0xff]
  %v75 = vld [vmem:[%s0 + $0x180] sm:$0xff]
  %v76 = vld [vmem:[%s0 + $0x188] sm:$0xff]
  %v77 = vld [vmem:[%s0 + $0x190] sm:$0xff]
  %v78 = vld [vmem:[%s0 + $0x198] sm:$0xff]
  %v79 = vld [vmem:[%s0 + $0x1a0] sm:$0xff]
  %v80 = vld [vmem:[%s0 + $0x1a8] sm:$0xff]
  %v81 = vld [vmem:[%s0 + $0x1b0] sm:$0xff]
  %v82 = vld [vmem:[%s0 + $0x1b8] sm:$0xff]
  %v83 = vld [vmem:[%s0 + $0x1c0] sm:$0xff]
  %v84 = vld [vmem:[%s0 + $0x1c8] sm:$0xff]
  %v85 = vld [vmem:[%s0 + $0x1d0] sm:$0xff]
  %v86 = vld [vmem:[%s0 + $0x1d8] sm:$0xff]
  %v87 = vld [vmem:[%s0 + $0x1e0] sm:$0xff]
  %v88 = vld [vmem:[%s0 + $0x1e8] sm:$0xff]
  %v89 = vld [vmem:[%s0 + $0x1f0] sm:$0xff]
  %v90 = vld [vmem:[%s0 + $0x1f8] sm:$0xff]
  %v91 = vld [vmem:[%s0 + $0x200] sm:$0xff]
  %v92 = vld [vmem:[%s0 + $0x208] sm:$0xff]
  %v93 = vld [vmem:[%s0 + $0x210] sm:$0xff]
  %v94 = vld [vmem:[%s0 + $0x218] sm:$0xff]
  %v95 = vld [vmem:[%s0 + $0x220] sm:$0xff]
  %v96 = vld [vmem:[%s0 + $0x228] sm:$0xff]
  %v97 = vld [vmem:[%s0 + $0x230] sm:$0xff]
  %v98 = vld [vmem:[%s0 + $0x238] sm:$0xff]
  %v99 = vld [vmem:[%s0 + $0x240] sm:$0xff]
  %v100 = vld [vmem:[%s0 + $0x248] sm:$0xff]
  %v101 = vld [vmem:[%s0 + $0x250] sm:$0xff]
  %v102 = vld [vmem:[%s0 + $0x258] sm:$0xff]
  %v103 = vld [vmem:[%s0 + $0x260] sm:$0xff]
  %v104 = vld [vmem:[%s0 + $0x268] sm:$0xff]
  %v105 = vld [vmem:[%s0 + $0x270] sm:$0xff]
  %v106 = vld [vmem:[%s0 + $0x278] sm:$0xff]
  %v107 = vld [vmem:[%s0 + $0x280] sm:$0xff]
  %v108 = vld [vmem:[%s0 + $0x288] sm:$0xff]
  %v109 = vld [vmem:[%s0 + $0x290] sm:$0xff]
  %v110 = vld [vmem:[%s0 + $0x298] sm:$0xff]
  %v111 = vld [vmem:[%s0 + $0x2a0] sm:$0xff]
  %v112 = vld [vmem:[%s0 + $0x2a8] sm:$0xff]
  %v113 = vld [vmem:[%s0 + $0x2b0] sm:$0xff]
  %v114 = vld [vmem:[%s0 + $0x2b8] sm:$0xff]
  %v115 = vld [vmem:[%s0 + $0x2c0] sm:$0xff]
  %v116 = vld [vmem:[%s0 + $0x2c8] sm:$0xff]
  %v117 = vld [vmem:[%s0 + $0x2d0] sm:$0xff]
  %v118 = vld [vmem:[%s0 + $0x2d8] sm:$0xff]
  %v119 = vld [vmem:[%s0 + $0x2e0] sm:$0xff]
  %v120 = vld [vmem:[%s0 + $0x2e8] sm:$0xff]
  %v121 = vld [vmem:[%s0 + $0x2f0] sm:$0xff]
  %v122 = vld [vmem:[%s0 + $0x2f8] sm:$0xff]
  %v123 = vld [vmem:[%s0 + $0x300] sm:$0xff]
  %v124 = vld [vmem:[%s0 + $0x308] sm:$0xff]
  %v125 = vld [vmem:[%s0 + $0x310] sm:$0xff]
  %v126 = vld [vmem:[%s0 + $0x318] sm:$0xff]
  %v127 = vld [vmem:[%s0 + $0x320] sm:$0xff]
  %v128 = vld [vmem:[%s0 + $0x328] sm:$0xff]
  %v129 = vld [vmem:[%s0 + $0x330] sm:$0xff]
  %v130 = vld [vmem:[%s0 + $0x338] sm:$0xff]
  %v131 = vld [vmem:[%s0 + $0x340] sm:$0xff]
  %v132 = vld [vmem:[%s0 + $0x348] sm:$0xff]
  %v133 = vld [vmem:[%s0 + $0x350] sm:$0xff]
  %v134 = vld [vmem:[%s0 + $0x358] sm:$0xff]
  %v135 = vld [vmem:[%s0 + $0x360] sm:$0xff]
  %v136 = vld [vmem:[%s0 + $0x368] sm:$0xff]
  %v137 = vld [vmem:[%s0 + $0x370] sm:$0xff]
  %v138 = vld [vmem:[%s0 + $0x378] sm:$0xff]
  %v139 = vld [vmem:[%s0 + $0x380] sm:$0xff]
  %v140 = vld [vmem:[%s0 + $0x388] sm:$0xff]
  %v141 = vld [vmem:[%s0 + $0x390] sm:$0xff]
  %v142 = vld [vmem:[%s0 + $0x398] sm:$0xff]
  %v143 = vld [vmem:[%s0 + $0x3a0] sm:$0xff]
  %v144 = vld [vmem:[%s0 + $0x3a8] sm:$0xff]
  %v145 = vld [vmem:[%s0 + $0x3b0] sm:$0xff]
  %v146 = vld [vmem:[%s0 + $0x3b8] sm:$0xff]
  %v147 = vld [vmem:[%s0 + $0x3c0] sm:$0xff]
  %v148 = vld [vmem:[%s0 + $0x3c8] sm:$0xff]
  %v149 = vld [vmem:[%s0 + $0x3d0] sm:$0xff]
  %v150 = vld [vmem:[%s0 + $0x3d8] sm:$0xff]
  %v151 = vld [vmem:[%s0 + $0x3e0] sm:$0xff]
  %v152 = vld [vmem:[%s0 + $0x3e8] sm:$0xff]
  %v153 = vld [vmem:[%s0 + $0x3f0] sm:$0xff]
  %v154 = vld [vmem:[%s0 + $0x3f8] sm:$0xff]
  %v155 = vld [vmem:[%s0 + $0x400] sm:$0xff]
  %v156 = vld [vmem:[%s0 + $0x408] sm:$0xff]
  %v157 = vld [vmem:[%s0 + $0x410] sm:$0xff]
  %v158 = vld [vmem:[%s0 + $0x418] sm:$0xff]
  %v159 = vld [vmem:[%s0 + $0x420] sm:$0xff]
  %v160 = vld [vmem:[%s0 + $0x428] sm:$0xff]
  %v161 = vld [vmem:[%s0 + $0x430] sm:$0xff]
  %v162 = vld [vmem:[%s0 + $0x438] sm:$0xff]
  %v163 = vld [vmem:[%s0 + $0x440] sm:$0xff]
  %v164 = vld [vmem:[%s0 + $0x448] sm:$0xff]
  %v165 = vld [vmem:[%s0 + $0x450] sm:$0xff]
  %v166 = vld [vmem:[%s0 + $0x458] sm:$0xff]
  %v167 = vld [vmem:[%s0 + $0x460] sm:$0xff]
  %v168 = vld [vmem:[%s0 + $0x468] sm:$0xff]
  %v169 = vld [vmem:[%s0 + $0x470] sm:$0xff]
  %v170 = vld [vmem:[%s0 + $0x478] sm:$0xff]
  %v171 = vld [vmem:[%s0 + $0x480] sm:$0xff]
  %v172 = vld [vmem:[%s0 + $0x488] sm:$0xff]
  %v173 = vld [vmem:[%s0 + $0x490] sm:$0xff]
  %v174 = vld [vmem:[%s0 + $0x498] sm:$0xff]
  %v175 = vld [vmem:[%s0 + $0x4a0] sm:$0xff]
  %v176 = vld [vmem:[%s0 + $0x4a8] sm:$0xff]
  %v177 = vld [vmem:[%s0 + $0x4b0] sm:$0xff]
  %v178 = vld [vmem:[%s0 + $0x4b8] sm:$0xff]
  %v179 = vld [vmem:[%s0 + $0x4c0] sm:$0xff]
  %v180 = vld [vmem:[%s0 + $0x4c8] sm:$0xff]
  %v181 = vld [vmem:[%s0 + $0x4d0] sm:$0xff]
  %v182 = vld [vmem:[%s0 + $0x4d8] sm:$0xff]
  %v183 = vld [vmem:[%s0 + $0x4e0] sm:$0xff]
  %v184 = vld [vmem:[%s0 + $0x4e8] sm:$0xff]
  %v185 = vld [vmem:[%s0 + $0x4f0] sm:$0xff]
  %v186 = vld [vmem:[%s0 + $0x4f8] sm:$0xff]
  %v187 = vld [vmem:[%s0 + $0x500] sm:$0xff]
  %v188 = vld [vmem:[%s0 + $0x508] sm:$0xff]
  %v189 = vld [vmem:[%s0 + $0x510] sm:$0xff]
  %v190 = vld [vmem:[%s0 + $0x518] sm:$0xff]
  %v191 = vld [vmem:[%s0 + $0x520] sm:$0xff]
  %v192 = vld [vmem:[%s0 + $0x528] sm:$0xff]
  %v193 = vld [vmem:[%s0 + $0x530] sm:$0xff]
  %v194 = vld [vmem:[%s0 + $0x538] sm:$0xff]
  %v195 = vld [vmem:[%s0 + $0x540] sm:$0xff]
  %v196 = vld [vmem:[%s0 + $0x548] sm:$0xff]
  %v197 = vld [vmem:[%s0 + $0x550] sm:$0xff]
  %v198 = vld [vmem:[%s0 + $0x558] sm:$0xff]
  %v199 = vld [vmem:[%s0 + $0x560] sm:$0xff]
  %v200 = vld [vmem:[%s0 + $0x568] sm:$0xff]
  %v201 = vld [vmem:[%s0 + $0x570] sm:$0xff]
  %v202 = vld [vmem:[%s0 + $0x578] sm:$0xff]
  %v203 = vld [vmem:[%s0 + $0x580] sm:$0xff]
  %v204 = vld [vmem:[%s0 + $0x588] sm:$0xff]
  %v205 = vld [vmem:[%s0 + $0x590] sm:$0xff]
  %v206 = vld [vmem:[%s0 + $0x598] sm:$0xff]
  %v207 = vld [vmem:[%s0 + $0x5a0] sm:$0xff]
  %v208 = vld [vmem:[%s0 + $0x5a8] sm:$0xff]
  %v209 = vld [vmem:[%s0 + $0x5b0] sm:$0xff]
  %v210 = vld [vmem:[%s0 + $0x5b8] sm:$0xff]
  %v211 = vld [vmem:[%s0 + $0x5c0] sm:$0xff]
  %v212 = vld [vmem:[%s0 + $0x5c8] sm:$0xff]
  %v213 = vld [vmem:[%s0 + $0x5d0] sm:$0xff]
  %v214 = vld [vmem:[%s0 + $0x5d8] sm:$0xff]
  %v215 = vld [vmem:[%s0 + $0x5e0] sm:$0xff]
  %v216 = vld [vmem:[%s0 + $0x5e8] sm:$0xff]
  %v217 = vld [vmem:[%s0 + $0x5f0] sm:$0xff]
  %v218 = vld [vmem:[%s0 + $0x5f8] sm:$0xff]
  %v219 = vld [vmem:[%s0 + $0x600] sm:$0xff]
  %v220 = vld [vmem:[%s0 + $0x608] sm:$0xff]
  %v221 = vld [vmem:[%s0 + $0x610] sm:$0xff]
  %v222 = vld [vmem:[%s0 + $0x618] sm:$0xff]
  %v223 = vld [vmem:[%s0 + $0x620] sm:$0xff]
  %v224 = vld [vmem:[%s0 + $0x628] sm:$0xff]
  %v225 = vld [vmem:[%s0 + $0x630] sm:$0xff]
  %v226 = vld [vmem:[%s0 + $0x638] sm:$0xff]
  %v227 = vld [vmem:[%s0 + $0x640] sm:$0xff]
  %v228 = vld [vmem:[%s0 + $0x648] sm:$0xff]
  %v229 = vld [vmem:[%s0 + $0x650] sm:$0xff]
  %v230 = vld [vmem:[%s0 + $0x658] sm:$0xff]
  %v231 = vld [vmem:[%s0 + $0x660] sm:$0xff]
  %v232 = vld [vmem:[%s0 + $0x668] sm:$0xff]
  %v233 = vld [vmem:[%s0 + $0x670] sm:$0xff]
  %v234 = vld [vmem:[%s0 + $0x678] sm:$0xff]
  %v235 = vld [vmem:[%s0 + $0x680] sm:$0xff]
  %v236 = vld [vmem:[%s0 + $0x688] sm:$0xff]
  %v237 = vld [vmem:[%s0 + $0x690] sm:$0xff]
  %v238 = vld [vmem:[%s0 + $0x698] sm:$0xff]
  %v239 = vld [vmem:[%s0 + $0x6a0] sm:$0xff]
  %v240 = vld [vmem:[%s0 + $0x6a8] sm:$0xff]
  %v241 = vld [vmem:[%s0 + $0x6b0] sm:$0xff]
  %v242 = vld [vmem:[%s0 + $0x6b8] sm:$0xff]
  %v243 = vld [vmem:[%s0 + $0x6c0] sm:$0xff]
  %v244 = vld [vmem:[%s0 + $0x6c8] sm:$0xff]
  %v245 = vld [vmem:[%s0 + $0x6d0] sm:$0xff]
  %v246 = vld [vmem:[%s0 + $0x6d8] sm:$0xff]
  %v247 = vld [vmem:[%s0 + $0x6e0] sm:$0xff]
  %v248 = vld [vmem:[%s0 + $0x6e8] sm:$0xff]
  %v249 = vld [vmem:[%s0 + $0x6f0] sm:$0xff]
  %v250 = vld [vmem:[%s0 + $0x6f8] sm:$0xff]
  %v251 = vld [vmem:[%s0 + $0x700] sm:$0xff]
  %v252 = vld [vmem:[%s0 + $0x708] sm:$0xff]
  %v253 = vld [vmem:[%s0 + $0x710] sm:$0xff]
  %v254 = vld [vmem:[%s0 + $0x718] sm:$0xff]
  %v255 = vld [vmem:[%s0 + $0x720] sm:$0xff]
  %v256 = vld [vmem:[%s0 + $0x728] sm:$0xff]
  %v257 = vld [vmem:[%s0 + $0x730] sm:$0xff]
  %v258 = vld [vmem:[%s0 + $0x738] sm:$0xff]
  %v259 = vld [vmem:[%s0 + $0x740] sm:$0xff]
  %v260 = vld [vmem:[%s0 + $0x748] sm:$0xff]
  %v261 = vld [vmem:[%s0 + $0x750] sm:$0xff]
  %v262 = vld [vmem:[%s0 + $0x758] sm:$0xff]
  %v263 = vld [vmem:[%s0 + $0x760] sm:$0xff]
  %v264 = vld [vmem:[%s0 + $0x768] sm:$0xff]
  %v265 = vld [vmem:[%s0 + $0x770] sm:$0xff]
  %v266 = vld [vmem:[%s0 + $0x778] sm:$0xff]
  %v267 = vld [vmem:[%s0 + $0x780] sm:$0xff]
  %v268 = vld [vmem:[%s0 + $0x788] sm:$0xff]
  %v269 = vld [vmem:[%s0 + $0x790] sm:$0xff]
  %v270 = vld [vmem:[%s0 + $0x798] sm:$0xff]
  %v271 = vld [vmem:[%s0 + $0x7a0] sm:$0xff]
  %v272 = vld [vmem:[%s0 + $0x7a8] sm:$0xff]
  %v273 = vld [vmem:[%s0 + $0x7b0] sm:$0xff]
  %v274 = vld [vmem:[%s0 + $0x7b8] sm:$0xff]
  %v275 = vld [vmem:[%s0 + $0x7c0] sm:$0xff]
  %v276 = vld [vmem:[%s0 + $0x7c8] sm:$0xff]
  %v277 = vld [vmem:[%s2] sm:$0x1]
  %v278 = vld [vmem:[%s4] sm:$0x1]
  %v279 = vld [vmem:[%s6] sm:$0x1]
  %v280 = vpack.c.bf16 %v28, %v27
  %v281 = vpack.c.bf16 %v30, %v29
  %v282 = vpack.c.bf16 %v32, %v31
  %v283 = vpack.c.bf16 %v34, %v33
  %v284 = vpack.c.bf16 %v36, %v35
  %v285 = vpack.c.bf16 %v38, %v37
  %v286 = vpack.c.bf16 %v40, %v39
  %v287 = vpack.c.bf16 %v42, %v41
  %v288 = vpack.c.bf16 %v44, %v43
  %v289 = vpack.c.bf16 %v46, %v45
  %v290 = vpack.c.bf16 %v48, %v47
  %v291 = vpack.c.bf16 %v50, %v49
  %v292 = vpack.c.bf16 %v52, %v51
  %v293 = vpack.c.bf16 %v54, %v53
  %v294 = vpack.c.bf16 %v56, %v55
  %v295 = vpack.c.bf16 %v58, %v57
  %v296 = vpack.c.bf16 %v60, %v59
  %v297 = vpack.c.bf16 %v62, %v61
  %v298 = vpack.c.bf16 %v64, %v63
  %v299 = vpack.c.bf16 %v66, %v65
  %v300 = vpack.c.bf16 %v68, %v67
  %v301 = vpack.c.bf16 %v70, %v69
  %v302 = vpack.c.bf16 %v72, %v71
  %v303 = vpack.c.bf16 %v74, %v73
  %v304 = vpack.c.bf16 %v76, %v75
  %v305 = vpack.c.bf16 %v78, %v77
  %v306 = vpack.c.bf16 %v80, %v79
  %v307 = vpack.c.bf16 %v82, %v81
  %v308 = vpack.c.bf16 %v84, %v83
  %v309 = vpack.c.bf16 %v86, %v85
  %v310 = vpack.c.bf16 %v88, %v87
  %v311 = vpack.c.bf16 %v90, %v89
  %v312 = vpack.c.bf16 %v92, %v91
  %v313 = vpack.c.bf16 %v94, %v93
  %v314 = vpack.c.bf16 %v96, %v95
  %v315 = vpack.c.bf16 %v98, %v97
  %v316 = vpack.c.bf16 %v100, %v99
  %v317 = vpack.c.bf16 %v102, %v101
  %v318 = vpack.c.bf16 %v104, %v103
  %v319 = vpack.c.bf16 %v106, %v105
  %v320 = vpack.c.bf16 %v108, %v107
  %v321 = vpack.c.bf16 %v110, %v109
  %v322 = vpack.c.bf16 %v112, %v111
  %v323 = vpack.c.bf16 %v114, %v113
  %v324 = vpack.c.bf16 %v116, %v115
  %v325 = vpack.c.bf16 %v118, %v117
  %v326 = vpack.c.bf16 %v120, %v119
  %v327 = vpack.c.bf16 %v122, %v121
  %v328 = vpack.c.bf16 %v124, %v123
  %v329 = vpack.c.bf16 %v126, %v125
  %v330 = vpack.c.bf16 %v128, %v127
  %v331 = vpack.c.bf16 %v130, %v129
  %v332 = vpack.c.bf16 %v132, %v131
  %v333 = vpack.c.bf16 %v134, %v133
  %v334 = vpack.c.bf16 %v136, %v135
  %v335 = vpack.c.bf16 %v138, %v137
  %v336 = vpack.c.bf16 %v140, %v139
  %v337 = vpack.c.bf16 %v142, %v141
  %v338 = vpack.c.bf16 %v144, %v143
  %v339 = vpack.c.bf16 %v146, %v145
  %v340 = vpack.c.bf16 %v148, %v147
  %v341 = vpack.c.bf16 %v150, %v149
  %v342 = vpack.c.bf16 %v152, %v151
  %v343 = vpack.c.bf16 %v154, %v153
  %v344 = vpack.c.bf16 %v156, %v155
  %v345 = vpack.c.bf16 %v158, %v157
  %v346 = vpack.c.bf16 %v160, %v159
  %v347 = vpack.c.bf16 %v162, %v161
  %v348 = vpack.c.bf16 %v164, %v163
  %v349 = vpack.c.bf16 %v166, %v165
  %v350 = vpack.c.bf16 %v168, %v167
  %v351 = vpack.c.bf16 %v170, %v169
  %v352 = vpack.c.bf16 %v172, %v171
  %v353 = vpack.c.bf16 %v174, %v173
  %v354 = vpack.c.bf16 %v176, %v175
  %v355 = vpack.c.bf16 %v178, %v177
  %v356 = vpack.c.bf16 %v180, %v179
  %v357 = vpack.c.bf16 %v182, %v181
  %v358 = vpack.c.bf16 %v184, %v183
  %v359 = vpack.c.bf16 %v186, %v185
  %v360 = vpack.c.bf16 %v188, %v187
  %v361 = vpack.c.bf16 %v190, %v189
  %v362 = vpack.c.bf16 %v192, %v191
  %v363 = vpack.c.bf16 %v194, %v193
  %v364 = vpack.c.bf16 %v196, %v195
  %v365 = vpack.c.bf16 %v198, %v197
  %v366 = vpack.c.bf16 %v200, %v199
  %v367 = vpack.c.bf16 %v202, %v201
  %v368 = vpack.c.bf16 %v204, %v203
  %v369 = vpack.c.bf16 %v206, %v205
  %v370 = vpack.c.bf16 %v208, %v207
  %v371 = vpack.c.bf16 %v210, %v209
  %v372 = vpack.c.bf16 %v212, %v211
  %v373 = vpack.c.bf16 %v214, %v213
  %v374 = vpack.c.bf16 %v216, %v215
  %v375 = vpack.c.bf16 %v218, %v217
  %v376 = vpack.c.bf16 %v220, %v219
  %v377 = vpack.c.bf16 %v222, %v221
  %v378 = vpack.c.bf16 %v224, %v223
  %v379 = vpack.c.bf16 %v226, %v225
  %v380 = vpack.c.bf16 %v228, %v227
  %v381 = vpack.c.bf16 %v230, %v229
  %v382 = vpack.c.bf16 %v232, %v231
  %v383 = vpack.c.bf16 %v234, %v233
  %v384 = vpack.c.bf16 %v236, %v235
  %v385 = vpack.c.bf16 %v238, %v237
  %v386 = vpack.c.bf16 %v240, %v239
  %v387 = vpack.c.bf16 %v242, %v241
  %v388 = vpack.c.bf16 %v244, %v243
  %v389 = vpack.c.bf16 %v246, %v245
  %v390 = vpack.c.bf16 %v248, %v247
  %v391 = vpack.c.bf16 %v250, %v249
  %v392 = vpack.c.bf16 %v252, %v251
  %v393 = vpack.c.bf16 %v254, %v253
  %v394 = vpack.c.bf16 %v256, %v255
  %v395 = vpack.c.bf16 %v258, %v257
  %v396 = vpack.c.bf16 %v260, %v259
  %v397 = vpack.c.bf16 %v262, %v261
  %v398 = vpack.c.bf16 %v264, %v263
  %v399 = vpack.c.bf16 %v266, %v265
  %v400 = vpack.c.bf16 %v268, %v267
  %v401 = vpack.c.bf16 %v270, %v269
  %v402 = vpack.c.bf16 %v272, %v271
  %v403 = vpack.c.bf16 %v274, %v273
  %v404 = vpack.c.bf16 %v276, %v275
  %v405 = vld [vmem:[%s1] sm:$0x7]
  %v407 = vperm.slane %v277, 0
  %vm409 = vcmask 39936
  %v411 = vsel %vm409, %v280, 0
  %v414 = vsel %vm409, %v281, 0
  %v417 = vsel %vm409, %v282, 0
  %v420 = vsel %vm409, %v283, 0
  %v423 = vsel %vm409, %v284, 0
  %v426 = vsel %vm409, %v285, 0
  %v429 = vsel %vm409, %v286, 0
  %v432 = vsel %vm409, %v287, 0
  %v435 = vsel %vm409, %v288, 0
  %v438 = vsel %vm409, %v289, 0
  %v441 = vsel %vm409, %v290, 0
  %v444 = vsel %vm409, %v291, 0
  %v447 = vsel %vm409, %v292, 0
  %v450 = vsel %vm409, %v293, 0
  %v453 = vsel %vm409, %v294, 0
  %v456 = vsel %vm409, %v295, 0
  %v459 = vsel %vm409, %v296, 0
  %v462 = vsel %vm409, %v297, 0
  %v465 = vsel %vm409, %v298, 0
  %v468 = vsel %vm409, %v299, 0
  %v471 = vsel %vm409, %v300, 0
  %v474 = vsel %vm409, %v301, 0
  %v477 = vsel %vm409, %v302, 0
  %v480 = vsel %vm409, %v303, 0
  %v483 = vsel %vm409, %v304, 0
  %v486 = vsel %vm409, %v305, 0
  %v489 = vsel %vm409, %v306, 0
  %v492 = vsel %vm409, %v307, 0
  %v495 = vsel %vm409, %v308, 0
  %v498 = vsel %vm409, %v309, 0
  %v501 = vsel %vm409, %v310, 0
  %v504 = vsel %vm409, %v311, 0
  %v507 = vsel %vm409, %v312, 0
  %v510 = vsel %vm409, %v313, 0
  %v513 = vsel %vm409, %v314, 0
  %v516 = vsel %vm409, %v315, 0
  %v519 = vsel %vm409, %v316, 0
  %v522 = vsel %vm409, %v317, 0
  %v525 = vsel %vm409, %v318, 0
  %v528 = vsel %vm409, %v319, 0
  %v531 = vsel %vm409, %v320, 0
  %v534 = vsel %vm409, %v321, 0
  %v537 = vsel %vm409, %v322, 0
  %v540 = vsel %vm409, %v323, 0
  %v543 = vsel %vm409, %v324, 0
  %v546 = vsel %vm409, %v325, 0
  %v549 = vsel %vm409, %v326, 0
  %v552 = vsel %vm409, %v327, 0
  %v555 = vsel %vm409, %v328, 0
  %v558 = vsel %vm409, %v329, 0
  %v561 = vsel %vm409, %v330, 0
  %v564 = vsel %vm409, %v331, 0
  %v567 = vsel %vm409, %v332, 0
  %v570 = vsel %vm409, %v333, 0
  %v573 = vsel %vm409, %v334, 0
  %v576 = vsel %vm409, %v335, 0
  %v579 = vsel %vm409, %v336, 0
  %v582 = vsel %vm409, %v337, 0
  %v585 = vsel %vm409, %v338, 0
  %v588 = vsel %vm409, %v339, 0
  %v591 = vsel %vm409, %v340, 0
  %v594 = vsel %vm409, %v341, 0
  %v597 = vsel %vm409, %v342, 0
  %v600 = vsel %vm409, %v343, 0
  %v603 = vsel %vm409, %v344, 0
  %v606 = vsel %vm409, %v345, 0
  %v609 = vsel %vm409, %v346, 0
  %v612 = vsel %vm409, %v347, 0
  %v615 = vsel %vm409, %v348, 0
  %v618 = vsel %vm409, %v349, 0
  %v621 = vsel %vm409, %v350, 0
  %v624 = vsel %vm409, %v351, 0
  %v627 = vsel %vm409, %v352, 0
  %v630 = vsel %vm409, %v353, 0
  %v633 = vsel %vm409, %v354, 0
  %v636 = vsel %vm409, %v355, 0
  %v639 = vsel %vm409, %v356, 0
  %v642 = vsel %vm409, %v357, 0
  %v645 = vsel %vm409, %v358, 0
  %v648 = vsel %vm409, %v359, 0
  %v651 = vsel %vm409, %v360, 0
  %v654 = vsel %vm409, %v361, 0
  %v657 = vsel %vm409, %v362, 0
  %v660 = vsel %vm409, %v363, 0
  %v663 = vsel %vm409, %v364, 0
  %v666 = vsel %vm409, %v365, 0
  %v669 = vsel %vm409, %v366, 0
  %v672 = vsel %vm409, %v367, 0
  %v675 = vsel %vm409, %v368, 0
  %v678 = vsel %vm409, %v369, 0
  %v681 = vsel %vm409, %v370, 0
  %v684 = vsel %vm409, %v371, 0
  %v687 = vsel %vm409, %v372, 0
  %v690 = vsel %vm409, %v373, 0
  %v693 = vsel %vm409, %v374, 0
  %v696 = vsel %vm409, %v375, 0
  %v699 = vsel %vm409, %v376, 0
  %v702 = vsel %vm409, %v377, 0
  %v705 = vsel %vm409, %v378, 0
  %v708 = vsel %vm409, %v379, 0
  %v711 = vsel %vm409, %v380, 0
  %v714 = vsel %vm409, %v381, 0
  %v717 = vsel %vm409, %v382, 0
  %v720 = vsel %vm409, %v383, 0
  %v723 = vsel %vm409, %v384, 0
  %v726 = vsel %vm409, %v385, 0
  %v729 = vsel %vm409, %v386, 0
  %v732 = vsel %vm409, %v387, 0
  %v735 = vsel %vm409, %v388, 0
  %v738 = vsel %vm409, %v389, 0
  %v741 = vsel %vm409, %v390, 0
  %v744 = vsel %vm409, %v391, 0
  %v747 = vsel %vm409, %v392, 0
  %v750 = vsel %vm409, %v393, 0
  %v753 = vsel %vm409, %v394, 0
  %v756 = vsel %vm409, %v395, 0
  %v759 = vsel %vm409, %v396, 0
  %v762 = vsel %vm409, %v397, 0
  %v765 = vsel %vm409, %v398, 0
  %v768 = vsel %vm409, %v399, 0
  %v771 = vsel %vm409, %v400, 0
  %v774 = vsel %vm409, %v401, 0
  %v777 = vsel %vm409, %v402, 0
  %v780 = vsel %vm409, %v403, 0
  %v783 = vsel %vm409, %v404, 0
  %vm785 = vcmask 1041408
  %vm786 = vcmask 1042432
  %v787 = vsel %vm785, 4294967295, 65535
  %v788 = vsel %vm786, %v787, 0
  %v790 = vand.u32 %v405, %v788
  %792 = vmatpush.bf16.msra.mxu0 0
  %793 = vmatpush.bf16.msra.mxu0 0
  %794 = vmatpush.bf16.msra.mxu0 0
  %795 = vmatpush.bf16.msra.mxu0 0
  %796 = vmatpush.bf16.msra.mxu0 0
  %797 = vmatpush.bf16.msra.mxu0 0
  %798 = vmatpush.bf16.msra.mxu0 0
  %799 = vmatpush.bf16.msra.mxu0 %v790
  %800 = vmatmul.bf16.gmra.mxu0 %v411
  %v801 = vpop.f32.mrf.mxu0
  %v802 = vadd.f32 %v407, %v801
  %v803 = vpop.f32.mrf.mxu0
  %v804 = vadd.f32 %v407, %v803
  %805 = vmatmul.bf16.gmra.mxu0 %v414
  %v806 = vpop.f32.mrf.mxu0
  %v807 = vadd.f32 %v407, %v806
  %v808 = vpop.f32.mrf.mxu0
  %v809 = vadd.f32 %v407, %v808
  %810 = vmatmul.bf16.gmra.mxu0 %v417
  %v811 = vpop.f32.mrf.mxu0
  %v812 = vadd.f32 %v407, %v811
  %v813 = vpop.f32.mrf.mxu0
  %v814 = vadd.f32 %v407, %v813
  %815 = vmatmul.bf16.gmra.mxu0 %v420
  %v816 = vpop.f32.mrf.mxu0
  %v817 = vadd.f32 %v407, %v816
  %v818 = vpop.f32.mrf.mxu0
  %v819 = vadd.f32 %v407, %v818
  %820 = vmatmul.bf16.gmra.mxu0 %v423
  %v821 = vpop.f32.mrf.mxu0
  %v822 = vadd.f32 %v407, %v821
  %v823 = vpop.f32.mrf.mxu0
  %v824 = vadd.f32 %v407, %v823
  %825 = vmatmul.bf16.gmra.mxu0 %v426
  %v826 = vpop.f32.mrf.mxu0
  %v827 = vadd.f32 %v407, %v826
  %v828 = vpop.f32.mrf.mxu0
  %v829 = vadd.f32 %v407, %v828
  %830 = vmatmul.bf16.gmra.mxu0 %v429
  %v831 = vpop.f32.mrf.mxu0
  %v832 = vadd.f32 %v407, %v831
  %v833 = vpop.f32.mrf.mxu0
  %v834 = vadd.f32 %v407, %v833
  %835 = vmatmul.bf16.gmra.mxu0 %v432
  %v836 = vpop.f32.mrf.mxu0
  %v837 = vadd.f32 %v407, %v836
  %v838 = vpop.f32.mrf.mxu0
  %v839 = vadd.f32 %v407, %v838
  %840 = vmatmul.bf16.gmra.mxu0 %v435
  %v841 = vpop.f32.mrf.mxu0
  %v842 = vadd.f32 %v407, %v841
  %v843 = vpop.f32.mrf.mxu0
  %v844 = vadd.f32 %v407, %v843
  %845 = vmatmul.bf16.gmra.mxu0 %v438
  %v846 = vpop.f32.mrf.mxu0
  %v847 = vadd.f32 %v407, %v846
  %v848 = vpop.f32.mrf.mxu0
  %v849 = vadd.f32 %v407, %v848
  %850 = vmatmul.bf16.gmra.mxu0 %v441
  %v851 = vpop.f32.mrf.mxu0
  %v852 = vadd.f32 %v407, %v851
  %v853 = vpop.f32.mrf.mxu0
  %v854 = vadd.f32 %v407, %v853
  %855 = vmatmul.bf16.gmra.mxu0 %v444
  %v856 = vpop.f32.mrf.mxu0
  %v857 = vadd.f32 %v407, %v856
  %v858 = vpop.f32.mrf.mxu0
  %v859 = vadd.f32 %v407, %v858
  %860 = vmatmul.bf16.gmra.mxu0 %v447
  %v861 = vpop.f32.mrf.mxu0
  %v862 = vadd.f32 %v407, %v861
  %v863 = vpop.f32.mrf.mxu0
  %v864 = vadd.f32 %v407, %v863
  %865 = vmatmul.bf16.gmra.mxu0 %v450
  %v866 = vpop.f32.mrf.mxu0
  %v867 = vadd.f32 %v407, %v866
  %v868 = vpop.f32.mrf.mxu0
  %v869 = vadd.f32 %v407, %v868
  %870 = vmatmul.bf16.gmra.mxu0 %v453
  %v871 = vpop.f32.mrf.mxu0
  %v872 = vadd.f32 %v407, %v871
  %v873 = vpop.f32.mrf.mxu0
  %v874 = vadd.f32 %v407, %v873
  %875 = vmatmul.bf16.gmra.mxu0 %v456
  %v876 = vpop.f32.mrf.mxu0
  %v877 = vadd.f32 %v407, %v876
  %v878 = vpop.f32.mrf.mxu0
  %v879 = vadd.f32 %v407, %v878
  %880 = vmatmul.bf16.gmra.mxu0 %v459
  %v881 = vpop.f32.mrf.mxu0
  %v882 = vadd.f32 %v407, %v881
  %v883 = vpop.f32.mrf.mxu0
  %v884 = vadd.f32 %v407, %v883
  %885 = vmatmul.bf16.gmra.mxu0 %v462
  %v886 = vpop.f32.mrf.mxu0
  %v887 = vadd.f32 %v407, %v886
  %v888 = vpop.f32.mrf.mxu0
  %v889 = vadd.f32 %v407, %v888
  %890 = vmatmul.bf16.gmra.mxu0 %v465
  %v891 = vpop.f32.mrf.mxu0
  %v892 = vadd.f32 %v407, %v891
  %v893 = vpop.f32.mrf.mxu0
  %v894 = vadd.f32 %v407, %v893
  %895 = vmatmul.bf16.gmra.mxu0 %v468
  %v896 = vpop.f32.mrf.mxu0
  %v897 = vadd.f32 %v407, %v896
  %v898 = vpop.f32.mrf.mxu0
  %v899 = vadd.f32 %v407, %v898
  %900 = vmatmul.bf16.gmra.mxu0 %v471
  %v901 = vpop.f32.mrf.mxu0
  %v902 = vadd.f32 %v407, %v901
  %v903 = vpop.f32.mrf.mxu0
  %v904 = vadd.f32 %v407, %v903
  %905 = vmatmul.bf16.gmra.mxu0 %v474
  %v906 = vpop.f32.mrf.mxu0
  %v907 = vadd.f32 %v407, %v906
  %v908 = vpop.f32.mrf.mxu0
  %v909 = vadd.f32 %v407, %v908
  %910 = vmatmul.bf16.gmra.mxu0 %v477
  %v911 = vpop.f32.mrf.mxu0
  %v912 = vadd.f32 %v407, %v911
  %v913 = vpop.f32.mrf.mxu0
  %v914 = vadd.f32 %v407, %v913
  %915 = vmatmul.bf16.gmra.mxu0 %v480
  %v916 = vpop.f32.mrf.mxu0
  %v917 = vadd.f32 %v407, %v916
  %v918 = vpop.f32.mrf.mxu0
  %v919 = vadd.f32 %v407, %v918
  %920 = vmatmul.bf16.gmra.mxu0 %v483
  %v921 = vpop.f32.mrf.mxu0
  %v922 = vadd.f32 %v407, %v921
  %v923 = vpop.f32.mrf.mxu0
  %v924 = vadd.f32 %v407, %v923
  %925 = vmatmul.bf16.gmra.mxu0 %v486
  %v926 = vpop.f32.mrf.mxu0
  %v927 = vadd.f32 %v407, %v926
  %v928 = vpop.f32.mrf.mxu0
  %v929 = vadd.f32 %v407, %v928
  %930 = vmatmul.bf16.gmra.mxu0 %v489
  %v931 = vpop.f32.mrf.mxu0
  %v932 = vadd.f32 %v407, %v931
  %v933 = vpop.f32.mrf.mxu0
  %v934 = vadd.f32 %v407, %v933
  %935 = vmatmul.bf16.gmra.mxu0 %v492
  %v936 = vpop.f32.mrf.mxu0
  %v937 = vadd.f32 %v407, %v936
  %v938 = vpop.f32.mrf.mxu0
  %v939 = vadd.f32 %v407, %v938
  %940 = vmatmul.bf16.gmra.mxu0 %v495
  %v941 = vpop.f32.mrf.mxu0
  %v942 = vadd.f32 %v407, %v941
  %v943 = vpop.f32.mrf.mxu0
  %v944 = vadd.f32 %v407, %v943
  %945 = vmatmul.bf16.gmra.mxu0 %v498
  %v946 = vpop.f32.mrf.mxu0
  %v947 = vadd.f32 %v407, %v946
  %v948 = vpop.f32.mrf.mxu0
  %v949 = vadd.f32 %v407, %v948
  %950 = vmatmul.bf16.gmra.mxu0 %v501
  %v951 = vpop.f32.mrf.mxu0
  %v952 = vadd.f32 %v407, %v951
  %v953 = vpop.f32.mrf.mxu0
  %v954 = vadd.f32 %v407, %v953
  %955 = vmatmul.bf16.gmra.mxu0 %v504
  %v956 = vpop.f32.mrf.mxu0
  %v957 = vadd.f32 %v407, %v956
  %v958 = vpop.f32.mrf.mxu0
  %v959 = vadd.f32 %v407, %v958
  %960 = vmatmul.bf16.gmra.mxu0 %v507
  %v961 = vpop.f32.mrf.mxu0
  %v962 = vadd.f32 %v407, %v961
  %v963 = vpop.f32.mrf.mxu0
  %v964 = vadd.f32 %v407, %v963
  %965 = vmatmul.bf16.gmra.mxu0 %v510
  %v966 = vpop.f32.mrf.mxu0
  %v967 = vadd.f32 %v407, %v966
  %v968 = vpop.f32.mrf.mxu0
  %v969 = vadd.f32 %v407, %v968
  %970 = vmatmul.bf16.gmra.mxu0 %v513
  %v971 = vpop.f32.mrf.mxu0
  %v972 = vadd.f32 %v407, %v971
  %v973 = vpop.f32.mrf.mxu0
  %v974 = vadd.f32 %v407, %v973
  %975 = vmatmul.bf16.gmra.mxu0 %v516
  %v976 = vpop.f32.mrf.mxu0
  %v977 = vadd.f32 %v407, %v976
  %v978 = vpop.f32.mrf.mxu0
  %v979 = vadd.f32 %v407, %v978
  %980 = vmatmul.bf16.gmra.mxu0 %v519
  %v981 = vpop.f32.mrf.mxu0
  %v982 = vadd.f32 %v407, %v981
  %v983 = vpop.f32.mrf.mxu0
  %v984 = vadd.f32 %v407, %v983
  %985 = vmatmul.bf16.gmra.mxu0 %v522
  %v986 = vpop.f32.mrf.mxu0
  %v987 = vadd.f32 %v407, %v986
  %v988 = vpop.f32.mrf.mxu0
  %v989 = vadd.f32 %v407, %v988
  %990 = vmatmul.bf16.gmra.mxu0 %v525
  %v991 = vpop.f32.mrf.mxu0
  %v992 = vadd.f32 %v407, %v991
  %v993 = vpop.f32.mrf.mxu0
  %v994 = vadd.f32 %v407, %v993
  %995 = vmatmul.bf16.gmra.mxu0 %v528
  %v996 = vpop.f32.mrf.mxu0
  %v997 = vadd.f32 %v407, %v996
  %v998 = vpop.f32.mrf.mxu0
  %v999 = vadd.f32 %v407, %v998
  %1000 = vmatmul.bf16.gmra.mxu0 %v531
  %v1001 = vpop.f32.mrf.mxu0
  %v1002 = vadd.f32 %v407, %v1001
  %v1003 = vpop.f32.mrf.mxu0
  %v1004 = vadd.f32 %v407, %v1003
  %1005 = vmatmul.bf16.gmra.mxu0 %v534
  %v1006 = vpop.f32.mrf.mxu0
  %v1007 = vadd.f32 %v407, %v1006
  %v1008 = vpop.f32.mrf.mxu0
  %v1009 = vadd.f32 %v407, %v1008
  %1010 = vmatmul.bf16.gmra.mxu0 %v537
  %v1011 = vpop.f32.mrf.mxu0
  %v1012 = vadd.f32 %v407, %v1011
  %v1013 = vpop.f32.mrf.mxu0
  %v1014 = vadd.f32 %v407, %v1013
  %1015 = vmatmul.bf16.gmra.mxu0 %v540
  %v1016 = vpop.f32.mrf.mxu0
  %v1017 = vadd.f32 %v407, %v1016
  %v1018 = vpop.f32.mrf.mxu0
  %v1019 = vadd.f32 %v407, %v1018
  %1020 = vmatmul.bf16.gmra.mxu0 %v543
  %v1021 = vpop.f32.mrf.mxu0
  %v1022 = vadd.f32 %v407, %v1021
  %v1023 = vpop.f32.mrf.mxu0
  %v1024 = vadd.f32 %v407, %v1023
  %1025 = vmatmul.bf16.gmra.mxu0 %v546
  %v1026 = vpop.f32.mrf.mxu0
  %v1027 = vadd.f32 %v407, %v1026
  %v1028 = vpop.f32.mrf.mxu0
  %v1029 = vadd.f32 %v407, %v1028
  %1030 = vmatmul.bf16.gmra.mxu0 %v549
  %v1031 = vpop.f32.mrf.mxu0
  %v1032 = vadd.f32 %v407, %v1031
  %v1033 = vpop.f32.mrf.mxu0
  %v1034 = vadd.f32 %v407, %v1033
  %1035 = vmatmul.bf16.gmra.mxu0 %v552
  %v1036 = vpop.f32.mrf.mxu0
  %v1037 = vadd.f32 %v407, %v1036
  %v1038 = vpop.f32.mrf.mxu0
  %v1039 = vadd.f32 %v407, %v1038
  %1040 = vmatmul.bf16.gmra.mxu0 %v555
  %v1041 = vpop.f32.mrf.mxu0
  %v1042 = vadd.f32 %v407, %v1041
  %v1043 = vpop.f32.mrf.mxu0
  %v1044 = vadd.f32 %v407, %v1043
  %1045 = vmatmul.bf16.gmra.mxu0 %v558
  %v1046 = vpop.f32.mrf.mxu0
  %v1047 = vadd.f32 %v407, %v1046
  %v1048 = vpop.f32.mrf.mxu0
  %v1049 = vadd.f32 %v407, %v1048
  %1050 = vmatmul.bf16.gmra.mxu0 %v561
  %v1051 = vpop.f32.mrf.mxu0
  %v1052 = vadd.f32 %v407, %v1051
  %v1053 = vpop.f32.mrf.mxu0
  %v1054 = vadd.f32 %v407, %v1053
  %1055 = vmatmul.bf16.gmra.mxu0 %v564
  %v1056 = vpop.f32.mrf.mxu0
  %v1057 = vadd.f32 %v407, %v1056
  %v1058 = vpop.f32.mrf.mxu0
  %v1059 = vadd.f32 %v407, %v1058
  %1060 = vmatmul.bf16.gmra.mxu0 %v567
  %v1061 = vpop.f32.mrf.mxu0
  %v1062 = vadd.f32 %v407, %v1061
  %v1063 = vpop.f32.mrf.mxu0
  %v1064 = vadd.f32 %v407, %v1063
  %1065 = vmatmul.bf16.gmra.mxu0 %v570
  %v1066 = vpop.f32.mrf.mxu0
  %v1067 = vadd.f32 %v407, %v1066
  %v1068 = vpop.f32.mrf.mxu0
  %v1069 = vadd.f32 %v407, %v1068
  %1070 = vmatmul.bf16.gmra.mxu0 %v573
  %v1071 = vpop.f32.mrf.mxu0
  %v1072 = vadd.f32 %v407, %v1071
  %v1073 = vpop.f32.mrf.mxu0
  %v1074 = vadd.f32 %v407, %v1073
  %1075 = vmatmul.bf16.gmra.mxu0 %v576
  %v1076 = vpop.f32.mrf.mxu0
  %v1077 = vadd.f32 %v407, %v1076
  %v1078 = vpop.f32.mrf.mxu0
  %v1079 = vadd.f32 %v407, %v1078
  %1080 = vmatmul.bf16.gmra.mxu0 %v579
  %v1081 = vpop.f32.mrf.mxu0
  %v1082 = vadd.f32 %v407, %v1081
  %v1083 = vpop.f32.mrf.mxu0
  %v1084 = vadd.f32 %v407, %v1083
  %1085 = vmatmul.bf16.gmra.mxu0 %v582
  %v1086 = vpop.f32.mrf.mxu0
  %v1087 = vadd.f32 %v407, %v1086
  %v1088 = vpop.f32.mrf.mxu0
  %v1089 = vadd.f32 %v407, %v1088
  %1090 = vmatmul.bf16.gmra.mxu0 %v585
  %v1091 = vpop.f32.mrf.mxu0
  %v1092 = vadd.f32 %v407, %v1091
  %v1093 = vpop.f32.mrf.mxu0
  %v1094 = vadd.f32 %v407, %v1093
  %1095 = vmatmul.bf16.gmra.mxu0 %v588
  %v1096 = vpop.f32.mrf.mxu0
  %v1097 = vadd.f32 %v407, %v1096
  %v1098 = vpop.f32.mrf.mxu0
  %v1099 = vadd.f32 %v407, %v1098
  %1100 = vmatmul.bf16.gmra.mxu0 %v591
  %v1101 = vpop.f32.mrf.mxu0
  %v1102 = vadd.f32 %v407, %v1101
  %v1103 = vpop.f32.mrf.mxu0
  %v1104 = vadd.f32 %v407, %v1103
  %1105 = vmatmul.bf16.gmra.mxu0 %v594
  %v1106 = vpop.f32.mrf.mxu0
  %v1107 = vadd.f32 %v407, %v1106
  %v1108 = vpop.f32.mrf.mxu0
  %v1109 = vadd.f32 %v407, %v1108
  %1110 = vmatmul.bf16.gmra.mxu0 %v597
  %v1111 = vpop.f32.mrf.mxu0
  %v1112 = vadd.f32 %v407, %v1111
  %v1113 = vpop.f32.mrf.mxu0
  %v1114 = vadd.f32 %v407, %v1113
  %1115 = vmatmul.bf16.gmra.mxu0 %v600
  %v1116 = vpop.f32.mrf.mxu0
  %v1117 = vadd.f32 %v407, %v1116
  %v1118 = vpop.f32.mrf.mxu0
  %v1119 = vadd.f32 %v407, %v1118
  %1120 = vmatmul.bf16.gmra.mxu0 %v603
  %v1121 = vpop.f32.mrf.mxu0
  %v1122 = vadd.f32 %v407, %v1121
  %v1123 = vpop.f32.mrf.mxu0
  %v1124 = vadd.f32 %v407, %v1123
  %1125 = vmatmul.bf16.gmra.mxu0 %v606
  %v1126 = vpop.f32.mrf.mxu0
  %v1127 = vadd.f32 %v407, %v1126
  %v1128 = vpop.f32.mrf.mxu0
  %v1129 = vadd.f32 %v407, %v1128
  %1130 = vmatmul.bf16.gmra.mxu0 %v609
  %v1131 = vpop.f32.mrf.mxu0
  %v1132 = vadd.f32 %v407, %v1131
  %v1133 = vpop.f32.mrf.mxu0
  %v1134 = vadd.f32 %v407, %v1133
  %1135 = vmatmul.bf16.gmra.mxu0 %v612
  %v1136 = vpop.f32.mrf.mxu0
  %v1137 = vadd.f32 %v407, %v1136
  %v1138 = vpop.f32.mrf.mxu0
  %v1139 = vadd.f32 %v407, %v1138
  %1140 = vmatmul.bf16.gmra.mxu0 %v615
  %v1141 = vpop.f32.mrf.mxu0
  %v1142 = vadd.f32 %v407, %v1141
  %v1143 = vpop.f32.mrf.mxu0
  %v1144 = vadd.f32 %v407, %v1143
  %1145 = vmatmul.bf16.gmra.mxu0 %v618
  %v1146 = vpop.f32.mrf.mxu0
  %v1147 = vadd.f32 %v407, %v1146
  %v1148 = vpop.f32.mrf.mxu0
  %v1149 = vadd.f32 %v407, %v1148
  %1150 = vmatmul.bf16.gmra.mxu0 %v621
  %v1151 = vpop.f32.mrf.mxu0
  %v1152 = vadd.f32 %v407, %v1151
  %v1153 = vpop.f32.mrf.mxu0
  %v1154 = vadd.f32 %v407, %v1153
  %1155 = vmatmul.bf16.gmra.mxu0 %v624
  %v1156 = vpop.f32.mrf.mxu0
  %v1157 = vadd.f32 %v407, %v1156
  %v1158 = vpop.f32.mrf.mxu0
  %v1159 = vadd.f32 %v407, %v1158
  %1160 = vmatmul.bf16.gmra.mxu0 %v627
  %v1161 = vpop.f32.mrf.mxu0
  %v1162 = vadd.f32 %v407, %v1161
  %v1163 = vpop.f32.mrf.mxu0
  %v1164 = vadd.f32 %v407, %v1163
  %1165 = vmatmul.bf16.gmra.mxu0 %v630
  %v1166 = vpop.f32.mrf.mxu0
  %v1167 = vadd.f32 %v407, %v1166
  %v1168 = vpop.f32.mrf.mxu0
  %v1169 = vadd.f32 %v407, %v1168
  %1170 = vmatmul.bf16.gmra.mxu0 %v633
  %v1171 = vpop.f32.mrf.mxu0
  %v1172 = vadd.f32 %v407, %v1171
  %v1173 = vpop.f32.mrf.mxu0
  %v1174 = vadd.f32 %v407, %v1173
  %1175 = vmatmul.bf16.gmra.mxu0 %v636
  %v1176 = vpop.f32.mrf.mxu0
  %v1177 = vadd.f32 %v407, %v1176
  %v1178 = vpop.f32.mrf.mxu0
  %v1179 = vadd.f32 %v407, %v1178
  %1180 = vmatmul.bf16.gmra.mxu0 %v639
  %v1181 = vpop.f32.mrf.mxu0
  %v1182 = vadd.f32 %v407, %v1181
  %v1183 = vpop.f32.mrf.mxu0
  %v1184 = vadd.f32 %v407, %v1183
  %1185 = vmatmul.bf16.gmra.mxu0 %v642
  %v1186 = vpop.f32.mrf.mxu0
  %v1187 = vadd.f32 %v407, %v1186
  %v1188 = vpop.f32.mrf.mxu0
  %v1189 = vadd.f32 %v407, %v1188
  %1190 = vmatmul.bf16.gmra.mxu0 %v645
  %v1191 = vpop.f32.mrf.mxu0
  %v1192 = vadd.f32 %v407, %v1191
  %v1193 = vpop.f32.mrf.mxu0
  %v1194 = vadd.f32 %v407, %v1193
  %1195 = vmatmul.bf16.gmra.mxu0 %v648
  %v1196 = vpop.f32.mrf.mxu0
  %v1197 = vadd.f32 %v407, %v1196
  %v1198 = vpop.f32.mrf.mxu0
  %v1199 = vadd.f32 %v407, %v1198
  %1200 = vmatmul.bf16.gmra.mxu0 %v651
  %v1201 = vpop.f32.mrf.mxu0
  %v1202 = vadd.f32 %v407, %v1201
  %v1203 = vpop.f32.mrf.mxu0
  %v1204 = vadd.f32 %v407, %v1203
  %1205 = vmatmul.bf16.gmra.mxu0 %v654
  %v1206 = vpop.f32.mrf.mxu0
  %v1207 = vadd.f32 %v407, %v1206
  %v1208 = vpop.f32.mrf.mxu0
  %v1209 = vadd.f32 %v407, %v1208
  %1210 = vmatmul.bf16.gmra.mxu0 %v657
  %v1211 = vpop.f32.mrf.mxu0
  %v1212 = vadd.f32 %v407, %v1211
  %v1213 = vpop.f32.mrf.mxu0
  %v1214 = vadd.f32 %v407, %v1213
  %1215 = vmatmul.bf16.gmra.mxu0 %v660
  %v1216 = vpop.f32.mrf.mxu0
  %v1217 = vadd.f32 %v407, %v1216
  %v1218 = vpop.f32.mrf.mxu0
  %v1219 = vadd.f32 %v407, %v1218
  %1220 = vmatmul.bf16.gmra.mxu0 %v663
  %v1221 = vpop.f32.mrf.mxu0
  %v1222 = vadd.f32 %v407, %v1221
  %v1223 = vpop.f32.mrf.mxu0
  %v1224 = vadd.f32 %v407, %v1223
  %1225 = vmatmul.bf16.gmra.mxu0 %v666
  %v1226 = vpop.f32.mrf.mxu0
  %v1227 = vadd.f32 %v407, %v1226
  %v1228 = vpop.f32.mrf.mxu0
  %v1229 = vadd.f32 %v407, %v1228
  %1230 = vmatmul.bf16.gmra.mxu0 %v669
  %v1231 = vpop.f32.mrf.mxu0
  %v1232 = vadd.f32 %v407, %v1231
  %v1233 = vpop.f32.mrf.mxu0
  %v1234 = vadd.f32 %v407, %v1233
  %1235 = vmatmul.bf16.gmra.mxu0 %v672
  %v1236 = vpop.f32.mrf.mxu0
  %v1237 = vadd.f32 %v407, %v1236
  %v1238 = vpop.f32.mrf.mxu0
  %v1239 = vadd.f32 %v407, %v1238
  %1240 = vmatmul.bf16.gmra.mxu0 %v675
  %v1241 = vpop.f32.mrf.mxu0
  %v1242 = vadd.f32 %v407, %v1241
  %v1243 = vpop.f32.mrf.mxu0
  %v1244 = vadd.f32 %v407, %v1243
  %1245 = vmatmul.bf16.gmra.mxu0 %v678
  %v1246 = vpop.f32.mrf.mxu0
  %v1247 = vadd.f32 %v407, %v1246
  %v1248 = vpop.f32.mrf.mxu0
  %v1249 = vadd.f32 %v407, %v1248
  %1250 = vmatmul.bf16.gmra.mxu0 %v681
  %v1251 = vpop.f32.mrf.mxu0
  %v1252 = vadd.f32 %v407, %v1251
  %v1253 = vpop.f32.mrf.mxu0
  %v1254 = vadd.f32 %v407, %v1253
  %1255 = vmatmul.bf16.gmra.mxu0 %v684
  %v1256 = vpop.f32.mrf.mxu0
  %v1257 = vadd.f32 %v407, %v1256
  %v1258 = vpop.f32.mrf.mxu0
  %v1259 = vadd.f32 %v407, %v1258
  %1260 = vmatmul.bf16.gmra.mxu0 %v687
  %v1261 = vpop.f32.mrf.mxu0
  %v1262 = vadd.f32 %v407, %v1261
  %v1263 = vpop.f32.mrf.mxu0
  %v1264 = vadd.f32 %v407, %v1263
  %1265 = vmatmul.bf16.gmra.mxu0 %v690
  %v1266 = vpop.f32.mrf.mxu0
  %v1267 = vadd.f32 %v407, %v1266
  %v1268 = vpop.f32.mrf.mxu0
  %v1269 = vadd.f32 %v407, %v1268
  %1270 = vmatmul.bf16.gmra.mxu0 %v693
  %v1271 = vpop.f32.mrf.mxu0
  %v1272 = vadd.f32 %v407, %v1271
  %v1273 = vpop.f32.mrf.mxu0
  %v1274 = vadd.f32 %v407, %v1273
  %1275 = vmatmul.bf16.gmra.mxu0 %v696
  %v1276 = vpop.f32.mrf.mxu0
  %v1277 = vadd.f32 %v407, %v1276
  %v1278 = vpop.f32.mrf.mxu0
  %v1279 = vadd.f32 %v407, %v1278
  %1280 = vmatmul.bf16.gmra.mxu0 %v699
  %v1281 = vpop.f32.mrf.mxu0
  %v1282 = vadd.f32 %v407, %v1281
  %v1283 = vpop.f32.mrf.mxu0
  %v1284 = vadd.f32 %v407, %v1283
  %1285 = vmatmul.bf16.gmra.mxu0 %v702
  %v1286 = vpop.f32.mrf.mxu0
  %v1287 = vadd.f32 %v407, %v1286
  %v1288 = vpop.f32.mrf.mxu0
  %v1289 = vadd.f32 %v407, %v1288
  %1290 = vmatmul.bf16.gmra.mxu0 %v705
  %v1291 = vpop.f32.mrf.mxu0
  %v1292 = vadd.f32 %v407, %v1291
  %v1293 = vpop.f32.mrf.mxu0
  %v1294 = vadd.f32 %v407, %v1293
  %1295 = vmatmul.bf16.gmra.mxu0 %v708
  %v1296 = vpop.f32.mrf.mxu0
  %v1297 = vadd.f32 %v407, %v1296
  %v1298 = vpop.f32.mrf.mxu0
  %v1299 = vadd.f32 %v407, %v1298
  %1300 = vmatmul.bf16.gmra.mxu0 %v711
  %v1301 = vpop.f32.mrf.mxu0
  %v1302 = vadd.f32 %v407, %v1301
  %v1303 = vpop.f32.mrf.mxu0
  %v1304 = vadd.f32 %v407, %v1303
  %1305 = vmatmul.bf16.gmra.mxu0 %v714
  %v1306 = vpop.f32.mrf.mxu0
  %v1307 = vadd.f32 %v407, %v1306
  %v1308 = vpop.f32.mrf.mxu0
  %v1309 = vadd.f32 %v407, %v1308
  %1310 = vmatmul.bf16.gmra.mxu0 %v717
  %v1311 = vpop.f32.mrf.mxu0
  %v1312 = vadd.f32 %v407, %v1311
  %v1313 = vpop.f32.mrf.mxu0
  %v1314 = vadd.f32 %v407, %v1313
  %1315 = vmatmul.bf16.gmra.mxu0 %v720
  %v1316 = vpop.f32.mrf.mxu0
  %v1317 = vadd.f32 %v407, %v1316
  %v1318 = vpop.f32.mrf.mxu0
  %v1319 = vadd.f32 %v407, %v1318
  %1320 = vmatmul.bf16.gmra.mxu0 %v723
  %v1321 = vpop.f32.mrf.mxu0
  %v1322 = vadd.f32 %v407, %v1321
  %v1323 = vpop.f32.mrf.mxu0
  %v1324 = vadd.f32 %v407, %v1323
  %1325 = vmatmul.bf16.gmra.mxu0 %v726
  %v1326 = vpop.f32.mrf.mxu0
  %v1327 = vadd.f32 %v407, %v1326
  %v1328 = vpop.f32.mrf.mxu0
  %v1329 = vadd.f32 %v407, %v1328
  %1330 = vmatmul.bf16.gmra.mxu0 %v729
  %v1331 = vpop.f32.mrf.mxu0
  %v1332 = vadd.f32 %v407, %v1331
  %v1333 = vpop.f32.mrf.mxu0
  %v1334 = vadd.f32 %v407, %v1333
  %1335 = vmatmul.bf16.gmra.mxu0 %v732
  %v1336 = vpop.f32.mrf.mxu0
  %v1337 = vadd.f32 %v407, %v1336
  %v1338 = vpop.f32.mrf.mxu0
  %v1339 = vadd.f32 %v407, %v1338
  %1340 = vmatmul.bf16.gmra.mxu0 %v735
  %v1341 = vpop.f32.mrf.mxu0
  %v1342 = vadd.f32 %v407, %v1341
  %v1343 = vpop.f32.mrf.mxu0
  %v1344 = vadd.f32 %v407, %v1343
  %1345 = vmatmul.bf16.gmra.mxu0 %v738
  %v1346 = vpop.f32.mrf.mxu0
  %v1347 = vadd.f32 %v407, %v1346
  %v1348 = vpop.f32.mrf.mxu0
  %v1349 = vadd.f32 %v407, %v1348
  %1350 = vmatmul.bf16.gmra.mxu0 %v741
  %v1351 = vpop.f32.mrf.mxu0
  %v1352 = vadd.f32 %v407, %v1351
  %v1353 = vpop.f32.mrf.mxu0
  %v1354 = vadd.f32 %v407, %v1353
  %1355 = vmatmul.bf16.gmra.mxu0 %v744
  %v1356 = vpop.f32.mrf.mxu0
  %v1357 = vadd.f32 %v407, %v1356
  %v1358 = vpop.f32.mrf.mxu0
  %v1359 = vadd.f32 %v407, %v1358
  %1360 = vmatmul.bf16.gmra.mxu0 %v747
  %v1361 = vpop.f32.mrf.mxu0
  %v1362 = vadd.f32 %v407, %v1361
  %v1363 = vpop.f32.mrf.mxu0
  %v1364 = vadd.f32 %v407, %v1363
  %1365 = vmatmul.bf16.gmra.mxu0 %v750
  %v1366 = vpop.f32.mrf.mxu0
  %v1367 = vadd.f32 %v407, %v1366
  %v1368 = vpop.f32.mrf.mxu0
  %v1369 = vadd.f32 %v407, %v1368
  %1370 = vmatmul.bf16.gmra.mxu0 %v753
  %v1371 = vpop.f32.mrf.mxu0
  %v1372 = vadd.f32 %v407, %v1371
  %v1373 = vpop.f32.mrf.mxu0
  %v1374 = vadd.f32 %v407, %v1373
  %1375 = vmatmul.bf16.gmra.mxu0 %v756
  %v1376 = vpop.f32.mrf.mxu0
  %v1377 = vadd.f32 %v407, %v1376
  %v1378 = vpop.f32.mrf.mxu0
  %v1379 = vadd.f32 %v407, %v1378
  %1380 = vmatmul.bf16.gmra.mxu0 %v759
  %v1381 = vpop.f32.mrf.mxu0
  %v1382 = vadd.f32 %v407, %v1381
  %v1383 = vpop.f32.mrf.mxu0
  %v1384 = vadd.f32 %v407, %v1383
  %1385 = vmatmul.bf16.gmra.mxu0 %v762
  %v1386 = vpop.f32.mrf.mxu0
  %v1387 = vadd.f32 %v407, %v1386
  %v1388 = vpop.f32.mrf.mxu0
  %v1389 = vadd.f32 %v407, %v1388
  %1390 = vmatmul.bf16.gmra.mxu0 %v765
  %v1391 = vpop.f32.mrf.mxu0
  %v1392 = vadd.f32 %v407, %v1391
  %v1393 = vpop.f32.mrf.mxu0
  %v1394 = vadd.f32 %v407, %v1393
  %1395 = vmatmul.bf16.gmra.mxu0 %v768
  %v1396 = vpop.f32.mrf.mxu0
  %v1397 = vadd.f32 %v407, %v1396
  %v1398 = vpop.f32.mrf.mxu0
  %v1399 = vadd.f32 %v407, %v1398
  %1400 = vmatmul.bf16.gmra.mxu0 %v771
  %v1401 = vpop.f32.mrf.mxu0
  %v1402 = vadd.f32 %v407, %v1401
  %v1403 = vpop.f32.mrf.mxu0
  %v1404 = vadd.f32 %v407, %v1403
  %1405 = vmatmul.bf16.gmra.mxu0 %v774
  %v1406 = vpop.f32.mrf.mxu0
  %v1407 = vadd.f32 %v407, %v1406
  %v1408 = vpop.f32.mrf.mxu0
  %v1409 = vadd.f32 %v407, %v1408
  %1410 = vmatmul.bf16.gmra.mxu0 %v777
  %v1411 = vpop.f32.mrf.mxu0
  %v1412 = vadd.f32 %v407, %v1411
  %v1413 = vpop.f32.mrf.mxu0
  %v1414 = vadd.f32 %v407, %v1413
  %1415 = vmatmul.bf16.gmra.mxu0 %v780
  %v1416 = vpop.f32.mrf.mxu0
  %v1417 = vadd.f32 %v407, %v1416
  %v1418 = vpop.f32.mrf.mxu0
  %v1419 = vadd.f32 %v407, %v1418
  %1420 = vmatmul.bf16.gmra.mxu0 %v783
  %v1421 = vpop.f32.mrf.mxu0
  %v1422 = vadd.f32 %v407, %v1421
  %v1423 = vpop.f32.mrf.mxu0
  %v1424 = vadd.f32 %v407, %v1423
  %1425 = vdwg.mxu0
  %v1426 = vmax.f32 %v802, 0.0
  %v1427 = vmax.f32 %v804, 0.0
  %v1428 = vmax.f32 %v807, 0.0
  %v1429 = vmax.f32 %v809, 0.0
  %v1430 = vmax.f32 %v812, 0.0
  %v1431 = vmax.f32 %v814, 0.0
  %v1432 = vmax.f32 %v817, 0.0
  %v1433 = vmax.f32 %v819, 0.0
  %v1434 = vmax.f32 %v822, 0.0
  %v1435 = vmax.f32 %v824, 0.0
  %v1436 = vmax.f32 %v827, 0.0
  %v1437 = vmax.f32 %v829, 0.0
  %v1438 = vmax.f32 %v832, 0.0
  %v1439 = vmax.f32 %v834, 0.0
  %v1440 = vmax.f32 %v837, 0.0
  %v1441 = vmax.f32 %v839, 0.0
  %v1442 = vmax.f32 %v842, 0.0
  %v1443 = vmax.f32 %v844, 0.0
  %v1444 = vmax.f32 %v847, 0.0
  %v1445 = vmax.f32 %v849, 0.0
  %v1446 = vmax.f32 %v852, 0.0
  %v1447 = vmax.f32 %v854, 0.0
  %v1448 = vmax.f32 %v857, 0.0
  %v1449 = vmax.f32 %v859, 0.0
  %v1450 = vmax.f32 %v862, 0.0
  %v1451 = vmax.f32 %v864, 0.0
  %v1452 = vmax.f32 %v867, 0.0
  %v1453 = vmax.f32 %v869, 0.0
  %v1454 = vmax.f32 %v872, 0.0
  %v1455 = vmax.f32 %v874, 0.0
  %v1456 = vmax.f32 %v877, 0.0
  %v1457 = vmax.f32 %v879, 0.0
  %v1458 = vmax.f32 %v882, 0.0
  %v1459 = vmax.f32 %v884, 0.0
  %v1460 = vmax.f32 %v887, 0.0
  %v1461 = vmax.f32 %v889, 0.0
  %v1462 = vmax.f32 %v892, 0.0
  %v1463 = vmax.f32 %v894, 0.0
  %v1464 = vmax.f32 %v897, 0.0
  %v1465 = vmax.f32 %v899, 0.0
  %v1466 = vmax.f32 %v902, 0.0
  %v1467 = vmax.f32 %v904, 0.0
  %v1468 = vmax.f32 %v907, 0.0
  %v1469 = vmax.f32 %v909, 0.0
  %v1470 = vmax.f32 %v912, 0.0
  %v1471 = vmax.f32 %v914, 0.0
  %v1472 = vmax.f32 %v917, 0.0
  %v1473 = vmax.f32 %v919, 0.0
  %v1474 = vmax.f32 %v922, 0.0
  %v1475 = vmax.f32 %v924, 0.0
  %v1476 = vmax.f32 %v927, 0.0
  %v1477 = vmax.f32 %v929, 0.0
  %v1478 = vmax.f32 %v932, 0.0
  %v1479 = vmax.f32 %v934, 0.0
  %v1480 = vmax.f32 %v937, 0.0
  %v1481 = vmax.f32 %v939, 0.0
  %v1482 = vmax.f32 %v942, 0.0
  %v1483 = vmax.f32 %v944, 0.0
  %v1484 = vmax.f32 %v947, 0.0
  %v1485 = vmax.f32 %v949, 0.0
  %v1486 = vmax.f32 %v952, 0.0
  %v1487 = vmax.f32 %v954, 0.0
  %v1488 = vmax.f32 %v957, 0.0
  %v1489 = vmax.f32 %v959, 0.0
  %v1490 = vmax.f32 %v962, 0.0
  %v1491 = vmax.f32 %v964, 0.0
  %v1492 = vmax.f32 %v967, 0.0
  %v1493 = vmax.f32 %v969, 0.0
  %v1494 = vmax.f32 %v972, 0.0
  %v1495 = vmax.f32 %v974, 0.0
  %v1496 = vmax.f32 %v977, 0.0
  %v1497 = vmax.f32 %v979, 0.0
  %v1498 = vmax.f32 %v982, 0.0
  %v1499 = vmax.f32 %v984, 0.0
  %v1500 = vmax.f32 %v987, 0.0
  %v1501 = vmax.f32 %v989, 0.0
  %v1502 = vmax.f32 %v992, 0.0
  %v1503 = vmax.f32 %v994, 0.0
  %v1504 = vmax.f32 %v997, 0.0
  %v1505 = vmax.f32 %v999, 0.0
  %v1506 = vmax.f32 %v1002, 0.0
  %v1507 = vmax.f32 %v1004, 0.0
  %v1508 = vmax.f32 %v1007, 0.0
  %v1509 = vmax.f32 %v1009, 0.0
  %v1510 = vmax.f32 %v1012, 0.0
  %v1511 = vmax.f32 %v1014, 0.0
  %v1512 = vmax.f32 %v1017, 0.0
  %v1513 = vmax.f32 %v1019, 0.0
  %v1514 = vmax.f32 %v1022, 0.0
  %v1515 = vmax.f32 %v1024, 0.0
  %v1516 = vmax.f32 %v1027, 0.0
  %v1517 = vmax.f32 %v1029, 0.0
  %v1518 = vmax.f32 %v1032, 0.0
  %v1519 = vmax.f32 %v1034, 0.0
  %v1520 = vmax.f32 %v1037, 0.0
  %v1521 = vmax.f32 %v1039, 0.0
  %v1522 = vmax.f32 %v1042, 0.0
  %v1523 = vmax.f32 %v1044, 0.0
  %v1524 = vmax.f32 %v1047, 0.0
  %v1525 = vmax.f32 %v1049, 0.0
  %v1526 = vmax.f32 %v1052, 0.0
  %v1527 = vmax.f32 %v1054, 0.0
  %v1528 = vmax.f32 %v1057, 0.0
  %v1529 = vmax.f32 %v1059, 0.0
  %v1530 = vmax.f32 %v1062, 0.0
  %v1531 = vmax.f32 %v1064, 0.0
  %v1532 = vmax.f32 %v1067, 0.0
  %v1533 = vmax.f32 %v1069, 0.0
  %v1534 = vmax.f32 %v1072, 0.0
  %v1535 = vmax.f32 %v1074, 0.0
  %v1536 = vmax.f32 %v1077, 0.0
  %v1537 = vmax.f32 %v1079, 0.0
  %v1538 = vmax.f32 %v1082, 0.0
  %v1539 = vmax.f32 %v1084, 0.0
  %v1540 = vmax.f32 %v1087, 0.0
  %v1541 = vmax.f32 %v1089, 0.0
  %v1542 = vmax.f32 %v1092, 0.0
  %v1543 = vmax.f32 %v1094, 0.0
  %v1544 = vmax.f32 %v1097, 0.0
  %v1545 = vmax.f32 %v1099, 0.0
  %v1546 = vmax.f32 %v1102, 0.0
  %v1547 = vmax.f32 %v1104, 0.0
  %v1548 = vmax.f32 %v1107, 0.0
  %v1549 = vmax.f32 %v1109, 0.0
  %v1550 = vmax.f32 %v1112, 0.0
  %v1551 = vmax.f32 %v1114, 0.0
  %v1552 = vmax.f32 %v1117, 0.0
  %v1553 = vmax.f32 %v1119, 0.0
  %v1554 = vmax.f32 %v1122, 0.0
  %v1555 = vmax.f32 %v1124, 0.0
  %v1556 = vmax.f32 %v1127, 0.0
  %v1557 = vmax.f32 %v1129, 0.0
  %v1558 = vmax.f32 %v1132, 0.0
  %v1559 = vmax.f32 %v1134, 0.0
  %v1560 = vmax.f32 %v1137, 0.0
  %v1561 = vmax.f32 %v1139, 0.0
  %v1562 = vmax.f32 %v1142, 0.0
  %v1563 = vmax.f32 %v1144, 0.0
  %v1564 = vmax.f32 %v1147, 0.0
  %v1565 = vmax.f32 %v1149, 0.0
  %v1566 = vmax.f32 %v1152, 0.0
  %v1567 = vmax.f32 %v1154, 0.0
  %v1568 = vmax.f32 %v1157, 0.0
  %v1569 = vmax.f32 %v1159, 0.0
  %v1570 = vmax.f32 %v1162, 0.0
  %v1571 = vmax.f32 %v1164, 0.0
  %v1572 = vmax.f32 %v1167, 0.0
  %v1573 = vmax.f32 %v1169, 0.0
  %v1574 = vmax.f32 %v1172, 0.0
  %v1575 = vmax.f32 %v1174, 0.0
  %v1576 = vmax.f32 %v1177, 0.0
  %v1577 = vmax.f32 %v1179, 0.0
  %v1578 = vmax.f32 %v1182, 0.0
  %v1579 = vmax.f32 %v1184, 0.0
  %v1580 = vmax.f32 %v1187, 0.0
  %v1581 = vmax.f32 %v1189, 0.0
  %v1582 = vmax.f32 %v1192, 0.0
  %v1583 = vmax.f32 %v1194, 0.0
  %v1584 = vmax.f32 %v1197, 0.0
  %v1585 = vmax.f32 %v1199, 0.0
  %v1586 = vmax.f32 %v1202, 0.0
  %v1587 = vmax.f32 %v1204, 0.0
  %v1588 = vmax.f32 %v1207, 0.0
  %v1589 = vmax.f32 %v1209, 0.0
  %v1590 = vmax.f32 %v1212, 0.0
  %v1591 = vmax.f32 %v1214, 0.0
  %v1592 = vmax.f32 %v1217, 0.0
  %v1593 = vmax.f32 %v1219, 0.0
  %v1594 = vmax.f32 %v1222, 0.0
  %v1595 = vmax.f32 %v1224, 0.0
  %v1596 = vmax.f32 %v1227, 0.0
  %v1597 = vmax.f32 %v1229, 0.0
  %v1598 = vmax.f32 %v1232, 0.0
  %v1599 = vmax.f32 %v1234, 0.0
  %v1600 = vmax.f32 %v1237, 0.0
  %v1601 = vmax.f32 %v1239, 0.0
  %v1602 = vmax.f32 %v1242, 0.0
  %v1603 = vmax.f32 %v1244, 0.0
  %v1604 = vmax.f32 %v1247, 0.0
  %v1605 = vmax.f32 %v1249, 0.0
  %v1606 = vmax.f32 %v1252, 0.0
  %v1607 = vmax.f32 %v1254, 0.0
  %v1608 = vmax.f32 %v1257, 0.0
  %v1609 = vmax.f32 %v1259, 0.0
  %v1610 = vmax.f32 %v1262, 0.0
  %v1611 = vmax.f32 %v1264, 0.0
  %v1612 = vmax.f32 %v1267, 0.0
  %v1613 = vmax.f32 %v1269, 0.0
  %v1614 = vmax.f32 %v1272, 0.0
  %v1615 = vmax.f32 %v1274, 0.0
  %v1616 = vmax.f32 %v1277, 0.0
  %v1617 = vmax.f32 %v1279, 0.0
  %v1618 = vmax.f32 %v1282, 0.0
  %v1619 = vmax.f32 %v1284, 0.0
  %v1620 = vmax.f32 %v1287, 0.0
  %v1621 = vmax.f32 %v1289, 0.0
  %v1622 = vmax.f32 %v1292, 0.0
  %v1623 = vmax.f32 %v1294, 0.0
  %v1624 = vmax.f32 %v1297, 0.0
  %v1625 = vmax.f32 %v1299, 0.0
  %v1626 = vmax.f32 %v1302, 0.0
  %v1627 = vmax.f32 %v1304, 0.0
  %v1628 = vmax.f32 %v1307, 0.0
  %v1629 = vmax.f32 %v1309, 0.0
  %v1630 = vmax.f32 %v1312, 0.0
  %v1631 = vmax.f32 %v1314, 0.0
  %v1632 = vmax.f32 %v1317, 0.0
  %v1633 = vmax.f32 %v1319, 0.0
  %v1634 = vmax.f32 %v1322, 0.0
  %v1635 = vmax.f32 %v1324, 0.0
  %v1636 = vmax.f32 %v1327, 0.0
  %v1637 = vmax.f32 %v1329, 0.0
  %v1638 = vmax.f32 %v1332, 0.0
  %v1639 = vmax.f32 %v1334, 0.0
  %v1640 = vmax.f32 %v1337, 0.0
  %v1641 = vmax.f32 %v1339, 0.0
  %v1642 = vmax.f32 %v1342, 0.0
  %v1643 = vmax.f32 %v1344, 0.0
  %v1644 = vmax.f32 %v1347, 0.0
  %v1645 = vmax.f32 %v1349, 0.0
  %v1646 = vmax.f32 %v1352, 0.0
  %v1647 = vmax.f32 %v1354, 0.0
  %v1648 = vmax.f32 %v1357, 0.0
  %v1649 = vmax.f32 %v1359, 0.0
  %v1650 = vmax.f32 %v1362, 0.0
  %v1651 = vmax.f32 %v1364, 0.0
  %v1652 = vmax.f32 %v1367, 0.0
  %v1653 = vmax.f32 %v1369, 0.0
  %v1654 = vmax.f32 %v1372, 0.0
  %v1655 = vmax.f32 %v1374, 0.0
  %v1656 = vmax.f32 %v1377, 0.0
  %v1657 = vmax.f32 %v1379, 0.0
  %v1658 = vmax.f32 %v1382, 0.0
  %v1659 = vmax.f32 %v1384, 0.0
  %v1660 = vmax.f32 %v1387, 0.0
  %v1661 = vmax.f32 %v1389, 0.0
  %v1662 = vmax.f32 %v1392, 0.0
  %v1663 = vmax.f32 %v1394, 0.0
  %v1664 = vmax.f32 %v1397, 0.0
  %v1665 = vmax.f32 %v1399, 0.0
  %v1666 = vmax.f32 %v1402, 0.0
  %v1667 = vmax.f32 %v1404, 0.0
  %v1668 = vmax.f32 %v1407, 0.0
  %v1669 = vmax.f32 %v1409, 0.0
  %v1670 = vmax.f32 %v1412, 0.0
  %v1671 = vmax.f32 %v1414, 0.0
  %v1672 = vmax.f32 %v1417, 0.0
  %v1673 = vmax.f32 %v1419, 0.0
  %v1674 = vmax.f32 %v1422, 0.0
  %v1675 = vmax.f32 %v1424, 0.0
  %v1676 = vpack.c.bf16 %v1427, %v1426
  %v1677 = vpack.c.bf16 %v1429, %v1428
  %v1678 = vpack.c.bf16 %v1431, %v1430
  %v1679 = vpack.c.bf16 %v1433, %v1432
  %v1680 = vpack.c.bf16 %v1435, %v1434
  %v1681 = vpack.c.bf16 %v1437, %v1436
  %v1682 = vpack.c.bf16 %v1439, %v1438
  %v1683 = vpack.c.bf16 %v1441, %v1440
  %v1684 = vpack.c.bf16 %v1443, %v1442
  %v1685 = vpack.c.bf16 %v1445, %v1444
  %v1686 = vpack.c.bf16 %v1447, %v1446
  %v1687 = vpack.c.bf16 %v1449, %v1448
  %v1688 = vpack.c.bf16 %v1451, %v1450
  %v1689 = vpack.c.bf16 %v1453, %v1452
  %v1690 = vpack.c.bf16 %v1455, %v1454
  %v1691 = vpack.c.bf16 %v1457, %v1456
  %v1692 = vpack.c.bf16 %v1459, %v1458
  %v1693 = vpack.c.bf16 %v1461, %v1460
  %v1694 = vpack.c.bf16 %v1463, %v1462
  %v1695 = vpack.c.bf16 %v1465, %v1464
  %v1696 = vpack.c.bf16 %v1467, %v1466
  %v1697 = vpack.c.bf16 %v1469, %v1468
  %v1698 = vpack.c.bf16 %v1471, %v1470
  %v1699 = vpack.c.bf16 %v1473, %v1472
  %v1700 = vpack.c.bf16 %v1475, %v1474
  %v1701 = vpack.c.bf16 %v1477, %v1476
  %v1702 = vpack.c.bf16 %v1479, %v1478
  %v1703 = vpack.c.bf16 %v1481, %v1480
  %v1704 = vpack.c.bf16 %v1483, %v1482
  %v1705 = vpack.c.bf16 %v1485, %v1484
  %v1706 = vpack.c.bf16 %v1487, %v1486
  %v1707 = vpack.c.bf16 %v1489, %v1488
  %v1708 = vpack.c.bf16 %v1491, %v1490
  %v1709 = vpack.c.bf16 %v1493, %v1492
  %v1710 = vpack.c.bf16 %v1495, %v1494
  %v1711 = vpack.c.bf16 %v1497, %v1496
  %v1712 = vpack.c.bf16 %v1499, %v1498
  %v1713 = vpack.c.bf16 %v1501, %v1500
  %v1714 = vpack.c.bf16 %v1503, %v1502
  %v1715 = vpack.c.bf16 %v1505, %v1504
  %v1716 = vpack.c.bf16 %v1507, %v1506
  %v1717 = vpack.c.bf16 %v1509, %v1508
  %v1718 = vpack.c.bf16 %v1511, %v1510
  %v1719 = vpack.c.bf16 %v1513, %v1512
  %v1720 = vpack.c.bf16 %v1515, %v1514
  %v1721 = vpack.c.bf16 %v1517, %v1516
  %v1722 = vpack.c.bf16 %v1519, %v1518
  %v1723 = vpack.c.bf16 %v1521, %v1520
  %v1724 = vpack.c.bf16 %v1523, %v1522
  %v1725 = vpack.c.bf16 %v1525, %v1524
  %v1726 = vpack.c.bf16 %v1527, %v1526
  %v1727 = vpack.c.bf16 %v1529, %v1528
  %v1728 = vpack.c.bf16 %v1531, %v1530
  %v1729 = vpack.c.bf16 %v1533, %v1532
  %v1730 = vpack.c.bf16 %v1535, %v1534
  %v1731 = vpack.c.bf16 %v1537, %v1536
  %v1732 = vpack.c.bf16 %v1539, %v1538
  %v1733 = vpack.c.bf16 %v1541, %v1540
  %v1734 = vpack.c.bf16 %v1543, %v1542
  %v1735 = vpack.c.bf16 %v1545, %v1544
  %v1736 = vpack.c.bf16 %v1547, %v1546
  %v1737 = vpack.c.bf16 %v1549, %v1548
  %v1738 = vpack.c.bf16 %v1551, %v1550
  %v1739 = vpack.c.bf16 %v1553, %v1552
  %v1740 = vpack.c.bf16 %v1555, %v1554
  %v1741 = vpack.c.bf16 %v1557, %v1556
  %v1742 = vpack.c.bf16 %v1559, %v1558
  %v1743 = vpack.c.bf16 %v1561, %v1560
  %v1744 = vpack.c.bf16 %v1563, %v1562
  %v1745 = vpack.c.bf16 %v1565, %v1564
  %v1746 = vpack.c.bf16 %v1567, %v1566
  %v1747 = vpack.c.bf16 %v1569, %v1568
  %v1748 = vpack.c.bf16 %v1571, %v1570
  %v1749 = vpack.c.bf16 %v1573, %v1572
  %v1750 = vpack.c.bf16 %v1575, %v1574
  %v1751 = vpack.c.bf16 %v1577, %v1576
  %v1752 = vpack.c.bf16 %v1579, %v1578
  %v1753 = vpack.c.bf16 %v1581, %v1580
  %v1754 = vpack.c.bf16 %v1583, %v1582
  %v1755 = vpack.c.bf16 %v1585, %v1584
  %v1756 = vpack.c.bf16 %v1587, %v1586
  %v1757 = vpack.c.bf16 %v1589, %v1588
  %v1758 = vpack.c.bf16 %v1591, %v1590
  %v1759 = vpack.c.bf16 %v1593, %v1592
  %v1760 = vpack.c.bf16 %v1595, %v1594
  %v1761 = vpack.c.bf16 %v1597, %v1596
  %v1762 = vpack.c.bf16 %v1599, %v1598
  %v1763 = vpack.c.bf16 %v1601, %v1600
  %v1764 = vpack.c.bf16 %v1603, %v1602
  %v1765 = vpack.c.bf16 %v1605, %v1604
  %v1766 = vpack.c.bf16 %v1607, %v1606
  %v1767 = vpack.c.bf16 %v1609, %v1608
  %v1768 = vpack.c.bf16 %v1611, %v1610
  %v1769 = vpack.c.bf16 %v1613, %v1612
  %v1770 = vpack.c.bf16 %v1615, %v1614
  %v1771 = vpack.c.bf16 %v1617, %v1616
  %v1772 = vpack.c.bf16 %v1619, %v1618
  %v1773 = vpack.c.bf16 %v1621, %v1620
  %v1774 = vpack.c.bf16 %v1623, %v1622
  %v1775 = vpack.c.bf16 %v1625, %v1624
  %v1776 = vpack.c.bf16 %v1627, %v1626
  %v1777 = vpack.c.bf16 %v1629, %v1628
  %v1778 = vpack.c.bf16 %v1631, %v1630
  %v1779 = vpack.c.bf16 %v1633, %v1632
  %v1780 = vpack.c.bf16 %v1635, %v1634
  %v1781 = vpack.c.bf16 %v1637, %v1636
  %v1782 = vpack.c.bf16 %v1639, %v1638
  %v1783 = vpack.c.bf16 %v1641, %v1640
  %v1784 = vpack.c.bf16 %v1643, %v1642
  %v1785 = vpack.c.bf16 %v1645, %v1644
  %v1786 = vpack.c.bf16 %v1647, %v1646
  %v1787 = vpack.c.bf16 %v1649, %v1648
  %v1788 = vpack.c.bf16 %v1651, %v1650
  %v1789 = vpack.c.bf16 %v1653, %v1652
  %v1790 = vpack.c.bf16 %v1655, %v1654
  %v1791 = vpack.c.bf16 %v1657, %v1656
  %v1792 = vpack.c.bf16 %v1659, %v1658
  %v1793 = vpack.c.bf16 %v1661, %v1660
  %v1794 = vpack.c.bf16 %v1663, %v1662
  %v1795 = vpack.c.bf16 %v1665, %v1664
  %v1796 = vpack.c.bf16 %v1667, %v1666
  %v1797 = vpack.c.bf16 %v1669, %v1668
  %v1798 = vpack.c.bf16 %v1671, %v1670
  %v1799 = vpack.c.bf16 %v1673, %v1672
  %v1800 = vpack.c.bf16 %v1675, %v1674
  %v1801 = vld [vmem:[%s3] sm:$0xf]
  %v1803 = vperm.slane %v278, 0
  %vm1805 = vcmask 64512
  %v1807 = vsel %vm1805, %v1676, 0
  %v1810 = vsel %vm1805, %v1677, 0
  %v1813 = vsel %vm1805, %v1678, 0
  %v1816 = vsel %vm1805, %v1679, 0
  %v1819 = vsel %vm1805, %v1680, 0
  %v1822 = vsel %vm1805, %v1681, 0
  %v1825 = vsel %vm1805, %v1682, 0
  %v1828 = vsel %vm1805, %v1683, 0
  %v1831 = vsel %vm1805, %v1684, 0
  %v1834 = vsel %vm1805, %v1685, 0
  %v1837 = vsel %vm1805, %v1686, 0
  %v1840 = vsel %vm1805, %v1687, 0
  %v1843 = vsel %vm1805, %v1688, 0
  %v1846 = vsel %vm1805, %v1689, 0
  %v1849 = vsel %vm1805, %v1690, 0
  %v1852 = vsel %vm1805, %v1691, 0
  %v1855 = vsel %vm1805, %v1692, 0
  %v1858 = vsel %vm1805, %v1693, 0
  %v1861 = vsel %vm1805, %v1694, 0
  %v1864 = vsel %vm1805, %v1695, 0
  %v1867 = vsel %vm1805, %v1696, 0
  %v1870 = vsel %vm1805, %v1697, 0
  %v1873 = vsel %vm1805, %v1698, 0
  %v1876 = vsel %vm1805, %v1699, 0
  %v1879 = vsel %vm1805, %v1700, 0
  %v1882 = vsel %vm1805, %v1701, 0
  %v1885 = vsel %vm1805, %v1702, 0
  %v1888 = vsel %vm1805, %v1703, 0
  %v1891 = vsel %vm1805, %v1704, 0
  %v1894 = vsel %vm1805, %v1705, 0
  %v1897 = vsel %vm1805, %v1706, 0
  %v1900 = vsel %vm1805, %v1707, 0
  %v1903 = vsel %vm1805, %v1708, 0
  %v1906 = vsel %vm1805, %v1709, 0
  %v1909 = vsel %vm1805, %v1710, 0
  %v1912 = vsel %vm1805, %v1711, 0
  %v1915 = vsel %vm1805, %v1712, 0
  %v1918 = vsel %vm1805, %v1713, 0
  %v1921 = vsel %vm1805, %v1714, 0
  %v1924 = vsel %vm1805, %v1715, 0
  %v1927 = vsel %vm1805, %v1716, 0
  %v1930 = vsel %vm1805, %v1717, 0
  %v1933 = vsel %vm1805, %v1718, 0
  %v1936 = vsel %vm1805, %v1719, 0
  %v1939 = vsel %vm1805, %v1720, 0
  %v1942 = vsel %vm1805, %v1721, 0
  %v1945 = vsel %vm1805, %v1722, 0
  %v1948 = vsel %vm1805, %v1723, 0
  %v1951 = vsel %vm1805, %v1724, 0
  %v1954 = vsel %vm1805, %v1725, 0
  %v1957 = vsel %vm1805, %v1726, 0
  %v1960 = vsel %vm1805, %v1727, 0
  %v1963 = vsel %vm1805, %v1728, 0
  %v1966 = vsel %vm1805, %v1729, 0
  %v1969 = vsel %vm1805, %v1730, 0
  %v1972 = vsel %vm1805, %v1731, 0
  %v1975 = vsel %vm1805, %v1732, 0
  %v1978 = vsel %vm1805, %v1733, 0
  %v1981 = vsel %vm1805, %v1734, 0
  %v1984 = vsel %vm1805, %v1735, 0
  %v1987 = vsel %vm1805, %v1736, 0
  %v1990 = vsel %vm1805, %v1737, 0
  %v1993 = vsel %vm1805, %v1738, 0
  %v1996 = vsel %vm1805, %v1739, 0
  %v1999 = vsel %vm1805, %v1740, 0
  %v2002 = vsel %vm1805, %v1741, 0
  %v2005 = vsel %vm1805, %v1742, 0
  %v2008 = vsel %vm1805, %v1743, 0
  %v2011 = vsel %vm1805, %v1744, 0
  %v2014 = vsel %vm1805, %v1745, 0
  %v2017 = vsel %vm1805, %v1746, 0
  %v2020 = vsel %vm1805, %v1747, 0
  %v2023 = vsel %vm1805, %v1748, 0
  %v2026 = vsel %vm1805, %v1749, 0
  %v2029 = vsel %vm1805, %v1750, 0
  %v2032 = vsel %vm1805, %v1751, 0
  %v2035 = vsel %vm1805, %v1752, 0
  %v2038 = vsel %vm1805, %v1753, 0
  %v2041 = vsel %vm1805, %v1754, 0
  %v2044 = vsel %vm1805, %v1755, 0
  %v2047 = vsel %vm1805, %v1756, 0
  %v2050 = vsel %vm1805, %v1757, 0
  %v2053 = vsel %vm1805, %v1758, 0
  %v2056 = vsel %vm1805, %v1759, 0
  %v2059 = vsel %vm1805, %v1760, 0
  %v2062 = vsel %vm1805, %v1761, 0
  %v2065 = vsel %vm1805, %v1762, 0
  %v2068 = vsel %vm1805, %v1763, 0
  %v2071 = vsel %vm1805, %v1764, 0
  %v2074 = vsel %vm1805, %v1765, 0
  %v2077 = vsel %vm1805, %v1766, 0
  %v2080 = vsel %vm1805, %v1767, 0
  %v2083 = vsel %vm1805, %v1768, 0
  %v2086 = vsel %vm1805, %v1769, 0
  %v2089 = vsel %vm1805, %v1770, 0
  %v2092 = vsel %vm1805, %v1771, 0
  %v2095 = vsel %vm1805, %v1772, 0
  %v2098 = vsel %vm1805, %v1773, 0
  %v2101 = vsel %vm1805, %v1774, 0
  %v2104 = vsel %vm1805, %v1775, 0
  %v2107 = vsel %vm1805, %v1776, 0
  %v2110 = vsel %vm1805, %v1777, 0
  %v2113 = vsel %vm1805, %v1778, 0
  %v2116 = vsel %vm1805, %v1779, 0
  %v2119 = vsel %vm1805, %v1780, 0
  %v2122 = vsel %vm1805, %v1781, 0
  %v2125 = vsel %vm1805, %v1782, 0
  %v2128 = vsel %vm1805, %v1783, 0
  %v2131 = vsel %vm1805, %v1784, 0
  %v2134 = vsel %vm1805, %v1785, 0
  %v2137 = vsel %vm1805, %v1786, 0
  %v2140 = vsel %vm1805, %v1787, 0
  %v2143 = vsel %vm1805, %v1788, 0
  %v2146 = vsel %vm1805, %v1789, 0
  %v2149 = vsel %vm1805, %v1790, 0
  %v2152 = vsel %vm1805, %v1791, 0
  %v2155 = vsel %vm1805, %v1792, 0
  %v2158 = vsel %vm1805, %v1793, 0
  %v2161 = vsel %vm1805, %v1794, 0
  %v2164 = vsel %vm1805, %v1795, 0
  %v2167 = vsel %vm1805, %v1796, 0
  %v2170 = vsel %vm1805, %v1797, 0
  %v2173 = vsel %vm1805, %v1798, 0
  %v2176 = vsel %vm1805, %v1799, 0
  %v2179 = vsel %vm1805, %v1800, 0
  %vm2181 = vcmask 1043456
  %v2183 = vsel %vm2181, %v1801, 0
  %2185 = vmatpush.bf16.msra.mxu0 0
  %2186 = vmatpush.bf16.msra.mxu0 0
  %2187 = vmatpush.bf16.msra.mxu0 0
  %2188 = vmatpush.bf16.msra.mxu0 0
  %2189 = vmatpush.bf16.msra.mxu0 0
  %2190 = vmatpush.bf16.msra.mxu0 0
  %2191 = vmatpush.bf16.msra.mxu0 0
  %2192 = vmatpush.bf16.msra.mxu0 %v2183
  %2193 = vmatmul.bf16.gmra.mxu0 %v1807
  %v2194 = vpop.f32.mrf.mxu0
  %v2195 = vadd.f32 %v1803, %v2194
  %v2196 = vpop.f32.mrf.mxu0
  %v2197 = vadd.f32 %v1803, %v2196
  %2198 = vmatmul.bf16.gmra.mxu0 %v1810
  %v2199 = vpop.f32.mrf.mxu0
  %v2200 = vadd.f32 %v1803, %v2199
  %v2201 = vpop.f32.mrf.mxu0
  %v2202 = vadd.f32 %v1803, %v2201
  %2203 = vmatmul.bf16.gmra.mxu0 %v1813
  %v2204 = vpop.f32.mrf.mxu0
  %v2205 = vadd.f32 %v1803, %v2204
  %v2206 = vpop.f32.mrf.mxu0
  %v2207 = vadd.f32 %v1803, %v2206
  %2208 = vmatmul.bf16.gmra.mxu0 %v1816
  %v2209 = vpop.f32.mrf.mxu0
  %v2210 = vadd.f32 %v1803, %v2209
  %v2211 = vpop.f32.mrf.mxu0
  %v2212 = vadd.f32 %v1803, %v2211
  %2213 = vmatmul.bf16.gmra.mxu0 %v1819
  %v2214 = vpop.f32.mrf.mxu0
  %v2215 = vadd.f32 %v1803, %v2214
  %v2216 = vpop.f32.mrf.mxu0
  %v2217 = vadd.f32 %v1803, %v2216
  %2218 = vmatmul.bf16.gmra.mxu0 %v1822
  %v2219 = vpop.f32.mrf.mxu0
  %v2220 = vadd.f32 %v1803, %v2219
  %v2221 = vpop.f32.mrf.mxu0
  %v2222 = vadd.f32 %v1803, %v2221
  %2223 = vmatmul.bf16.gmra.mxu0 %v1825
  %v2224 = vpop.f32.mrf.mxu0
  %v2225 = vadd.f32 %v1803, %v2224
  %v2226 = vpop.f32.mrf.mxu0
  %v2227 = vadd.f32 %v1803, %v2226
  %2228 = vmatmul.bf16.gmra.mxu0 %v1828
  %v2229 = vpop.f32.mrf.mxu0
  %v2230 = vadd.f32 %v1803, %v2229
  %v2231 = vpop.f32.mrf.mxu0
  %v2232 = vadd.f32 %v1803, %v2231
  %2233 = vmatmul.bf16.gmra.mxu0 %v1831
  %v2234 = vpop.f32.mrf.mxu0
  %v2235 = vadd.f32 %v1803, %v2234
  %v2236 = vpop.f32.mrf.mxu0
  %v2237 = vadd.f32 %v1803, %v2236
  %2238 = vmatmul.bf16.gmra.mxu0 %v1834
  %v2239 = vpop.f32.mrf.mxu0
  %v2240 = vadd.f32 %v1803, %v2239
  %v2241 = vpop.f32.mrf.mxu0
  %v2242 = vadd.f32 %v1803, %v2241
  %2243 = vmatmul.bf16.gmra.mxu0 %v1837
  %v2244 = vpop.f32.mrf.mxu0
  %v2245 = vadd.f32 %v1803, %v2244
  %v2246 = vpop.f32.mrf.mxu0
  %v2247 = vadd.f32 %v1803, %v2246
  %2248 = vmatmul.bf16.gmra.mxu0 %v1840
  %v2249 = vpop.f32.mrf.mxu0
  %v2250 = vadd.f32 %v1803, %v2249
  %v2251 = vpop.f32.mrf.mxu0
  %v2252 = vadd.f32 %v1803, %v2251
  %2253 = vmatmul.bf16.gmra.mxu0 %v1843
  %v2254 = vpop.f32.mrf.mxu0
  %v2255 = vadd.f32 %v1803, %v2254
  %v2256 = vpop.f32.mrf.mxu0
  %v2257 = vadd.f32 %v1803, %v2256
  %2258 = vmatmul.bf16.gmra.mxu0 %v1846
  %v2259 = vpop.f32.mrf.mxu0
  %v2260 = vadd.f32 %v1803, %v2259
  %v2261 = vpop.f32.mrf.mxu0
  %v2262 = vadd.f32 %v1803, %v2261
  %2263 = vmatmul.bf16.gmra.mxu0 %v1849
  %v2264 = vpop.f32.mrf.mxu0
  %v2265 = vadd.f32 %v1803, %v2264
  %v2266 = vpop.f32.mrf.mxu0
  %v2267 = vadd.f32 %v1803, %v2266
  %2268 = vmatmul.bf16.gmra.mxu0 %v1852
  %v2269 = vpop.f32.mrf.mxu0
  %v2270 = vadd.f32 %v1803, %v2269
  %v2271 = vpop.f32.mrf.mxu0
  %v2272 = vadd.f32 %v1803, %v2271
  %2273 = vmatmul.bf16.gmra.mxu0 %v1855
  %v2274 = vpop.f32.mrf.mxu0
  %v2275 = vadd.f32 %v1803, %v2274
  %v2276 = vpop.f32.mrf.mxu0
  %v2277 = vadd.f32 %v1803, %v2276
  %2278 = vmatmul.bf16.gmra.mxu0 %v1858
  %v2279 = vpop.f32.mrf.mxu0
  %v2280 = vadd.f32 %v1803, %v2279
  %v2281 = vpop.f32.mrf.mxu0
  %v2282 = vadd.f32 %v1803, %v2281
  %2283 = vmatmul.bf16.gmra.mxu0 %v1861
  %v2284 = vpop.f32.mrf.mxu0
  %v2285 = vadd.f32 %v1803, %v2284
  %v2286 = vpop.f32.mrf.mxu0
  %v2287 = vadd.f32 %v1803, %v2286
  %2288 = vmatmul.bf16.gmra.mxu0 %v1864
  %v2289 = vpop.f32.mrf.mxu0
  %v2290 = vadd.f32 %v1803, %v2289
  %v2291 = vpop.f32.mrf.mxu0
  %v2292 = vadd.f32 %v1803, %v2291
  %2293 = vmatmul.bf16.gmra.mxu0 %v1867
  %v2294 = vpop.f32.mrf.mxu0
  %v2295 = vadd.f32 %v1803, %v2294
  %v2296 = vpop.f32.mrf.mxu0
  %v2297 = vadd.f32 %v1803, %v2296
  %2298 = vmatmul.bf16.gmra.mxu0 %v1870
  %v2299 = vpop.f32.mrf.mxu0
  %v2300 = vadd.f32 %v1803, %v2299
  %v2301 = vpop.f32.mrf.mxu0
  %v2302 = vadd.f32 %v1803, %v2301
  %2303 = vmatmul.bf16.gmra.mxu0 %v1873
  %v2304 = vpop.f32.mrf.mxu0
  %v2305 = vadd.f32 %v1803, %v2304
  %v2306 = vpop.f32.mrf.mxu0
  %v2307 = vadd.f32 %v1803, %v2306
  %2308 = vmatmul.bf16.gmra.mxu0 %v1876
  %v2309 = vpop.f32.mrf.mxu0
  %v2310 = vadd.f32 %v1803, %v2309
  %v2311 = vpop.f32.mrf.mxu0
  %v2312 = vadd.f32 %v1803, %v2311
  %2313 = vmatmul.bf16.gmra.mxu0 %v1879
  %v2314 = vpop.f32.mrf.mxu0
  %v2315 = vadd.f32 %v1803, %v2314
  %v2316 = vpop.f32.mrf.mxu0
  %v2317 = vadd.f32 %v1803, %v2316
  %2318 = vmatmul.bf16.gmra.mxu0 %v1882
  %v2319 = vpop.f32.mrf.mxu0
  %v2320 = vadd.f32 %v1803, %v2319
  %v2321 = vpop.f32.mrf.mxu0
  %v2322 = vadd.f32 %v1803, %v2321
  %2323 = vmatmul.bf16.gmra.mxu0 %v1885
  %v2324 = vpop.f32.mrf.mxu0
  %v2325 = vadd.f32 %v1803, %v2324
  %v2326 = vpop.f32.mrf.mxu0
  %v2327 = vadd.f32 %v1803, %v2326
  %2328 = vmatmul.bf16.gmra.mxu0 %v1888
  %v2329 = vpop.f32.mrf.mxu0
  %v2330 = vadd.f32 %v1803, %v2329
  %v2331 = vpop.f32.mrf.mxu0
  %v2332 = vadd.f32 %v1803, %v2331
  %2333 = vmatmul.bf16.gmra.mxu0 %v1891
  %v2334 = vpop.f32.mrf.mxu0
  %v2335 = vadd.f32 %v1803, %v2334
  %v2336 = vpop.f32.mrf.mxu0
  %v2337 = vadd.f32 %v1803, %v2336
  %2338 = vmatmul.bf16.gmra.mxu0 %v1894
  %v2339 = vpop.f32.mrf.mxu0
  %v2340 = vadd.f32 %v1803, %v2339
  %v2341 = vpop.f32.mrf.mxu0
  %v2342 = vadd.f32 %v1803, %v2341
  %2343 = vmatmul.bf16.gmra.mxu0 %v1897
  %v2344 = vpop.f32.mrf.mxu0
  %v2345 = vadd.f32 %v1803, %v2344
  %v2346 = vpop.f32.mrf.mxu0
  %v2347 = vadd.f32 %v1803, %v2346
  %2348 = vmatmul.bf16.gmra.mxu0 %v1900
  %v2349 = vpop.f32.mrf.mxu0
  %v2350 = vadd.f32 %v1803, %v2349
  %v2351 = vpop.f32.mrf.mxu0
  %v2352 = vadd.f32 %v1803, %v2351
  %2353 = vmatmul.bf16.gmra.mxu0 %v1903
  %v2354 = vpop.f32.mrf.mxu0
  %v2355 = vadd.f32 %v1803, %v2354
  %v2356 = vpop.f32.mrf.mxu0
  %v2357 = vadd.f32 %v1803, %v2356
  %2358 = vmatmul.bf16.gmra.mxu0 %v1906
  %v2359 = vpop.f32.mrf.mxu0
  %v2360 = vadd.f32 %v1803, %v2359
  %v2361 = vpop.f32.mrf.mxu0
  %v2362 = vadd.f32 %v1803, %v2361
  %2363 = vmatmul.bf16.gmra.mxu0 %v1909
  %v2364 = vpop.f32.mrf.mxu0
  %v2365 = vadd.f32 %v1803, %v2364
  %v2366 = vpop.f32.mrf.mxu0
  %v2367 = vadd.f32 %v1803, %v2366
  %2368 = vmatmul.bf16.gmra.mxu0 %v1912
  %v2369 = vpop.f32.mrf.mxu0
  %v2370 = vadd.f32 %v1803, %v2369
  %v2371 = vpop.f32.mrf.mxu0
  %v2372 = vadd.f32 %v1803, %v2371
  %2373 = vmatmul.bf16.gmra.mxu0 %v1915
  %v2374 = vpop.f32.mrf.mxu0
  %v2375 = vadd.f32 %v1803, %v2374
  %v2376 = vpop.f32.mrf.mxu0
  %v2377 = vadd.f32 %v1803, %v2376
  %2378 = vmatmul.bf16.gmra.mxu0 %v1918
  %v2379 = vpop.f32.mrf.mxu0
  %v2380 = vadd.f32 %v1803, %v2379
  %v2381 = vpop.f32.mrf.mxu0
  %v2382 = vadd.f32 %v1803, %v2381
  %2383 = vmatmul.bf16.gmra.mxu0 %v1921
  %v2384 = vpop.f32.mrf.mxu0
  %v2385 = vadd.f32 %v1803, %v2384
  %v2386 = vpop.f32.mrf.mxu0
  %v2387 = vadd.f32 %v1803, %v2386
  %2388 = vmatmul.bf16.gmra.mxu0 %v1924
  %v2389 = vpop.f32.mrf.mxu0
  %v2390 = vadd.f32 %v1803, %v2389
  %v2391 = vpop.f32.mrf.mxu0
  %v2392 = vadd.f32 %v1803, %v2391
  %2393 = vmatmul.bf16.gmra.mxu0 %v1927
  %v2394 = vpop.f32.mrf.mxu0
  %v2395 = vadd.f32 %v1803, %v2394
  %v2396 = vpop.f32.mrf.mxu0
  %v2397 = vadd.f32 %v1803, %v2396
  %2398 = vmatmul.bf16.gmra.mxu0 %v1930
  %v2399 = vpop.f32.mrf.mxu0
  %v2400 = vadd.f32 %v1803, %v2399
  %v2401 = vpop.f32.mrf.mxu0
  %v2402 = vadd.f32 %v1803, %v2401
  %2403 = vmatmul.bf16.gmra.mxu0 %v1933
  %v2404 = vpop.f32.mrf.mxu0
  %v2405 = vadd.f32 %v1803, %v2404
  %v2406 = vpop.f32.mrf.mxu0
  %v2407 = vadd.f32 %v1803, %v2406
  %2408 = vmatmul.bf16.gmra.mxu0 %v1936
  %v2409 = vpop.f32.mrf.mxu0
  %v2410 = vadd.f32 %v1803, %v2409
  %v2411 = vpop.f32.mrf.mxu0
  %v2412 = vadd.f32 %v1803, %v2411
  %2413 = vmatmul.bf16.gmra.mxu0 %v1939
  %v2414 = vpop.f32.mrf.mxu0
  %v2415 = vadd.f32 %v1803, %v2414
  %v2416 = vpop.f32.mrf.mxu0
  %v2417 = vadd.f32 %v1803, %v2416
  %2418 = vmatmul.bf16.gmra.mxu0 %v1942
  %v2419 = vpop.f32.mrf.mxu0
  %v2420 = vadd.f32 %v1803, %v2419
  %v2421 = vpop.f32.mrf.mxu0
  %v2422 = vadd.f32 %v1803, %v2421
  %2423 = vmatmul.bf16.gmra.mxu0 %v1945
  %v2424 = vpop.f32.mrf.mxu0
  %v2425 = vadd.f32 %v1803, %v2424
  %v2426 = vpop.f32.mrf.mxu0
  %v2427 = vadd.f32 %v1803, %v2426
  %2428 = vmatmul.bf16.gmra.mxu0 %v1948
  %v2429 = vpop.f32.mrf.mxu0
  %v2430 = vadd.f32 %v1803, %v2429
  %v2431 = vpop.f32.mrf.mxu0
  %v2432 = vadd.f32 %v1803, %v2431
  %2433 = vmatmul.bf16.gmra.mxu0 %v1951
  %v2434 = vpop.f32.mrf.mxu0
  %v2435 = vadd.f32 %v1803, %v2434
  %v2436 = vpop.f32.mrf.mxu0
  %v2437 = vadd.f32 %v1803, %v2436
  %2438 = vmatmul.bf16.gmra.mxu0 %v1954
  %v2439 = vpop.f32.mrf.mxu0
  %v2440 = vadd.f32 %v1803, %v2439
  %v2441 = vpop.f32.mrf.mxu0
  %v2442 = vadd.f32 %v1803, %v2441
  %2443 = vmatmul.bf16.gmra.mxu0 %v1957
  %v2444 = vpop.f32.mrf.mxu0
  %v2445 = vadd.f32 %v1803, %v2444
  %v2446 = vpop.f32.mrf.mxu0
  %v2447 = vadd.f32 %v1803, %v2446
  %2448 = vmatmul.bf16.gmra.mxu0 %v1960
  %v2449 = vpop.f32.mrf.mxu0
  %v2450 = vadd.f32 %v1803, %v2449
  %v2451 = vpop.f32.mrf.mxu0
  %v2452 = vadd.f32 %v1803, %v2451
  %2453 = vmatmul.bf16.gmra.mxu0 %v1963
  %v2454 = vpop.f32.mrf.mxu0
  %v2455 = vadd.f32 %v1803, %v2454
  %v2456 = vpop.f32.mrf.mxu0
  %v2457 = vadd.f32 %v1803, %v2456
  %2458 = vmatmul.bf16.gmra.mxu0 %v1966
  %v2459 = vpop.f32.mrf.mxu0
  %v2460 = vadd.f32 %v1803, %v2459
  %v2461 = vpop.f32.mrf.mxu0
  %v2462 = vadd.f32 %v1803, %v2461
  %2463 = vmatmul.bf16.gmra.mxu0 %v1969
  %v2464 = vpop.f32.mrf.mxu0
  %v2465 = vadd.f32 %v1803, %v2464
  %v2466 = vpop.f32.mrf.mxu0
  %v2467 = vadd.f32 %v1803, %v2466
  %2468 = vmatmul.bf16.gmra.mxu0 %v1972
  %v2469 = vpop.f32.mrf.mxu0
  %v2470 = vadd.f32 %v1803, %v2469
  %v2471 = vpop.f32.mrf.mxu0
  %v2472 = vadd.f32 %v1803, %v2471
  %2473 = vmatmul.bf16.gmra.mxu0 %v1975
  %v2474 = vpop.f32.mrf.mxu0
  %v2475 = vadd.f32 %v1803, %v2474
  %v2476 = vpop.f32.mrf.mxu0
  %v2477 = vadd.f32 %v1803, %v2476
  %2478 = vmatmul.bf16.gmra.mxu0 %v1978
  %v2479 = vpop.f32.mrf.mxu0
  %v2480 = vadd.f32 %v1803, %v2479
  %v2481 = vpop.f32.mrf.mxu0
  %v2482 = vadd.f32 %v1803, %v2481
  %2483 = vmatmul.bf16.gmra.mxu0 %v1981
  %v2484 = vpop.f32.mrf.mxu0
  %v2485 = vadd.f32 %v1803, %v2484
  %v2486 = vpop.f32.mrf.mxu0
  %v2487 = vadd.f32 %v1803, %v2486
  %2488 = vmatmul.bf16.gmra.mxu0 %v1984
  %v2489 = vpop.f32.mrf.mxu0
  %v2490 = vadd.f32 %v1803, %v2489
  %v2491 = vpop.f32.mrf.mxu0
  %v2492 = vadd.f32 %v1803, %v2491
  %2493 = vmatmul.bf16.gmra.mxu0 %v1987
  %v2494 = vpop.f32.mrf.mxu0
  %v2495 = vadd.f32 %v1803, %v2494
  %v2496 = vpop.f32.mrf.mxu0
  %v2497 = vadd.f32 %v1803, %v2496
  %2498 = vmatmul.bf16.gmra.mxu0 %v1990
  %v2499 = vpop.f32.mrf.mxu0
  %v2500 = vadd.f32 %v1803, %v2499
  %v2501 = vpop.f32.mrf.mxu0
  %v2502 = vadd.f32 %v1803, %v2501
  %2503 = vmatmul.bf16.gmra.mxu0 %v1993
  %v2504 = vpop.f32.mrf.mxu0
  %v2505 = vadd.f32 %v1803, %v2504
  %v2506 = vpop.f32.mrf.mxu0
  %v2507 = vadd.f32 %v1803, %v2506
  %2508 = vmatmul.bf16.gmra.mxu0 %v1996
  %v2509 = vpop.f32.mrf.mxu0
  %v2510 = vadd.f32 %v1803, %v2509
  %v2511 = vpop.f32.mrf.mxu0
  %v2512 = vadd.f32 %v1803, %v2511
  %2513 = vmatmul.bf16.gmra.mxu0 %v1999
  %v2514 = vpop.f32.mrf.mxu0
  %v2515 = vadd.f32 %v1803, %v2514
  %v2516 = vpop.f32.mrf.mxu0
  %v2517 = vadd.f32 %v1803, %v2516
  %2518 = vmatmul.bf16.gmra.mxu0 %v2002
  %v2519 = vpop.f32.mrf.mxu0
  %v2520 = vadd.f32 %v1803, %v2519
  %v2521 = vpop.f32.mrf.mxu0
  %v2522 = vadd.f32 %v1803, %v2521
  %2523 = vmatmul.bf16.gmra.mxu0 %v2005
  %v2524 = vpop.f32.mrf.mxu0
  %v2525 = vadd.f32 %v1803, %v2524
  %v2526 = vpop.f32.mrf.mxu0
  %v2527 = vadd.f32 %v1803, %v2526
  %2528 = vmatmul.bf16.gmra.mxu0 %v2008
  %v2529 = vpop.f32.mrf.mxu0
  %v2530 = vadd.f32 %v1803, %v2529
  %v2531 = vpop.f32.mrf.mxu0
  %v2532 = vadd.f32 %v1803, %v2531
  %2533 = vmatmul.bf16.gmra.mxu0 %v2011
  %v2534 = vpop.f32.mrf.mxu0
  %v2535 = vadd.f32 %v1803, %v2534
  %v2536 = vpop.f32.mrf.mxu0
  %v2537 = vadd.f32 %v1803, %v2536
  %2538 = vmatmul.bf16.gmra.mxu0 %v2014
  %v2539 = vpop.f32.mrf.mxu0
  %v2540 = vadd.f32 %v1803, %v2539
  %v2541 = vpop.f32.mrf.mxu0
  %v2542 = vadd.f32 %v1803, %v2541
  %2543 = vmatmul.bf16.gmra.mxu0 %v2017
  %v2544 = vpop.f32.mrf.mxu0
  %v2545 = vadd.f32 %v1803, %v2544
  %v2546 = vpop.f32.mrf.mxu0
  %v2547 = vadd.f32 %v1803, %v2546
  %2548 = vmatmul.bf16.gmra.mxu0 %v2020
  %v2549 = vpop.f32.mrf.mxu0
  %v2550 = vadd.f32 %v1803, %v2549
  %v2551 = vpop.f32.mrf.mxu0
  %v2552 = vadd.f32 %v1803, %v2551
  %2553 = vmatmul.bf16.gmra.mxu0 %v2023
  %v2554 = vpop.f32.mrf.mxu0
  %v2555 = vadd.f32 %v1803, %v2554
  %v2556 = vpop.f32.mrf.mxu0
  %v2557 = vadd.f32 %v1803, %v2556
  %2558 = vmatmul.bf16.gmra.mxu0 %v2026
  %v2559 = vpop.f32.mrf.mxu0
  %v2560 = vadd.f32 %v1803, %v2559
  %v2561 = vpop.f32.mrf.mxu0
  %v2562 = vadd.f32 %v1803, %v2561
  %2563 = vmatmul.bf16.gmra.mxu0 %v2029
  %v2564 = vpop.f32.mrf.mxu0
  %v2565 = vadd.f32 %v1803, %v2564
  %v2566 = vpop.f32.mrf.mxu0
  %v2567 = vadd.f32 %v1803, %v2566
  %2568 = vmatmul.bf16.gmra.mxu0 %v2032
  %v2569 = vpop.f32.mrf.mxu0
  %v2570 = vadd.f32 %v1803, %v2569
  %v2571 = vpop.f32.mrf.mxu0
  %v2572 = vadd.f32 %v1803, %v2571
  %2573 = vmatmul.bf16.gmra.mxu0 %v2035
  %v2574 = vpop.f32.mrf.mxu0
  %v2575 = vadd.f32 %v1803, %v2574
  %v2576 = vpop.f32.mrf.mxu0
  %v2577 = vadd.f32 %v1803, %v2576
  %2578 = vmatmul.bf16.gmra.mxu0 %v2038
  %v2579 = vpop.f32.mrf.mxu0
  %v2580 = vadd.f32 %v1803, %v2579
  %v2581 = vpop.f32.mrf.mxu0
  %v2582 = vadd.f32 %v1803, %v2581
  %2583 = vmatmul.bf16.gmra.mxu0 %v2041
  %v2584 = vpop.f32.mrf.mxu0
  %v2585 = vadd.f32 %v1803, %v2584
  %v2586 = vpop.f32.mrf.mxu0
  %v2587 = vadd.f32 %v1803, %v2586
  %2588 = vmatmul.bf16.gmra.mxu0 %v2044
  %v2589 = vpop.f32.mrf.mxu0
  %v2590 = vadd.f32 %v1803, %v2589
  %v2591 = vpop.f32.mrf.mxu0
  %v2592 = vadd.f32 %v1803, %v2591
  %2593 = vmatmul.bf16.gmra.mxu0 %v2047
  %v2594 = vpop.f32.mrf.mxu0
  %v2595 = vadd.f32 %v1803, %v2594
  %v2596 = vpop.f32.mrf.mxu0
  %v2597 = vadd.f32 %v1803, %v2596
  %2598 = vmatmul.bf16.gmra.mxu0 %v2050
  %v2599 = vpop.f32.mrf.mxu0
  %v2600 = vadd.f32 %v1803, %v2599
  %v2601 = vpop.f32.mrf.mxu0
  %v2602 = vadd.f32 %v1803, %v2601
  %2603 = vmatmul.bf16.gmra.mxu0 %v2053
  %v2604 = vpop.f32.mrf.mxu0
  %v2605 = vadd.f32 %v1803, %v2604
  %v2606 = vpop.f32.mrf.mxu0
  %v2607 = vadd.f32 %v1803, %v2606
  %2608 = vmatmul.bf16.gmra.mxu0 %v2056
  %v2609 = vpop.f32.mrf.mxu0
  %v2610 = vadd.f32 %v1803, %v2609
  %v2611 = vpop.f32.mrf.mxu0
  %v2612 = vadd.f32 %v1803, %v2611
  %2613 = vmatmul.bf16.gmra.mxu0 %v2059
  %v2614 = vpop.f32.mrf.mxu0
  %v2615 = vadd.f32 %v1803, %v2614
  %v2616 = vpop.f32.mrf.mxu0
  %v2617 = vadd.f32 %v1803, %v2616
  %2618 = vmatmul.bf16.gmra.mxu0 %v2062
  %v2619 = vpop.f32.mrf.mxu0
  %v2620 = vadd.f32 %v1803, %v2619
  %v2621 = vpop.f32.mrf.mxu0
  %v2622 = vadd.f32 %v1803, %v2621
  %2623 = vmatmul.bf16.gmra.mxu0 %v2065
  %v2624 = vpop.f32.mrf.mxu0
  %v2625 = vadd.f32 %v1803, %v2624
  %v2626 = vpop.f32.mrf.mxu0
  %v2627 = vadd.f32 %v1803, %v2626
  %2628 = vmatmul.bf16.gmra.mxu0 %v2068
  %v2629 = vpop.f32.mrf.mxu0
  %v2630 = vadd.f32 %v1803, %v2629
  %v2631 = vpop.f32.mrf.mxu0
  %v2632 = vadd.f32 %v1803, %v2631
  %2633 = vmatmul.bf16.gmra.mxu0 %v2071
  %v2634 = vpop.f32.mrf.mxu0
  %v2635 = vadd.f32 %v1803, %v2634
  %v2636 = vpop.f32.mrf.mxu0
  %v2637 = vadd.f32 %v1803, %v2636
  %2638 = vmatmul.bf16.gmra.mxu0 %v2074
  %v2639 = vpop.f32.mrf.mxu0
  %v2640 = vadd.f32 %v1803, %v2639
  %v2641 = vpop.f32.mrf.mxu0
  %v2642 = vadd.f32 %v1803, %v2641
  %2643 = vmatmul.bf16.gmra.mxu0 %v2077
  %v2644 = vpop.f32.mrf.mxu0
  %v2645 = vadd.f32 %v1803, %v2644
  %v2646 = vpop.f32.mrf.mxu0
  %v2647 = vadd.f32 %v1803, %v2646
  %2648 = vmatmul.bf16.gmra.mxu0 %v2080
  %v2649 = vpop.f32.mrf.mxu0
  %v2650 = vadd.f32 %v1803, %v2649
  %v2651 = vpop.f32.mrf.mxu0
  %v2652 = vadd.f32 %v1803, %v2651
  %2653 = vmatmul.bf16.gmra.mxu0 %v2083
  %v2654 = vpop.f32.mrf.mxu0
  %v2655 = vadd.f32 %v1803, %v2654
  %v2656 = vpop.f32.mrf.mxu0
  %v2657 = vadd.f32 %v1803, %v2656
  %2658 = vmatmul.bf16.gmra.mxu0 %v2086
  %v2659 = vpop.f32.mrf.mxu0
  %v2660 = vadd.f32 %v1803, %v2659
  %v2661 = vpop.f32.mrf.mxu0
  %v2662 = vadd.f32 %v1803, %v2661
  %2663 = vmatmul.bf16.gmra.mxu0 %v2089
  %v2664 = vpop.f32.mrf.mxu0
  %v2665 = vadd.f32 %v1803, %v2664
  %v2666 = vpop.f32.mrf.mxu0
  %v2667 = vadd.f32 %v1803, %v2666
  %2668 = vmatmul.bf16.gmra.mxu0 %v2092
  %v2669 = vpop.f32.mrf.mxu0
  %v2670 = vadd.f32 %v1803, %v2669
  %v2671 = vpop.f32.mrf.mxu0
  %v2672 = vadd.f32 %v1803, %v2671
  %2673 = vmatmul.bf16.gmra.mxu0 %v2095
  %v2674 = vpop.f32.mrf.mxu0
  %v2675 = vadd.f32 %v1803, %v2674
  %v2676 = vpop.f32.mrf.mxu0
  %v2677 = vadd.f32 %v1803, %v2676
  %2678 = vmatmul.bf16.gmra.mxu0 %v2098
  %v2679 = vpop.f32.mrf.mxu0
  %v2680 = vadd.f32 %v1803, %v2679
  %v2681 = vpop.f32.mrf.mxu0
  %v2682 = vadd.f32 %v1803, %v2681
  %2683 = vmatmul.bf16.gmra.mxu0 %v2101
  %v2684 = vpop.f32.mrf.mxu0
  %v2685 = vadd.f32 %v1803, %v2684
  %v2686 = vpop.f32.mrf.mxu0
  %v2687 = vadd.f32 %v1803, %v2686
  %2688 = vmatmul.bf16.gmra.mxu0 %v2104
  %v2689 = vpop.f32.mrf.mxu0
  %v2690 = vadd.f32 %v1803, %v2689
  %v2691 = vpop.f32.mrf.mxu0
  %v2692 = vadd.f32 %v1803, %v2691
  %2693 = vmatmul.bf16.gmra.mxu0 %v2107
  %v2694 = vpop.f32.mrf.mxu0
  %v2695 = vadd.f32 %v1803, %v2694
  %v2696 = vpop.f32.mrf.mxu0
  %v2697 = vadd.f32 %v1803, %v2696
  %2698 = vmatmul.bf16.gmra.mxu0 %v2110
  %v2699 = vpop.f32.mrf.mxu0
  %v2700 = vadd.f32 %v1803, %v2699
  %v2701 = vpop.f32.mrf.mxu0
  %v2702 = vadd.f32 %v1803, %v2701
  %2703 = vmatmul.bf16.gmra.mxu0 %v2113
  %v2704 = vpop.f32.mrf.mxu0
  %v2705 = vadd.f32 %v1803, %v2704
  %v2706 = vpop.f32.mrf.mxu0
  %v2707 = vadd.f32 %v1803, %v2706
  %2708 = vmatmul.bf16.gmra.mxu0 %v2116
  %v2709 = vpop.f32.mrf.mxu0
  %v2710 = vadd.f32 %v1803, %v2709
  %v2711 = vpop.f32.mrf.mxu0
  %v2712 = vadd.f32 %v1803, %v2711
  %2713 = vmatmul.bf16.gmra.mxu0 %v2119
  %v2714 = vpop.f32.mrf.mxu0
  %v2715 = vadd.f32 %v1803, %v2714
  %v2716 = vpop.f32.mrf.mxu0
  %v2717 = vadd.f32 %v1803, %v2716
  %2718 = vmatmul.bf16.gmra.mxu0 %v2122
  %v2719 = vpop.f32.mrf.mxu0
  %v2720 = vadd.f32 %v1803, %v2719
  %v2721 = vpop.f32.mrf.mxu0
  %v2722 = vadd.f32 %v1803, %v2721
  %2723 = vmatmul.bf16.gmra.mxu0 %v2125
  %v2724 = vpop.f32.mrf.mxu0
  %v2725 = vadd.f32 %v1803, %v2724
  %v2726 = vpop.f32.mrf.mxu0
  %v2727 = vadd.f32 %v1803, %v2726
  %2728 = vmatmul.bf16.gmra.mxu0 %v2128
  %v2729 = vpop.f32.mrf.mxu0
  %v2730 = vadd.f32 %v1803, %v2729
  %v2731 = vpop.f32.mrf.mxu0
  %v2732 = vadd.f32 %v1803, %v2731
  %2733 = vmatmul.bf16.gmra.mxu0 %v2131
  %v2734 = vpop.f32.mrf.mxu0
  %v2735 = vadd.f32 %v1803, %v2734
  %v2736 = vpop.f32.mrf.mxu0
  %v2737 = vadd.f32 %v1803, %v2736
  %2738 = vmatmul.bf16.gmra.mxu0 %v2134
  %v2739 = vpop.f32.mrf.mxu0
  %v2740 = vadd.f32 %v1803, %v2739
  %v2741 = vpop.f32.mrf.mxu0
  %v2742 = vadd.f32 %v1803, %v2741
  %2743 = vmatmul.bf16.gmra.mxu0 %v2137
  %v2744 = vpop.f32.mrf.mxu0
  %v2745 = vadd.f32 %v1803, %v2744
  %v2746 = vpop.f32.mrf.mxu0
  %v2747 = vadd.f32 %v1803, %v2746
  %2748 = vmatmul.bf16.gmra.mxu0 %v2140
  %v2749 = vpop.f32.mrf.mxu0
  %v2750 = vadd.f32 %v1803, %v2749
  %v2751 = vpop.f32.mrf.mxu0
  %v2752 = vadd.f32 %v1803, %v2751
  %2753 = vmatmul.bf16.gmra.mxu0 %v2143
  %v2754 = vpop.f32.mrf.mxu0
  %v2755 = vadd.f32 %v1803, %v2754
  %v2756 = vpop.f32.mrf.mxu0
  %v2757 = vadd.f32 %v1803, %v2756
  %2758 = vmatmul.bf16.gmra.mxu0 %v2146
  %v2759 = vpop.f32.mrf.mxu0
  %v2760 = vadd.f32 %v1803, %v2759
  %v2761 = vpop.f32.mrf.mxu0
  %v2762 = vadd.f32 %v1803, %v2761
  %2763 = vmatmul.bf16.gmra.mxu0 %v2149
  %v2764 = vpop.f32.mrf.mxu0
  %v2765 = vadd.f32 %v1803, %v2764
  %v2766 = vpop.f32.mrf.mxu0
  %v2767 = vadd.f32 %v1803, %v2766
  %2768 = vmatmul.bf16.gmra.mxu0 %v2152
  %v2769 = vpop.f32.mrf.mxu0
  %v2770 = vadd.f32 %v1803, %v2769
  %v2771 = vpop.f32.mrf.mxu0
  %v2772 = vadd.f32 %v1803, %v2771
  %2773 = vmatmul.bf16.gmra.mxu0 %v2155
  %v2774 = vpop.f32.mrf.mxu0
  %v2775 = vadd.f32 %v1803, %v2774
  %v2776 = vpop.f32.mrf.mxu0
  %v2777 = vadd.f32 %v1803, %v2776
  %2778 = vmatmul.bf16.gmra.mxu0 %v2158
  %v2779 = vpop.f32.mrf.mxu0
  %v2780 = vadd.f32 %v1803, %v2779
  %v2781 = vpop.f32.mrf.mxu0
  %v2782 = vadd.f32 %v1803, %v2781
  %2783 = vmatmul.bf16.gmra.mxu0 %v2161
  %v2784 = vpop.f32.mrf.mxu0
  %v2785 = vadd.f32 %v1803, %v2784
  %v2786 = vpop.f32.mrf.mxu0
  %v2787 = vadd.f32 %v1803, %v2786
  %2788 = vmatmul.bf16.gmra.mxu0 %v2164
  %v2789 = vpop.f32.mrf.mxu0
  %v2790 = vadd.f32 %v1803, %v2789
  %v2791 = vpop.f32.mrf.mxu0
  %v2792 = vadd.f32 %v1803, %v2791
  %2793 = vmatmul.bf16.gmra.mxu0 %v2167
  %v2794 = vpop.f32.mrf.mxu0
  %v2795 = vadd.f32 %v1803, %v2794
  %v2796 = vpop.f32.mrf.mxu0
  %v2797 = vadd.f32 %v1803, %v2796
  %2798 = vmatmul.bf16.gmra.mxu0 %v2170
  %v2799 = vpop.f32.mrf.mxu0
  %v2800 = vadd.f32 %v1803, %v2799
  %v2801 = vpop.f32.mrf.mxu0
  %v2802 = vadd.f32 %v1803, %v2801
  %2803 = vmatmul.bf16.gmra.mxu0 %v2173
  %v2804 = vpop.f32.mrf.mxu0
  %v2805 = vadd.f32 %v1803, %v2804
  %v2806 = vpop.f32.mrf.mxu0
  %v2807 = vadd.f32 %v1803, %v2806
  %2808 = vmatmul.bf16.gmra.mxu0 %v2176
  %v2809 = vpop.f32.mrf.mxu0
  %v2810 = vadd.f32 %v1803, %v2809
  %v2811 = vpop.f32.mrf.mxu0
  %v2812 = vadd.f32 %v1803, %v2811
  %2813 = vmatmul.bf16.gmra.mxu0 %v2179
  %v2814 = vpop.f32.mrf.mxu0
  %v2815 = vadd.f32 %v1803, %v2814
  %v2816 = vpop.f32.mrf.mxu0
  %v2817 = vadd.f32 %v1803, %v2816
  %2818 = vdwg.mxu0
  %v2819 = vmax.f32 %v2195, 0.0
  %v2820 = vmax.f32 %v2197, 0.0
  %v2821 = vmax.f32 %v2200, 0.0
  %v2822 = vmax.f32 %v2202, 0.0
  %v2823 = vmax.f32 %v2205, 0.0
  %v2824 = vmax.f32 %v2207, 0.0
  %v2825 = vmax.f32 %v2210, 0.0
  %v2826 = vmax.f32 %v2212, 0.0
  %v2827 = vmax.f32 %v2215, 0.0
  %v2828 = vmax.f32 %v2217, 0.0
  %v2829 = vmax.f32 %v2220, 0.0
  %v2830 = vmax.f32 %v2222, 0.0
  %v2831 = vmax.f32 %v2225, 0.0
  %v2832 = vmax.f32 %v2227, 0.0
  %v2833 = vmax.f32 %v2230, 0.0
  %v2834 = vmax.f32 %v2232, 0.0
  %v2835 = vmax.f32 %v2235, 0.0
  %v2836 = vmax.f32 %v2237, 0.0
  %v2837 = vmax.f32 %v2240, 0.0
  %v2838 = vmax.f32 %v2242, 0.0
  %v2839 = vmax.f32 %v2245, 0.0
  %v2840 = vmax.f32 %v2247, 0.0
  %v2841 = vmax.f32 %v2250, 0.0
  %v2842 = vmax.f32 %v2252, 0.0
  %v2843 = vmax.f32 %v2255, 0.0
  %v2844 = vmax.f32 %v2257, 0.0
  %v2845 = vmax.f32 %v2260, 0.0
  %v2846 = vmax.f32 %v2262, 0.0
  %v2847 = vmax.f32 %v2265, 0.0
  %v2848 = vmax.f32 %v2267, 0.0
  %v2849 = vmax.f32 %v2270, 0.0
  %v2850 = vmax.f32 %v2272, 0.0
  %v2851 = vmax.f32 %v2275, 0.0
  %v2852 = vmax.f32 %v2277, 0.0
  %v2853 = vmax.f32 %v2280, 0.0
  %v2854 = vmax.f32 %v2282, 0.0
  %v2855 = vmax.f32 %v2285, 0.0
  %v2856 = vmax.f32 %v2287, 0.0
  %v2857 = vmax.f32 %v2290, 0.0
  %v2858 = vmax.f32 %v2292, 0.0
  %v2859 = vmax.f32 %v2295, 0.0
  %v2860 = vmax.f32 %v2297, 0.0
  %v2861 = vmax.f32 %v2300, 0.0
  %v2862 = vmax.f32 %v2302, 0.0
  %v2863 = vmax.f32 %v2305, 0.0
  %v2864 = vmax.f32 %v2307, 0.0
  %v2865 = vmax.f32 %v2310, 0.0
  %v2866 = vmax.f32 %v2312, 0.0
  %v2867 = vmax.f32 %v2315, 0.0
  %v2868 = vmax.f32 %v2317, 0.0
  %v2869 = vmax.f32 %v2320, 0.0
  %v2870 = vmax.f32 %v2322, 0.0
  %v2871 = vmax.f32 %v2325, 0.0
  %v2872 = vmax.f32 %v2327, 0.0
  %v2873 = vmax.f32 %v2330, 0.0
  %v2874 = vmax.f32 %v2332, 0.0
  %v2875 = vmax.f32 %v2335, 0.0
  %v2876 = vmax.f32 %v2337, 0.0
  %v2877 = vmax.f32 %v2340, 0.0
  %v2878 = vmax.f32 %v2342, 0.0
  %v2879 = vmax.f32 %v2345, 0.0
  %v2880 = vmax.f32 %v2347, 0.0
  %v2881 = vmax.f32 %v2350, 0.0
  %v2882 = vmax.f32 %v2352, 0.0
  %v2883 = vmax.f32 %v2355, 0.0
  %v2884 = vmax.f32 %v2357, 0.0
  %v2885 = vmax.f32 %v2360, 0.0
  %v2886 = vmax.f32 %v2362, 0.0
  %v2887 = vmax.f32 %v2365, 0.0
  %v2888 = vmax.f32 %v2367, 0.0
  %v2889 = vmax.f32 %v2370, 0.0
  %v2890 = vmax.f32 %v2372, 0.0
  %v2891 = vmax.f32 %v2375, 0.0
  %v2892 = vmax.f32 %v2377, 0.0
  %v2893 = vmax.f32 %v2380, 0.0
  %v2894 = vmax.f32 %v2382, 0.0
  %v2895 = vmax.f32 %v2385, 0.0
  %v2896 = vmax.f32 %v2387, 0.0
  %v2897 = vmax.f32 %v2390, 0.0
  %v2898 = vmax.f32 %v2392, 0.0
  %v2899 = vmax.f32 %v2395, 0.0
  %v2900 = vmax.f32 %v2397, 0.0
  %v2901 = vmax.f32 %v2400, 0.0
  %v2902 = vmax.f32 %v2402, 0.0
  %v2903 = vmax.f32 %v2405, 0.0
  %v2904 = vmax.f32 %v2407, 0.0
  %v2905 = vmax.f32 %v2410, 0.0
  %v2906 = vmax.f32 %v2412, 0.0
  %v2907 = vmax.f32 %v2415, 0.0
  %v2908 = vmax.f32 %v2417, 0.0
  %v2909 = vmax.f32 %v2420, 0.0
  %v2910 = vmax.f32 %v2422, 0.0
  %v2911 = vmax.f32 %v2425, 0.0
  %v2912 = vmax.f32 %v2427, 0.0
  %v2913 = vmax.f32 %v2430, 0.0
  %v2914 = vmax.f32 %v2432, 0.0
  %v2915 = vmax.f32 %v2435, 0.0
  %v2916 = vmax.f32 %v2437, 0.0
  %v2917 = vmax.f32 %v2440, 0.0
  %v2918 = vmax.f32 %v2442, 0.0
  %v2919 = vmax.f32 %v2445, 0.0
  %v2920 = vmax.f32 %v2447, 0.0
  %v2921 = vmax.f32 %v2450, 0.0
  %v2922 = vmax.f32 %v2452, 0.0
  %v2923 = vmax.f32 %v2455, 0.0
  %v2924 = vmax.f32 %v2457, 0.0
  %v2925 = vmax.f32 %v2460, 0.0
  %v2926 = vmax.f32 %v2462, 0.0
  %v2927 = vmax.f32 %v2465, 0.0
  %v2928 = vmax.f32 %v2467, 0.0
  %v2929 = vmax.f32 %v2470, 0.0
  %v2930 = vmax.f32 %v2472, 0.0
  %v2931 = vmax.f32 %v2475, 0.0
  %v2932 = vmax.f32 %v2477, 0.0
  %v2933 = vmax.f32 %v2480, 0.0
  %v2934 = vmax.f32 %v2482, 0.0
  %v2935 = vmax.f32 %v2485, 0.0
  %v2936 = vmax.f32 %v2487, 0.0
  %v2937 = vmax.f32 %v2490, 0.0
  %v2938 = vmax.f32 %v2492, 0.0
  %v2939 = vmax.f32 %v2495, 0.0
  %v2940 = vmax.f32 %v2497, 0.0
  %v2941 = vmax.f32 %v2500, 0.0
  %v2942 = vmax.f32 %v2502, 0.0
  %v2943 = vmax.f32 %v2505, 0.0
  %v2944 = vmax.f32 %v2507, 0.0
  %v2945 = vmax.f32 %v2510, 0.0
  %v2946 = vmax.f32 %v2512, 0.0
  %v2947 = vmax.f32 %v2515, 0.0
  %v2948 = vmax.f32 %v2517, 0.0
  %v2949 = vmax.f32 %v2520, 0.0
  %v2950 = vmax.f32 %v2522, 0.0
  %v2951 = vmax.f32 %v2525, 0.0
  %v2952 = vmax.f32 %v2527, 0.0
  %v2953 = vmax.f32 %v2530, 0.0
  %v2954 = vmax.f32 %v2532, 0.0
  %v2955 = vmax.f32 %v2535, 0.0
  %v2956 = vmax.f32 %v2537, 0.0
  %v2957 = vmax.f32 %v2540, 0.0
  %v2958 = vmax.f32 %v2542, 0.0
  %v2959 = vmax.f32 %v2545, 0.0
  %v2960 = vmax.f32 %v2547, 0.0
  %v2961 = vmax.f32 %v2550, 0.0
  %v2962 = vmax.f32 %v2552, 0.0
  %v2963 = vmax.f32 %v2555, 0.0
  %v2964 = vmax.f32 %v2557, 0.0
  %v2965 = vmax.f32 %v2560, 0.0
  %v2966 = vmax.f32 %v2562, 0.0
  %v2967 = vmax.f32 %v2565, 0.0
  %v2968 = vmax.f32 %v2567, 0.0
  %v2969 = vmax.f32 %v2570, 0.0
  %v2970 = vmax.f32 %v2572, 0.0
  %v2971 = vmax.f32 %v2575, 0.0
  %v2972 = vmax.f32 %v2577, 0.0
  %v2973 = vmax.f32 %v2580, 0.0
  %v2974 = vmax.f32 %v2582, 0.0
  %v2975 = vmax.f32 %v2585, 0.0
  %v2976 = vmax.f32 %v2587, 0.0
  %v2977 = vmax.f32 %v2590, 0.0
  %v2978 = vmax.f32 %v2592, 0.0
  %v2979 = vmax.f32 %v2595, 0.0
  %v2980 = vmax.f32 %v2597, 0.0
  %v2981 = vmax.f32 %v2600, 0.0
  %v2982 = vmax.f32 %v2602, 0.0
  %v2983 = vmax.f32 %v2605, 0.0
  %v2984 = vmax.f32 %v2607, 0.0
  %v2985 = vmax.f32 %v2610, 0.0
  %v2986 = vmax.f32 %v2612, 0.0
  %v2987 = vmax.f32 %v2615, 0.0
  %v2988 = vmax.f32 %v2617, 0.0
  %v2989 = vmax.f32 %v2620, 0.0
  %v2990 = vmax.f32 %v2622, 0.0
  %v2991 = vmax.f32 %v2625, 0.0
  %v2992 = vmax.f32 %v2627, 0.0
  %v2993 = vmax.f32 %v2630, 0.0
  %v2994 = vmax.f32 %v2632, 0.0
  %v2995 = vmax.f32 %v2635, 0.0
  %v2996 = vmax.f32 %v2637, 0.0
  %v2997 = vmax.f32 %v2640, 0.0
  %v2998 = vmax.f32 %v2642, 0.0
  %v2999 = vmax.f32 %v2645, 0.0
  %v3000 = vmax.f32 %v2647, 0.0
  %v3001 = vmax.f32 %v2650, 0.0
  %v3002 = vmax.f32 %v2652, 0.0
  %v3003 = vmax.f32 %v2655, 0.0
  %v3004 = vmax.f32 %v2657, 0.0
  %v3005 = vmax.f32 %v2660, 0.0
  %v3006 = vmax.f32 %v2662, 0.0
  %v3007 = vmax.f32 %v2665, 0.0
  %v3008 = vmax.f32 %v2667, 0.0
  %v3009 = vmax.f32 %v2670, 0.0
  %v3010 = vmax.f32 %v2672, 0.0
  %v3011 = vmax.f32 %v2675, 0.0
  %v3012 = vmax.f32 %v2677, 0.0
  %v3013 = vmax.f32 %v2680, 0.0
  %v3014 = vmax.f32 %v2682, 0.0
  %v3015 = vmax.f32 %v2685, 0.0
  %v3016 = vmax.f32 %v2687, 0.0
  %v3017 = vmax.f32 %v2690, 0.0
  %v3018 = vmax.f32 %v2692, 0.0
  %v3019 = vmax.f32 %v2695, 0.0
  %v3020 = vmax.f32 %v2697, 0.0
  %v3021 = vmax.f32 %v2700, 0.0
  %v3022 = vmax.f32 %v2702, 0.0
  %v3023 = vmax.f32 %v2705, 0.0
  %v3024 = vmax.f32 %v2707, 0.0
  %v3025 = vmax.f32 %v2710, 0.0
  %v3026 = vmax.f32 %v2712, 0.0
  %v3027 = vmax.f32 %v2715, 0.0
  %v3028 = vmax.f32 %v2717, 0.0
  %v3029 = vmax.f32 %v2720, 0.0
  %v3030 = vmax.f32 %v2722, 0.0
  %v3031 = vmax.f32 %v2725, 0.0
  %v3032 = vmax.f32 %v2727, 0.0
  %v3033 = vmax.f32 %v2730, 0.0
  %v3034 = vmax.f32 %v2732, 0.0
  %v3035 = vmax.f32 %v2735, 0.0
  %v3036 = vmax.f32 %v2737, 0.0
  %v3037 = vmax.f32 %v2740, 0.0
  %v3038 = vmax.f32 %v2742, 0.0
  %v3039 = vmax.f32 %v2745, 0.0
  %v3040 = vmax.f32 %v2747, 0.0
  %v3041 = vmax.f32 %v2750, 0.0
  %v3042 = vmax.f32 %v2752, 0.0
  %v3043 = vmax.f32 %v2755, 0.0
  %v3044 = vmax.f32 %v2757, 0.0
  %v3045 = vmax.f32 %v2760, 0.0
  %v3046 = vmax.f32 %v2762, 0.0
  %v3047 = vmax.f32 %v2765, 0.0
  %v3048 = vmax.f32 %v2767, 0.0
  %v3049 = vmax.f32 %v2770, 0.0
  %v3050 = vmax.f32 %v2772, 0.0
  %v3051 = vmax.f32 %v2775, 0.0
  %v3052 = vmax.f32 %v2777, 0.0
  %v3053 = vmax.f32 %v2780, 0.0
  %v3054 = vmax.f32 %v2782, 0.0
  %v3055 = vmax.f32 %v2785, 0.0
  %v3056 = vmax.f32 %v2787, 0.0
  %v3057 = vmax.f32 %v2790, 0.0
  %v3058 = vmax.f32 %v2792, 0.0
  %v3059 = vmax.f32 %v2795, 0.0
  %v3060 = vmax.f32 %v2797, 0.0
  %v3061 = vmax.f32 %v2800, 0.0
  %v3062 = vmax.f32 %v2802, 0.0
  %v3063 = vmax.f32 %v2805, 0.0
  %v3064 = vmax.f32 %v2807, 0.0
  %v3065 = vmax.f32 %v2810, 0.0
  %v3066 = vmax.f32 %v2812, 0.0
  %v3067 = vmax.f32 %v2815, 0.0
  %v3068 = vmax.f32 %v2817, 0.0
  %v3069 = vpack.c.bf16 %v2820, %v2819
  %v3070 = vpack.c.bf16 %v2822, %v2821
  %v3071 = vpack.c.bf16 %v2824, %v2823
  %v3072 = vpack.c.bf16 %v2826, %v2825
  %v3073 = vpack.c.bf16 %v2828, %v2827
  %v3074 = vpack.c.bf16 %v2830, %v2829
  %v3075 = vpack.c.bf16 %v2832, %v2831
  %v3076 = vpack.c.bf16 %v2834, %v2833
  %v3077 = vpack.c.bf16 %v2836, %v2835
  %v3078 = vpack.c.bf16 %v2838, %v2837
  %v3079 = vpack.c.bf16 %v2840, %v2839
  %v3080 = vpack.c.bf16 %v2842, %v2841
  %v3081 = vpack.c.bf16 %v2844, %v2843
  %v3082 = vpack.c.bf16 %v2846, %v2845
  %v3083 = vpack.c.bf16 %v2848, %v2847
  %v3084 = vpack.c.bf16 %v2850, %v2849
  %v3085 = vpack.c.bf16 %v2852, %v2851
  %v3086 = vpack.c.bf16 %v2854, %v2853
  %v3087 = vpack.c.bf16 %v2856, %v2855
  %v3088 = vpack.c.bf16 %v2858, %v2857
  %v3089 = vpack.c.bf16 %v2860, %v2859
  %v3090 = vpack.c.bf16 %v2862, %v2861
  %v3091 = vpack.c.bf16 %v2864, %v2863
  %v3092 = vpack.c.bf16 %v2866, %v2865
  %v3093 = vpack.c.bf16 %v2868, %v2867
  %v3094 = vpack.c.bf16 %v2870, %v2869
  %v3095 = vpack.c.bf16 %v2872, %v2871
  %v3096 = vpack.c.bf16 %v2874, %v2873
  %v3097 = vpack.c.bf16 %v2876, %v2875
  %v3098 = vpack.c.bf16 %v2878, %v2877
  %v3099 = vpack.c.bf16 %v2880, %v2879
  %v3100 = vpack.c.bf16 %v2882, %v2881
  %v3101 = vpack.c.bf16 %v2884, %v2883
  %v3102 = vpack.c.bf16 %v2886, %v2885
  %v3103 = vpack.c.bf16 %v2888, %v2887
  %v3104 = vpack.c.bf16 %v2890, %v2889
  %v3105 = vpack.c.bf16 %v2892, %v2891
  %v3106 = vpack.c.bf16 %v2894, %v2893
  %v3107 = vpack.c.bf16 %v2896, %v2895
  %v3108 = vpack.c.bf16 %v2898, %v2897
  %v3109 = vpack.c.bf16 %v2900, %v2899
  %v3110 = vpack.c.bf16 %v2902, %v2901
  %v3111 = vpack.c.bf16 %v2904, %v2903
  %v3112 = vpack.c.bf16 %v2906, %v2905
  %v3113 = vpack.c.bf16 %v2908, %v2907
  %v3114 = vpack.c.bf16 %v2910, %v2909
  %v3115 = vpack.c.bf16 %v2912, %v2911
  %v3116 = vpack.c.bf16 %v2914, %v2913
  %v3117 = vpack.c.bf16 %v2916, %v2915
  %v3118 = vpack.c.bf16 %v2918, %v2917
  %v3119 = vpack.c.bf16 %v2920, %v2919
  %v3120 = vpack.c.bf16 %v2922, %v2921
  %v3121 = vpack.c.bf16 %v2924, %v2923
  %v3122 = vpack.c.bf16 %v2926, %v2925
  %v3123 = vpack.c.bf16 %v2928, %v2927
  %v3124 = vpack.c.bf16 %v2930, %v2929
  %v3125 = vpack.c.bf16 %v2932, %v2931
  %v3126 = vpack.c.bf16 %v2934, %v2933
  %v3127 = vpack.c.bf16 %v2936, %v2935
  %v3128 = vpack.c.bf16 %v2938, %v2937
  %v3129 = vpack.c.bf16 %v2940, %v2939
  %v3130 = vpack.c.bf16 %v2942, %v2941
  %v3131 = vpack.c.bf16 %v2944, %v2943
  %v3132 = vpack.c.bf16 %v2946, %v2945
  %v3133 = vpack.c.bf16 %v2948, %v2947
  %v3134 = vpack.c.bf16 %v2950, %v2949
  %v3135 = vpack.c.bf16 %v2952, %v2951
  %v3136 = vpack.c.bf16 %v2954, %v2953
  %v3137 = vpack.c.bf16 %v2956, %v2955
  %v3138 = vpack.c.bf16 %v2958, %v2957
  %v3139 = vpack.c.bf16 %v2960, %v2959
  %v3140 = vpack.c.bf16 %v2962, %v2961
  %v3141 = vpack.c.bf16 %v2964, %v2963
  %v3142 = vpack.c.bf16 %v2966, %v2965
  %v3143 = vpack.c.bf16 %v2968, %v2967
  %v3144 = vpack.c.bf16 %v2970, %v2969
  %v3145 = vpack.c.bf16 %v2972, %v2971
  %v3146 = vpack.c.bf16 %v2974, %v2973
  %v3147 = vpack.c.bf16 %v2976, %v2975
  %v3148 = vpack.c.bf16 %v2978, %v2977
  %v3149 = vpack.c.bf16 %v2980, %v2979
  %v3150 = vpack.c.bf16 %v2982, %v2981
  %v3151 = vpack.c.bf16 %v2984, %v2983
  %v3152 = vpack.c.bf16 %v2986, %v2985
  %v3153 = vpack.c.bf16 %v2988, %v2987
  %v3154 = vpack.c.bf16 %v2990, %v2989
  %v3155 = vpack.c.bf16 %v2992, %v2991
  %v3156 = vpack.c.bf16 %v2994, %v2993
  %v3157 = vpack.c.bf16 %v2996, %v2995
  %v3158 = vpack.c.bf16 %v2998, %v2997
  %v3159 = vpack.c.bf16 %v3000, %v2999
  %v3160 = vpack.c.bf16 %v3002, %v3001
  %v3161 = vpack.c.bf16 %v3004, %v3003
  %v3162 = vpack.c.bf16 %v3006, %v3005
  %v3163 = vpack.c.bf16 %v3008, %v3007
  %v3164 = vpack.c.bf16 %v3010, %v3009
  %v3165 = vpack.c.bf16 %v3012, %v3011
  %v3166 = vpack.c.bf16 %v3014, %v3013
  %v3167 = vpack.c.bf16 %v3016, %v3015
  %v3168 = vpack.c.bf16 %v3018, %v3017
  %v3169 = vpack.c.bf16 %v3020, %v3019
  %v3170 = vpack.c.bf16 %v3022, %v3021
  %v3171 = vpack.c.bf16 %v3024, %v3023
  %v3172 = vpack.c.bf16 %v3026, %v3025
  %v3173 = vpack.c.bf16 %v3028, %v3027
  %v3174 = vpack.c.bf16 %v3030, %v3029
  %v3175 = vpack.c.bf16 %v3032, %v3031
  %v3176 = vpack.c.bf16 %v3034, %v3033
  %v3177 = vpack.c.bf16 %v3036, %v3035
  %v3178 = vpack.c.bf16 %v3038, %v3037
  %v3179 = vpack.c.bf16 %v3040, %v3039
  %v3180 = vpack.c.bf16 %v3042, %v3041
  %v3181 = vpack.c.bf16 %v3044, %v3043
  %v3182 = vpack.c.bf16 %v3046, %v3045
  %v3183 = vpack.c.bf16 %v3048, %v3047
  %v3184 = vpack.c.bf16 %v3050, %v3049
  %v3185 = vpack.c.bf16 %v3052, %v3051
  %v3186 = vpack.c.bf16 %v3054, %v3053
  %v3187 = vpack.c.bf16 %v3056, %v3055
  %v3188 = vpack.c.bf16 %v3058, %v3057
  %v3189 = vpack.c.bf16 %v3060, %v3059
  %v3190 = vpack.c.bf16 %v3062, %v3061
  %v3191 = vpack.c.bf16 %v3064, %v3063
  %v3192 = vpack.c.bf16 %v3066, %v3065
  %v3193 = vpack.c.bf16 %v3068, %v3067
  %v3194 = vld [vmem:[%s5] sm:$0xf]
  %v3195 = vld [vmem:[%s5 + $0x4] sm:$0xf]
  %v3197 = vperm.slane %v279, 0
  %v3201 = vunpack.c.l.b16 %v3194
  %v3202 = vunpack.c.l.b16 %v3195
  %v3203 = vpack.c.b16 %v3202, %v3201
  %vm3205 = vcmask 130048
  %v3207 = vsel %vm3205, %v3069, 0
  %v3210 = vsel %vm3205, %v3070, 0
  %v3213 = vsel %vm3205, %v3071, 0
  %v3216 = vsel %vm3205, %v3072, 0
  %v3219 = vsel %vm3205, %v3073, 0
  %v3222 = vsel %vm3205, %v3074, 0
  %v3225 = vsel %vm3205, %v3075, 0
  %v3228 = vsel %vm3205, %v3076, 0
  %v3231 = vsel %vm3205, %v3077, 0
  %v3234 = vsel %vm3205, %v3078, 0
  %v3237 = vsel %vm3205, %v3079, 0
  %v3240 = vsel %vm3205, %v3080, 0
  %v3243 = vsel %vm3205, %v3081, 0
  %v3246 = vsel %vm3205, %v3082, 0
  %v3249 = vsel %vm3205, %v3083, 0
  %v3252 = vsel %vm3205, %v3084, 0
  %v3255 = vsel %vm3205, %v3085, 0
  %v3258 = vsel %vm3205, %v3086, 0
  %v3261 = vsel %vm3205, %v3087, 0
  %v3264 = vsel %vm3205, %v3088, 0
  %v3267 = vsel %vm3205, %v3089, 0
  %v3270 = vsel %vm3205, %v3090, 0
  %v3273 = vsel %vm3205, %v3091, 0
  %v3276 = vsel %vm3205, %v3092, 0
  %v3279 = vsel %vm3205, %v3093, 0
  %v3282 = vsel %vm3205, %v3094, 0
  %v3285 = vsel %vm3205, %v3095, 0
  %v3288 = vsel %vm3205, %v3096, 0
  %v3291 = vsel %vm3205, %v3097, 0
  %v3294 = vsel %vm3205, %v3098, 0
  %v3297 = vsel %vm3205, %v3099, 0
  %v3300 = vsel %vm3205, %v3100, 0
  %v3303 = vsel %vm3205, %v3101, 0
  %v3306 = vsel %vm3205, %v3102, 0
  %v3309 = vsel %vm3205, %v3103, 0
  %v3312 = vsel %vm3205, %v3104, 0
  %v3315 = vsel %vm3205, %v3105, 0
  %v3318 = vsel %vm3205, %v3106, 0
  %v3321 = vsel %vm3205, %v3107, 0
  %v3324 = vsel %vm3205, %v3108, 0
  %v3327 = vsel %vm3205, %v3109, 0
  %v3330 = vsel %vm3205, %v3110, 0
  %v3333 = vsel %vm3205, %v3111, 0
  %v3336 = vsel %vm3205, %v3112, 0
  %v3339 = vsel %vm3205, %v3113, 0
  %v3342 = vsel %vm3205, %v3114, 0
  %v3345 = vsel %vm3205, %v3115, 0
  %v3348 = vsel %vm3205, %v3116, 0
  %v3351 = vsel %vm3205, %v3117, 0
  %v3354 = vsel %vm3205, %v3118, 0
  %v3357 = vsel %vm3205, %v3119, 0
  %v3360 = vsel %vm3205, %v3120, 0
  %v3363 = vsel %vm3205, %v3121, 0
  %v3366 = vsel %vm3205, %v3122, 0
  %v3369 = vsel %vm3205, %v3123, 0
  %v3372 = vsel %vm3205, %v3124, 0
  %v3375 = vsel %vm3205, %v3125, 0
  %v3378 = vsel %vm3205, %v3126, 0
  %v3381 = vsel %vm3205, %v3127, 0
  %v3384 = vsel %vm3205, %v3128, 0
  %v3387 = vsel %vm3205, %v3129, 0
  %v3390 = vsel %vm3205, %v3130, 0
  %v3393 = vsel %vm3205, %v3131, 0
  %v3396 = vsel %vm3205, %v3132, 0
  %v3399 = vsel %vm3205, %v3133, 0
  %v3402 = vsel %vm3205, %v3134, 0
  %v3405 = vsel %vm3205, %v3135, 0
  %v3408 = vsel %vm3205, %v3136, 0
  %v3411 = vsel %vm3205, %v3137, 0
  %v3414 = vsel %vm3205, %v3138, 0
  %v3417 = vsel %vm3205, %v3139, 0
  %v3420 = vsel %vm3205, %v3140, 0
  %v3423 = vsel %vm3205, %v3141, 0
  %v3426 = vsel %vm3205, %v3142, 0
  %v3429 = vsel %vm3205, %v3143, 0
  %v3432 = vsel %vm3205, %v3144, 0
  %v3435 = vsel %vm3205, %v3145, 0
  %v3438 = vsel %vm3205, %v3146, 0
  %v3441 = vsel %vm3205, %v3147, 0
  %v3444 = vsel %vm3205, %v3148, 0
  %v3447 = vsel %vm3205, %v3149, 0
  %v3450 = vsel %vm3205, %v3150, 0
  %v3453 = vsel %vm3205, %v3151, 0
  %v3456 = vsel %vm3205, %v3152, 0
  %v3459 = vsel %vm3205, %v3153, 0
  %v3462 = vsel %vm3205, %v3154, 0
  %v3465 = vsel %vm3205, %v3155, 0
  %v3468 = vsel %vm3205, %v3156, 0
  %v3471 = vsel %vm3205, %v3157, 0
  %v3474 = vsel %vm3205, %v3158, 0
  %v3477 = vsel %vm3205, %v3159, 0
  %v3480 = vsel %vm3205, %v3160, 0
  %v3483 = vsel %vm3205, %v3161, 0
  %v3486 = vsel %vm3205, %v3162, 0
  %v3489 = vsel %vm3205, %v3163, 0
  %v3492 = vsel %vm3205, %v3164, 0
  %v3495 = vsel %vm3205, %v3165, 0
  %v3498 = vsel %vm3205, %v3166, 0
  %v3501 = vsel %vm3205, %v3167, 0
  %v3504 = vsel %vm3205, %v3168, 0
  %v3507 = vsel %vm3205, %v3169, 0
  %v3510 = vsel %vm3205, %v3170, 0
  %v3513 = vsel %vm3205, %v3171, 0
  %v3516 = vsel %vm3205, %v3172, 0
  %v3519 = vsel %vm3205, %v3173, 0
  %v3522 = vsel %vm3205, %v3174, 0
  %v3525 = vsel %vm3205, %v3175, 0
  %v3528 = vsel %vm3205, %v3176, 0
  %v3531 = vsel %vm3205, %v3177, 0
  %v3534 = vsel %vm3205, %v3178, 0
  %v3537 = vsel %vm3205, %v3179, 0
  %v3540 = vsel %vm3205, %v3180, 0
  %v3543 = vsel %vm3205, %v3181, 0
  %v3546 = vsel %vm3205, %v3182, 0
  %v3549 = vsel %vm3205, %v3183, 0
  %v3552 = vsel %vm3205, %v3184, 0
  %v3555 = vsel %vm3205, %v3185, 0
  %v3558 = vsel %vm3205, %v3186, 0
  %v3561 = vsel %vm3205, %v3187, 0
  %v3564 = vsel %vm3205, %v3188, 0
  %v3567 = vsel %vm3205, %v3189, 0
  %v3570 = vsel %vm3205, %v3190, 0
  %v3573 = vsel %vm3205, %v3191, 0
  %v3576 = vsel %vm3205, %v3192, 0
  %v3579 = vsel %vm3205, %v3193, 0
  %3581 = vmatpush.bf16.msra.mxu0 0
  %3582 = vmatpush.bf16.msra.mxu0 0
  %3583 = vmatpush.bf16.msra.mxu0 0
  %3584 = vmatpush.bf16.msra.mxu0 0
  %3585 = vmatpush.bf16.msra.mxu0 0
  %3586 = vmatpush.bf16.msra.mxu0 0
  %3587 = vmatpush.bf16.msra.mxu0 0
  %3588 = vmatpush.bf16.msra.mxu0 %v3203
  %3589 = vmatmul.bf16.gmra.mxu0 %v3207
  %v3590 = vpop.f32.mrf.mxu0
  %v3591 = vadd.f32 %v3197, %v3590
  %v3592 = vpop.f32.mrf.mxu0
  %v3593 = vadd.f32 %v3197, %v3592
  %3594 = vmatmul.bf16.gmra.mxu0 %v3210
  %v3595 = vpop.f32.mrf.mxu0
  %v3596 = vadd.f32 %v3197, %v3595
  %v3597 = vpop.f32.mrf.mxu0
  %v3598 = vadd.f32 %v3197, %v3597
  %3599 = vmatmul.bf16.gmra.mxu0 %v3213
  %v3600 = vpop.f32.mrf.mxu0
  %v3601 = vadd.f32 %v3197, %v3600
  %v3602 = vpop.f32.mrf.mxu0
  %v3603 = vadd.f32 %v3197, %v3602
  %3604 = vmatmul.bf16.gmra.mxu0 %v3216
  %v3605 = vpop.f32.mrf.mxu0
  %v3606 = vadd.f32 %v3197, %v3605
  %v3607 = vpop.f32.mrf.mxu0
  %v3608 = vadd.f32 %v3197, %v3607
  %3609 = vmatmul.bf16.gmra.mxu0 %v3219
  %v3610 = vpop.f32.mrf.mxu0
  %v3611 = vadd.f32 %v3197, %v3610
  %v3612 = vpop.f32.mrf.mxu0
  %v3613 = vadd.f32 %v3197, %v3612
  %3614 = vmatmul.bf16.gmra.mxu0 %v3222
  %v3615 = vpop.f32.mrf.mxu0
  %v3616 = vadd.f32 %v3197, %v3615
  %v3617 = vpop.f32.mrf.mxu0
  %v3618 = vadd.f32 %v3197, %v3617
  %3619 = vmatmul.bf16.gmra.mxu0 %v3225
  %v3620 = vpop.f32.mrf.mxu0
  %v3621 = vadd.f32 %v3197, %v3620
  %v3622 = vpop.f32.mrf.mxu0
  %v3623 = vadd.f32 %v3197, %v3622
  %3624 = vmatmul.bf16.gmra.mxu0 %v3228
  %v3625 = vpop.f32.mrf.mxu0
  %v3626 = vadd.f32 %v3197, %v3625
  %v3627 = vpop.f32.mrf.mxu0
  %v3628 = vadd.f32 %v3197, %v3627
  %3629 = vmatmul.bf16.gmra.mxu0 %v3231
  %v3630 = vpop.f32.mrf.mxu0
  %v3631 = vadd.f32 %v3197, %v3630
  %v3632 = vpop.f32.mrf.mxu0
  %v3633 = vadd.f32 %v3197, %v3632
  %3634 = vmatmul.bf16.gmra.mxu0 %v3234
  %v3635 = vpop.f32.mrf.mxu0
  %v3636 = vadd.f32 %v3197, %v3635
  %v3637 = vpop.f32.mrf.mxu0
  %v3638 = vadd.f32 %v3197, %v3637
  %3639 = vmatmul.bf16.gmra.mxu0 %v3237
  %v3640 = vpop.f32.mrf.mxu0
  %v3641 = vadd.f32 %v3197, %v3640
  %v3642 = vpop.f32.mrf.mxu0
  %v3643 = vadd.f32 %v3197, %v3642
  %3644 = vmatmul.bf16.gmra.mxu0 %v3240
  %v3645 = vpop.f32.mrf.mxu0
  %v3646 = vadd.f32 %v3197, %v3645
  %v3647 = vpop.f32.mrf.mxu0
  %v3648 = vadd.f32 %v3197, %v3647
  %3649 = vmatmul.bf16.gmra.mxu0 %v3243
  %v3650 = vpop.f32.mrf.mxu0
  %v3651 = vadd.f32 %v3197, %v3650
  %v3652 = vpop.f32.mrf.mxu0
  %v3653 = vadd.f32 %v3197, %v3652
  %3654 = vmatmul.bf16.gmra.mxu0 %v3246
  %v3655 = vpop.f32.mrf.mxu0
  %v3656 = vadd.f32 %v3197, %v3655
  %v3657 = vpop.f32.mrf.mxu0
  %v3658 = vadd.f32 %v3197, %v3657
  %3659 = vmatmul.bf16.gmra.mxu0 %v3249
  %v3660 = vpop.f32.mrf.mxu0
  %v3661 = vadd.f32 %v3197, %v3660
  %v3662 = vpop.f32.mrf.mxu0
  %v3663 = vadd.f32 %v3197, %v3662
  %3664 = vmatmul.bf16.gmra.mxu0 %v3252
  %v3665 = vpop.f32.mrf.mxu0
  %v3666 = vadd.f32 %v3197, %v3665
  %v3667 = vpop.f32.mrf.mxu0
  %v3668 = vadd.f32 %v3197, %v3667
  %3669 = vmatmul.bf16.gmra.mxu0 %v3255
  %v3670 = vpop.f32.mrf.mxu0
  %v3671 = vadd.f32 %v3197, %v3670
  %v3672 = vpop.f32.mrf.mxu0
  %v3673 = vadd.f32 %v3197, %v3672
  %3674 = vmatmul.bf16.gmra.mxu0 %v3258
  %v3675 = vpop.f32.mrf.mxu0
  %v3676 = vadd.f32 %v3197, %v3675
  %v3677 = vpop.f32.mrf.mxu0
  %v3678 = vadd.f32 %v3197, %v3677
  %3679 = vmatmul.bf16.gmra.mxu0 %v3261
  %v3680 = vpop.f32.mrf.mxu0
  %v3681 = vadd.f32 %v3197, %v3680
  %v3682 = vpop.f32.mrf.mxu0
  %v3683 = vadd.f32 %v3197, %v3682
  %3684 = vmatmul.bf16.gmra.mxu0 %v3264
  %v3685 = vpop.f32.mrf.mxu0
  %v3686 = vadd.f32 %v3197, %v3685
  %v3687 = vpop.f32.mrf.mxu0
  %v3688 = vadd.f32 %v3197, %v3687
  %3689 = vmatmul.bf16.gmra.mxu0 %v3267
  %v3690 = vpop.f32.mrf.mxu0
  %v3691 = vadd.f32 %v3197, %v3690
  %v3692 = vpop.f32.mrf.mxu0
  %v3693 = vadd.f32 %v3197, %v3692
  %3694 = vmatmul.bf16.gmra.mxu0 %v3270
  %v3695 = vpop.f32.mrf.mxu0
  %v3696 = vadd.f32 %v3197, %v3695
  %v3697 = vpop.f32.mrf.mxu0
  %v3698 = vadd.f32 %v3197, %v3697
  %3699 = vmatmul.bf16.gmra.mxu0 %v3273
  %v3700 = vpop.f32.mrf.mxu0
  %v3701 = vadd.f32 %v3197, %v3700
  %v3702 = vpop.f32.mrf.mxu0
  %v3703 = vadd.f32 %v3197, %v3702
  %3704 = vmatmul.bf16.gmra.mxu0 %v3276
  %v3705 = vpop.f32.mrf.mxu0
  %v3706 = vadd.f32 %v3197, %v3705
  %v3707 = vpop.f32.mrf.mxu0
  %v3708 = vadd.f32 %v3197, %v3707
  %3709 = vmatmul.bf16.gmra.mxu0 %v3279
  %v3710 = vpop.f32.mrf.mxu0
  %v3711 = vadd.f32 %v3197, %v3710
  %v3712 = vpop.f32.mrf.mxu0
  %v3713 = vadd.f32 %v3197, %v3712
  %3714 = vmatmul.bf16.gmra.mxu0 %v3282
  %v3715 = vpop.f32.mrf.mxu0
  %v3716 = vadd.f32 %v3197, %v3715
  %v3717 = vpop.f32.mrf.mxu0
  %v3718 = vadd.f32 %v3197, %v3717
  %3719 = vmatmul.bf16.gmra.mxu0 %v3285
  %v3720 = vpop.f32.mrf.mxu0
  %v3721 = vadd.f32 %v3197, %v3720
  %v3722 = vpop.f32.mrf.mxu0
  %v3723 = vadd.f32 %v3197, %v3722
  %3724 = vmatmul.bf16.gmra.mxu0 %v3288
  %v3725 = vpop.f32.mrf.mxu0
  %v3726 = vadd.f32 %v3197, %v3725
  %v3727 = vpop.f32.mrf.mxu0
  %v3728 = vadd.f32 %v3197, %v3727
  %3729 = vmatmul.bf16.gmra.mxu0 %v3291
  %v3730 = vpop.f32.mrf.mxu0
  %v3731 = vadd.f32 %v3197, %v3730
  %v3732 = vpop.f32.mrf.mxu0
  %v3733 = vadd.f32 %v3197, %v3732
  %3734 = vmatmul.bf16.gmra.mxu0 %v3294
  %v3735 = vpop.f32.mrf.mxu0
  %v3736 = vadd.f32 %v3197, %v3735
  %v3737 = vpop.f32.mrf.mxu0
  %v3738 = vadd.f32 %v3197, %v3737
  %3739 = vmatmul.bf16.gmra.mxu0 %v3297
  %v3740 = vpop.f32.mrf.mxu0
  %v3741 = vadd.f32 %v3197, %v3740
  %v3742 = vpop.f32.mrf.mxu0
  %v3743 = vadd.f32 %v3197, %v3742
  %3744 = vmatmul.bf16.gmra.mxu0 %v3300
  %v3745 = vpop.f32.mrf.mxu0
  %v3746 = vadd.f32 %v3197, %v3745
  %v3747 = vpop.f32.mrf.mxu0
  %v3748 = vadd.f32 %v3197, %v3747
  %3749 = vmatmul.bf16.gmra.mxu0 %v3303
  %v3750 = vpop.f32.mrf.mxu0
  %v3751 = vadd.f32 %v3197, %v3750
  %v3752 = vpop.f32.mrf.mxu0
  %v3753 = vadd.f32 %v3197, %v3752
  %3754 = vmatmul.bf16.gmra.mxu0 %v3306
  %v3755 = vpop.f32.mrf.mxu0
  %v3756 = vadd.f32 %v3197, %v3755
  %v3757 = vpop.f32.mrf.mxu0
  %v3758 = vadd.f32 %v3197, %v3757
  %3759 = vmatmul.bf16.gmra.mxu0 %v3309
  %v3760 = vpop.f32.mrf.mxu0
  %v3761 = vadd.f32 %v3197, %v3760
  %v3762 = vpop.f32.mrf.mxu0
  %v3763 = vadd.f32 %v3197, %v3762
  %3764 = vmatmul.bf16.gmra.mxu0 %v3312
  %v3765 = vpop.f32.mrf.mxu0
  %v3766 = vadd.f32 %v3197, %v3765
  %v3767 = vpop.f32.mrf.mxu0
  %v3768 = vadd.f32 %v3197, %v3767
  %3769 = vmatmul.bf16.gmra.mxu0 %v3315
  %v3770 = vpop.f32.mrf.mxu0
  %v3771 = vadd.f32 %v3197, %v3770
  %v3772 = vpop.f32.mrf.mxu0
  %v3773 = vadd.f32 %v3197, %v3772
  %3774 = vmatmul.bf16.gmra.mxu0 %v3318
  %v3775 = vpop.f32.mrf.mxu0
  %v3776 = vadd.f32 %v3197, %v3775
  %v3777 = vpop.f32.mrf.mxu0
  %v3778 = vadd.f32 %v3197, %v3777
  %3779 = vmatmul.bf16.gmra.mxu0 %v3321
  %v3780 = vpop.f32.mrf.mxu0
  %v3781 = vadd.f32 %v3197, %v3780
  %v3782 = vpop.f32.mrf.mxu0
  %v3783 = vadd.f32 %v3197, %v3782
  %3784 = vmatmul.bf16.gmra.mxu0 %v3324
  %v3785 = vpop.f32.mrf.mxu0
  %v3786 = vadd.f32 %v3197, %v3785
  %v3787 = vpop.f32.mrf.mxu0
  %v3788 = vadd.f32 %v3197, %v3787
  %3789 = vmatmul.bf16.gmra.mxu0 %v3327
  %v3790 = vpop.f32.mrf.mxu0
  %v3791 = vadd.f32 %v3197, %v3790
  %v3792 = vpop.f32.mrf.mxu0
  %v3793 = vadd.f32 %v3197, %v3792
  %3794 = vmatmul.bf16.gmra.mxu0 %v3330
  %v3795 = vpop.f32.mrf.mxu0
  %v3796 = vadd.f32 %v3197, %v3795
  %v3797 = vpop.f32.mrf.mxu0
  %v3798 = vadd.f32 %v3197, %v3797
  %3799 = vmatmul.bf16.gmra.mxu0 %v3333
  %v3800 = vpop.f32.mrf.mxu0
  %v3801 = vadd.f32 %v3197, %v3800
  %v3802 = vpop.f32.mrf.mxu0
  %v3803 = vadd.f32 %v3197, %v3802
  %3804 = vmatmul.bf16.gmra.mxu0 %v3336
  %v3805 = vpop.f32.mrf.mxu0
  %v3806 = vadd.f32 %v3197, %v3805
  %v3807 = vpop.f32.mrf.mxu0
  %v3808 = vadd.f32 %v3197, %v3807
  %3809 = vmatmul.bf16.gmra.mxu0 %v3339
  %v3810 = vpop.f32.mrf.mxu0
  %v3811 = vadd.f32 %v3197, %v3810
  %v3812 = vpop.f32.mrf.mxu0
  %v3813 = vadd.f32 %v3197, %v3812
  %3814 = vmatmul.bf16.gmra.mxu0 %v3342
  %v3815 = vpop.f32.mrf.mxu0
  %v3816 = vadd.f32 %v3197, %v3815
  %v3817 = vpop.f32.mrf.mxu0
  %v3818 = vadd.f32 %v3197, %v3817
  %3819 = vmatmul.bf16.gmra.mxu0 %v3345
  %v3820 = vpop.f32.mrf.mxu0
  %v3821 = vadd.f32 %v3197, %v3820
  %v3822 = vpop.f32.mrf.mxu0
  %v3823 = vadd.f32 %v3197, %v3822
  %3824 = vmatmul.bf16.gmra.mxu0 %v3348
  %v3825 = vpop.f32.mrf.mxu0
  %v3826 = vadd.f32 %v3197, %v3825
  %v3827 = vpop.f32.mrf.mxu0
  %v3828 = vadd.f32 %v3197, %v3827
  %3829 = vmatmul.bf16.gmra.mxu0 %v3351
  %v3830 = vpop.f32.mrf.mxu0
  %v3831 = vadd.f32 %v3197, %v3830
  %v3832 = vpop.f32.mrf.mxu0
  %v3833 = vadd.f32 %v3197, %v3832
  %3834 = vmatmul.bf16.gmra.mxu0 %v3354
  %v3835 = vpop.f32.mrf.mxu0
  %v3836 = vadd.f32 %v3197, %v3835
  %v3837 = vpop.f32.mrf.mxu0
  %v3838 = vadd.f32 %v3197, %v3837
  %3839 = vmatmul.bf16.gmra.mxu0 %v3357
  %v3840 = vpop.f32.mrf.mxu0
  %v3841 = vadd.f32 %v3197, %v3840
  %v3842 = vpop.f32.mrf.mxu0
  %v3843 = vadd.f32 %v3197, %v3842
  %3844 = vmatmul.bf16.gmra.mxu0 %v3360
  %v3845 = vpop.f32.mrf.mxu0
  %v3846 = vadd.f32 %v3197, %v3845
  %v3847 = vpop.f32.mrf.mxu0
  %v3848 = vadd.f32 %v3197, %v3847
  %3849 = vmatmul.bf16.gmra.mxu0 %v3363
  %v3850 = vpop.f32.mrf.mxu0
  %v3851 = vadd.f32 %v3197, %v3850
  %v3852 = vpop.f32.mrf.mxu0
  %v3853 = vadd.f32 %v3197, %v3852
  %3854 = vmatmul.bf16.gmra.mxu0 %v3366
  %v3855 = vpop.f32.mrf.mxu0
  %v3856 = vadd.f32 %v3197, %v3855
  %v3857 = vpop.f32.mrf.mxu0
  %v3858 = vadd.f32 %v3197, %v3857
  %3859 = vmatmul.bf16.gmra.mxu0 %v3369
  %v3860 = vpop.f32.mrf.mxu0
  %v3861 = vadd.f32 %v3197, %v3860
  %v3862 = vpop.f32.mrf.mxu0
  %v3863 = vadd.f32 %v3197, %v3862
  %3864 = vmatmul.bf16.gmra.mxu0 %v3372
  %v3865 = vpop.f32.mrf.mxu0
  %v3866 = vadd.f32 %v3197, %v3865
  %v3867 = vpop.f32.mrf.mxu0
  %v3868 = vadd.f32 %v3197, %v3867
  %3869 = vmatmul.bf16.gmra.mxu0 %v3375
  %v3870 = vpop.f32.mrf.mxu0
  %v3871 = vadd.f32 %v3197, %v3870
  %v3872 = vpop.f32.mrf.mxu0
  %v3873 = vadd.f32 %v3197, %v3872
  %3874 = vmatmul.bf16.gmra.mxu0 %v3378
  %v3875 = vpop.f32.mrf.mxu0
  %v3876 = vadd.f32 %v3197, %v3875
  %v3877 = vpop.f32.mrf.mxu0
  %v3878 = vadd.f32 %v3197, %v3877
  %3879 = vmatmul.bf16.gmra.mxu0 %v3381
  %v3880 = vpop.f32.mrf.mxu0
  %v3881 = vadd.f32 %v3197, %v3880
  %v3882 = vpop.f32.mrf.mxu0
  %v3883 = vadd.f32 %v3197, %v3882
  %3884 = vmatmul.bf16.gmra.mxu0 %v3384
  %v3885 = vpop.f32.mrf.mxu0
  %v3886 = vadd.f32 %v3197, %v3885
  %v3887 = vpop.f32.mrf.mxu0
  %v3888 = vadd.f32 %v3197, %v3887
  %3889 = vmatmul.bf16.gmra.mxu0 %v3387
  %v3890 = vpop.f32.mrf.mxu0
  %v3891 = vadd.f32 %v3197, %v3890
  %v3892 = vpop.f32.mrf.mxu0
  %v3893 = vadd.f32 %v3197, %v3892
  %3894 = vmatmul.bf16.gmra.mxu0 %v3390
  %v3895 = vpop.f32.mrf.mxu0
  %v3896 = vadd.f32 %v3197, %v3895
  %v3897 = vpop.f32.mrf.mxu0
  %v3898 = vadd.f32 %v3197, %v3897
  %3899 = vmatmul.bf16.gmra.mxu0 %v3393
  %v3900 = vpop.f32.mrf.mxu0
  %v3901 = vadd.f32 %v3197, %v3900
  %v3902 = vpop.f32.mrf.mxu0
  %v3903 = vadd.f32 %v3197, %v3902
  %3904 = vmatmul.bf16.gmra.mxu0 %v3396
  %v3905 = vpop.f32.mrf.mxu0
  %v3906 = vadd.f32 %v3197, %v3905
  %v3907 = vpop.f32.mrf.mxu0
  %v3908 = vadd.f32 %v3197, %v3907
  %3909 = vmatmul.bf16.gmra.mxu0 %v3399
  %v3910 = vpop.f32.mrf.mxu0
  %v3911 = vadd.f32 %v3197, %v3910
  %v3912 = vpop.f32.mrf.mxu0
  %v3913 = vadd.f32 %v3197, %v3912
  %3914 = vmatmul.bf16.gmra.mxu0 %v3402
  %v3915 = vpop.f32.mrf.mxu0
  %v3916 = vadd.f32 %v3197, %v3915
  %v3917 = vpop.f32.mrf.mxu0
  %v3918 = vadd.f32 %v3197, %v3917
  %3919 = vmatmul.bf16.gmra.mxu0 %v3405
  %v3920 = vpop.f32.mrf.mxu0
  %v3921 = vadd.f32 %v3197, %v3920
  %v3922 = vpop.f32.mrf.mxu0
  %v3923 = vadd.f32 %v3197, %v3922
  %3924 = vmatmul.bf16.gmra.mxu0 %v3408
  %v3925 = vpop.f32.mrf.mxu0
  %v3926 = vadd.f32 %v3197, %v3925
  %v3927 = vpop.f32.mrf.mxu0
  %v3928 = vadd.f32 %v3197, %v3927
  %3929 = vmatmul.bf16.gmra.mxu0 %v3411
  %v3930 = vpop.f32.mrf.mxu0
  %v3931 = vadd.f32 %v3197, %v3930
  %v3932 = vpop.f32.mrf.mxu0
  %v3933 = vadd.f32 %v3197, %v3932
  %3934 = vmatmul.bf16.gmra.mxu0 %v3414
  %v3935 = vpop.f32.mrf.mxu0
  %v3936 = vadd.f32 %v3197, %v3935
  %v3937 = vpop.f32.mrf.mxu0
  %v3938 = vadd.f32 %v3197, %v3937
  %3939 = vmatmul.bf16.gmra.mxu0 %v3417
  %v3940 = vpop.f32.mrf.mxu0
  %v3941 = vadd.f32 %v3197, %v3940
  %v3942 = vpop.f32.mrf.mxu0
  %v3943 = vadd.f32 %v3197, %v3942
  %3944 = vmatmul.bf16.gmra.mxu0 %v3420
  %v3945 = vpop.f32.mrf.mxu0
  %v3946 = vadd.f32 %v3197, %v3945
  %v3947 = vpop.f32.mrf.mxu0
  %v3948 = vadd.f32 %v3197, %v3947
  %3949 = vmatmul.bf16.gmra.mxu0 %v3423
  %v3950 = vpop.f32.mrf.mxu0
  %v3951 = vadd.f32 %v3197, %v3950
  %v3952 = vpop.f32.mrf.mxu0
  %v3953 = vadd.f32 %v3197, %v3952
  %3954 = vmatmul.bf16.gmra.mxu0 %v3426
  %v3955 = vpop.f32.mrf.mxu0
  %v3956 = vadd.f32 %v3197, %v3955
  %v3957 = vpop.f32.mrf.mxu0
  %v3958 = vadd.f32 %v3197, %v3957
  %3959 = vmatmul.bf16.gmra.mxu0 %v3429
  %v3960 = vpop.f32.mrf.mxu0
  %v3961 = vadd.f32 %v3197, %v3960
  %v3962 = vpop.f32.mrf.mxu0
  %v3963 = vadd.f32 %v3197, %v3962
  %3964 = vmatmul.bf16.gmra.mxu0 %v3432
  %v3965 = vpop.f32.mrf.mxu0
  %v3966 = vadd.f32 %v3197, %v3965
  %v3967 = vpop.f32.mrf.mxu0
  %v3968 = vadd.f32 %v3197, %v3967
  %3969 = vmatmul.bf16.gmra.mxu0 %v3435
  %v3970 = vpop.f32.mrf.mxu0
  %v3971 = vadd.f32 %v3197, %v3970
  %v3972 = vpop.f32.mrf.mxu0
  %v3973 = vadd.f32 %v3197, %v3972
  %3974 = vmatmul.bf16.gmra.mxu0 %v3438
  %v3975 = vpop.f32.mrf.mxu0
  %v3976 = vadd.f32 %v3197, %v3975
  %v3977 = vpop.f32.mrf.mxu0
  %v3978 = vadd.f32 %v3197, %v3977
  %3979 = vmatmul.bf16.gmra.mxu0 %v3441
  %v3980 = vpop.f32.mrf.mxu0
  %v3981 = vadd.f32 %v3197, %v3980
  %v3982 = vpop.f32.mrf.mxu0
  %v3983 = vadd.f32 %v3197, %v3982
  %3984 = vmatmul.bf16.gmra.mxu0 %v3444
  %v3985 = vpop.f32.mrf.mxu0
  %v3986 = vadd.f32 %v3197, %v3985
  %v3987 = vpop.f32.mrf.mxu0
  %v3988 = vadd.f32 %v3197, %v3987
  %3989 = vmatmul.bf16.gmra.mxu0 %v3447
  %v3990 = vpop.f32.mrf.mxu0
  %v3991 = vadd.f32 %v3197, %v3990
  %v3992 = vpop.f32.mrf.mxu0
  %v3993 = vadd.f32 %v3197, %v3992
  %3994 = vmatmul.bf16.gmra.mxu0 %v3450
  %v3995 = vpop.f32.mrf.mxu0
  %v3996 = vadd.f32 %v3197, %v3995
  %v3997 = vpop.f32.mrf.mxu0
  %v3998 = vadd.f32 %v3197, %v3997
  %3999 = vmatmul.bf16.gmra.mxu0 %v3453
  %v4000 = vpop.f32.mrf.mxu0
  %v4001 = vadd.f32 %v3197, %v4000
  %v4002 = vpop.f32.mrf.mxu0
  %v4003 = vadd.f32 %v3197, %v4002
  %4004 = vmatmul.bf16.gmra.mxu0 %v3456
  %v4005 = vpop.f32.mrf.mxu0
  %v4006 = vadd.f32 %v3197, %v4005
  %v4007 = vpop.f32.mrf.mxu0
  %v4008 = vadd.f32 %v3197, %v4007
  %4009 = vmatmul.bf16.gmra.mxu0 %v3459
  %v4010 = vpop.f32.mrf.mxu0
  %v4011 = vadd.f32 %v3197, %v4010
  %v4012 = vpop.f32.mrf.mxu0
  %v4013 = vadd.f32 %v3197, %v4012
  %4014 = vmatmul.bf16.gmra.mxu0 %v3462
  %v4015 = vpop.f32.mrf.mxu0
  %v4016 = vadd.f32 %v3197, %v4015
  %v4017 = vpop.f32.mrf.mxu0
  %v4018 = vadd.f32 %v3197, %v4017
  %4019 = vmatmul.bf16.gmra.mxu0 %v3465
  %v4020 = vpop.f32.mrf.mxu0
  %v4021 = vadd.f32 %v3197, %v4020
  %v4022 = vpop.f32.mrf.mxu0
  %v4023 = vadd.f32 %v3197, %v4022
  %4024 = vmatmul.bf16.gmra.mxu0 %v3468
  %v4025 = vpop.f32.mrf.mxu0
  %v4026 = vadd.f32 %v3197, %v4025
  %v4027 = vpop.f32.mrf.mxu0
  %v4028 = vadd.f32 %v3197, %v4027
  %4029 = vmatmul.bf16.gmra.mxu0 %v3471
  %v4030 = vpop.f32.mrf.mxu0
  %v4031 = vadd.f32 %v3197, %v4030
  %v4032 = vpop.f32.mrf.mxu0
  %v4033 = vadd.f32 %v3197, %v4032
  %4034 = vmatmul.bf16.gmra.mxu0 %v3474
  %v4035 = vpop.f32.mrf.mxu0
  %v4036 = vadd.f32 %v3197, %v4035
  %v4037 = vpop.f32.mrf.mxu0
  %v4038 = vadd.f32 %v3197, %v4037
  %4039 = vmatmul.bf16.gmra.mxu0 %v3477
  %v4040 = vpop.f32.mrf.mxu0
  %v4041 = vadd.f32 %v3197, %v4040
  %v4042 = vpop.f32.mrf.mxu0
  %v4043 = vadd.f32 %v3197, %v4042
  %4044 = vmatmul.bf16.gmra.mxu0 %v3480
  %v4045 = vpop.f32.mrf.mxu0
  %v4046 = vadd.f32 %v3197, %v4045
  %v4047 = vpop.f32.mrf.mxu0
  %v4048 = vadd.f32 %v3197, %v4047
  %4049 = vmatmul.bf16.gmra.mxu0 %v3483
  %v4050 = vpop.f32.mrf.mxu0
  %v4051 = vadd.f32 %v3197, %v4050
  %v4052 = vpop.f32.mrf.mxu0
  %v4053 = vadd.f32 %v3197, %v4052
  %4054 = vmatmul.bf16.gmra.mxu0 %v3486
  %v4055 = vpop.f32.mrf.mxu0
  %v4056 = vadd.f32 %v3197, %v4055
  %v4057 = vpop.f32.mrf.mxu0
  %v4058 = vadd.f32 %v3197, %v4057
  %4059 = vmatmul.bf16.gmra.mxu0 %v3489
  %v4060 = vpop.f32.mrf.mxu0
  %v4061 = vadd.f32 %v3197, %v4060
  %v4062 = vpop.f32.mrf.mxu0
  %v4063 = vadd.f32 %v3197, %v4062
  %4064 = vmatmul.bf16.gmra.mxu0 %v3492
  %v4065 = vpop.f32.mrf.mxu0
  %v4066 = vadd.f32 %v3197, %v4065
  %v4067 = vpop.f32.mrf.mxu0
  %v4068 = vadd.f32 %v3197, %v4067
  %4069 = vmatmul.bf16.gmra.mxu0 %v3495
  %v4070 = vpop.f32.mrf.mxu0
  %v4071 = vadd.f32 %v3197, %v4070
  %v4072 = vpop.f32.mrf.mxu0
  %v4073 = vadd.f32 %v3197, %v4072
  %4074 = vmatmul.bf16.gmra.mxu0 %v3498
  %v4075 = vpop.f32.mrf.mxu0
  %v4076 = vadd.f32 %v3197, %v4075
  %v4077 = vpop.f32.mrf.mxu0
  %v4078 = vadd.f32 %v3197, %v4077
  %4079 = vmatmul.bf16.gmra.mxu0 %v3501
  %v4080 = vpop.f32.mrf.mxu0
  %v4081 = vadd.f32 %v3197, %v4080
  %v4082 = vpop.f32.mrf.mxu0
  %v4083 = vadd.f32 %v3197, %v4082
  %4084 = vmatmul.bf16.gmra.mxu0 %v3504
  %v4085 = vpop.f32.mrf.mxu0
  %v4086 = vadd.f32 %v3197, %v4085
  %v4087 = vpop.f32.mrf.mxu0
  %v4088 = vadd.f32 %v3197, %v4087
  %4089 = vmatmul.bf16.gmra.mxu0 %v3507
  %v4090 = vpop.f32.mrf.mxu0
  %v4091 = vadd.f32 %v3197, %v4090
  %v4092 = vpop.f32.mrf.mxu0
  %v4093 = vadd.f32 %v3197, %v4092
  %4094 = vmatmul.bf16.gmra.mxu0 %v3510
  %v4095 = vpop.f32.mrf.mxu0
  %v4096 = vadd.f32 %v3197, %v4095
  %v4097 = vpop.f32.mrf.mxu0
  %v4098 = vadd.f32 %v3197, %v4097
  %4099 = vmatmul.bf16.gmra.mxu0 %v3513
  %v4100 = vpop.f32.mrf.mxu0
  %v4101 = vadd.f32 %v3197, %v4100
  %v4102 = vpop.f32.mrf.mxu0
  %v4103 = vadd.f32 %v3197, %v4102
  %4104 = vmatmul.bf16.gmra.mxu0 %v3516
  %v4105 = vpop.f32.mrf.mxu0
  %v4106 = vadd.f32 %v3197, %v4105
  %v4107 = vpop.f32.mrf.mxu0
  %v4108 = vadd.f32 %v3197, %v4107
  %4109 = vmatmul.bf16.gmra.mxu0 %v3519
  %v4110 = vpop.f32.mrf.mxu0
  %v4111 = vadd.f32 %v3197, %v4110
  %v4112 = vpop.f32.mrf.mxu0
  %v4113 = vadd.f32 %v3197, %v4112
  %4114 = vmatmul.bf16.gmra.mxu0 %v3522
  %v4115 = vpop.f32.mrf.mxu0
  %v4116 = vadd.f32 %v3197, %v4115
  %v4117 = vpop.f32.mrf.mxu0
  %v4118 = vadd.f32 %v3197, %v4117
  %4119 = vmatmul.bf16.gmra.mxu0 %v3525
  %v4120 = vpop.f32.mrf.mxu0
  %v4121 = vadd.f32 %v3197, %v4120
  %v4122 = vpop.f32.mrf.mxu0
  %v4123 = vadd.f32 %v3197, %v4122
  %4124 = vmatmul.bf16.gmra.mxu0 %v3528
  %v4125 = vpop.f32.mrf.mxu0
  %v4126 = vadd.f32 %v3197, %v4125
  %v4127 = vpop.f32.mrf.mxu0
  %v4128 = vadd.f32 %v3197, %v4127
  %4129 = vmatmul.bf16.gmra.mxu0 %v3531
  %v4130 = vpop.f32.mrf.mxu0
  %v4131 = vadd.f32 %v3197, %v4130
  %v4132 = vpop.f32.mrf.mxu0
  %v4133 = vadd.f32 %v3197, %v4132
  %4134 = vmatmul.bf16.gmra.mxu0 %v3534
  %v4135 = vpop.f32.mrf.mxu0
  %v4136 = vadd.f32 %v3197, %v4135
  %v4137 = vpop.f32.mrf.mxu0
  %v4138 = vadd.f32 %v3197, %v4137
  %4139 = vmatmul.bf16.gmra.mxu0 %v3537
  %v4140 = vpop.f32.mrf.mxu0
  %v4141 = vadd.f32 %v3197, %v4140
  %v4142 = vpop.f32.mrf.mxu0
  %v4143 = vadd.f32 %v3197, %v4142
  %4144 = vmatmul.bf16.gmra.mxu0 %v3540
  %v4145 = vpop.f32.mrf.mxu0
  %v4146 = vadd.f32 %v3197, %v4145
  %v4147 = vpop.f32.mrf.mxu0
  %v4148 = vadd.f32 %v3197, %v4147
  %4149 = vmatmul.bf16.gmra.mxu0 %v3543
  %v4150 = vpop.f32.mrf.mxu0
  %v4151 = vadd.f32 %v3197, %v4150
  %v4152 = vpop.f32.mrf.mxu0
  %v4153 = vadd.f32 %v3197, %v4152
  %4154 = vmatmul.bf16.gmra.mxu0 %v3546
  %v4155 = vpop.f32.mrf.mxu0
  %v4156 = vadd.f32 %v3197, %v4155
  %v4157 = vpop.f32.mrf.mxu0
  %v4158 = vadd.f32 %v3197, %v4157
  %4159 = vmatmul.bf16.gmra.mxu0 %v3549
  %v4160 = vpop.f32.mrf.mxu0
  %v4161 = vadd.f32 %v3197, %v4160
  %v4162 = vpop.f32.mrf.mxu0
  %v4163 = vadd.f32 %v3197, %v4162
  %4164 = vmatmul.bf16.gmra.mxu0 %v3552
  %v4165 = vpop.f32.mrf.mxu0
  %v4166 = vadd.f32 %v3197, %v4165
  %v4167 = vpop.f32.mrf.mxu0
  %v4168 = vadd.f32 %v3197, %v4167
  %4169 = vmatmul.bf16.gmra.mxu0 %v3555
  %v4170 = vpop.f32.mrf.mxu0
  %v4171 = vadd.f32 %v3197, %v4170
  %v4172 = vpop.f32.mrf.mxu0
  %v4173 = vadd.f32 %v3197, %v4172
  %4174 = vmatmul.bf16.gmra.mxu0 %v3558
  %v4175 = vpop.f32.mrf.mxu0
  %v4176 = vadd.f32 %v3197, %v4175
  %v4177 = vpop.f32.mrf.mxu0
  %v4178 = vadd.f32 %v3197, %v4177
  %4179 = vmatmul.bf16.gmra.mxu0 %v3561
  %v4180 = vpop.f32.mrf.mxu0
  %v4181 = vadd.f32 %v3197, %v4180
  %v4182 = vpop.f32.mrf.mxu0
  %v4183 = vadd.f32 %v3197, %v4182
  %4184 = vmatmul.bf16.gmra.mxu0 %v3564
  %v4185 = vpop.f32.mrf.mxu0
  %v4186 = vadd.f32 %v3197, %v4185
  %v4187 = vpop.f32.mrf.mxu0
  %v4188 = vadd.f32 %v3197, %v4187
  %4189 = vmatmul.bf16.gmra.mxu0 %v3567
  %v4190 = vpop.f32.mrf.mxu0
  %v4191 = vadd.f32 %v3197, %v4190
  %v4192 = vpop.f32.mrf.mxu0
  %v4193 = vadd.f32 %v3197, %v4192
  %4194 = vmatmul.bf16.gmra.mxu0 %v3570
  %v4195 = vpop.f32.mrf.mxu0
  %v4196 = vadd.f32 %v3197, %v4195
  %v4197 = vpop.f32.mrf.mxu0
  %v4198 = vadd.f32 %v3197, %v4197
  %4199 = vmatmul.bf16.gmra.mxu0 %v3573
  %v4200 = vpop.f32.mrf.mxu0
  %v4201 = vadd.f32 %v3197, %v4200
  %v4202 = vpop.f32.mrf.mxu0
  %v4203 = vadd.f32 %v3197, %v4202
  %4204 = vmatmul.bf16.gmra.mxu0 %v3576
  %v4205 = vpop.f32.mrf.mxu0
  %v4206 = vadd.f32 %v3197, %v4205
  %v4207 = vpop.f32.mrf.mxu0
  %v4208 = vadd.f32 %v3197, %v4207
  %4209 = vmatmul.bf16.gmra.mxu0 %v3579
  %v4210 = vpop.f32.mrf.mxu0
  %v4211 = vadd.f32 %v3197, %v4210
  %v4212 = vpop.f32.mrf.mxu0
  %v4213 = vadd.f32 %v3197, %v4212
  %4214 = vdwg.mxu0
  %v4215 = vmax.f32 %v3591, 0.0
  %v4216 = vmax.f32 %v3593, 0.0
  %v4217 = vmax.f32 %v3596, 0.0
  %v4218 = vmax.f32 %v3598, 0.0
  %v4219 = vmax.f32 %v3601, 0.0
  %v4220 = vmax.f32 %v3603, 0.0
  %v4221 = vmax.f32 %v3606, 0.0
  %v4222 = vmax.f32 %v3608, 0.0
  %v4223 = vmax.f32 %v3611, 0.0
  %v4224 = vmax.f32 %v3613, 0.0
  %v4225 = vmax.f32 %v3616, 0.0
  %v4226 = vmax.f32 %v3618, 0.0
  %v4227 = vmax.f32 %v3621, 0.0
  %v4228 = vmax.f32 %v3623, 0.0
  %v4229 = vmax.f32 %v3626, 0.0
  %v4230 = vmax.f32 %v3628, 0.0
  %v4231 = vmax.f32 %v3631, 0.0
  %v4232 = vmax.f32 %v3633, 0.0
  %v4233 = vmax.f32 %v3636, 0.0
  %v4234 = vmax.f32 %v3638, 0.0
  %v4235 = vmax.f32 %v3641, 0.0
  %v4236 = vmax.f32 %v3643, 0.0
  %v4237 = vmax.f32 %v3646, 0.0
  %v4238 = vmax.f32 %v3648, 0.0
  %v4239 = vmax.f32 %v3651, 0.0
  %v4240 = vmax.f32 %v3653, 0.0
  %v4241 = vmax.f32 %v3656, 0.0
  %v4242 = vmax.f32 %v3658, 0.0
  %v4243 = vmax.f32 %v3661, 0.0
  %v4244 = vmax.f32 %v3663, 0.0
  %v4245 = vmax.f32 %v3666, 0.0
  %v4246 = vmax.f32 %v3668, 0.0
  %v4247 = vmax.f32 %v3671, 0.0
  %v4248 = vmax.f32 %v3673, 0.0
  %v4249 = vmax.f32 %v3676, 0.0
  %v4250 = vmax.f32 %v3678, 0.0
  %v4251 = vmax.f32 %v3681, 0.0
  %v4252 = vmax.f32 %v3683, 0.0
  %v4253 = vmax.f32 %v3686, 0.0
  %v4254 = vmax.f32 %v3688, 0.0
  %v4255 = vmax.f32 %v3691, 0.0
  %v4256 = vmax.f32 %v3693, 0.0
  %v4257 = vmax.f32 %v3696, 0.0
  %v4258 = vmax.f32 %v3698, 0.0
  %v4259 = vmax.f32 %v3701, 0.0
  %v4260 = vmax.f32 %v3703, 0.0
  %v4261 = vmax.f32 %v3706, 0.0
  %v4262 = vmax.f32 %v3708, 0.0
  %v4263 = vmax.f32 %v3711, 0.0
  %v4264 = vmax.f32 %v3713, 0.0
  %v4265 = vmax.f32 %v3716, 0.0
  %v4266 = vmax.f32 %v3718, 0.0
  %v4267 = vmax.f32 %v3721, 0.0
  %v4268 = vmax.f32 %v3723, 0.0
  %v4269 = vmax.f32 %v3726, 0.0
  %v4270 = vmax.f32 %v3728, 0.0
  %v4271 = vmax.f32 %v3731, 0.0
  %v4272 = vmax.f32 %v3733, 0.0
  %v4273 = vmax.f32 %v3736, 0.0
  %v4274 = vmax.f32 %v3738, 0.0
  %v4275 = vmax.f32 %v3741, 0.0
  %v4276 = vmax.f32 %v3743, 0.0
  %v4277 = vmax.f32 %v3746, 0.0
  %v4278 = vmax.f32 %v3748, 0.0
  %v4279 = vmax.f32 %v3751, 0.0
  %v4280 = vmax.f32 %v3753, 0.0
  %v4281 = vmax.f32 %v3756, 0.0
  %v4282 = vmax.f32 %v3758, 0.0
  %v4283 = vmax.f32 %v3761, 0.0
  %v4284 = vmax.f32 %v3763, 0.0
  %v4285 = vmax.f32 %v3766, 0.0
  %v4286 = vmax.f32 %v3768, 0.0
  %v4287 = vmax.f32 %v3771, 0.0
  %v4288 = vmax.f32 %v3773, 0.0
  %v4289 = vmax.f32 %v3776, 0.0
  %v4290 = vmax.f32 %v3778, 0.0
  %v4291 = vmax.f32 %v3781, 0.0
  %v4292 = vmax.f32 %v3783, 0.0
  %v4293 = vmax.f32 %v3786, 0.0
  %v4294 = vmax.f32 %v3788, 0.0
  %v4295 = vmax.f32 %v3791, 0.0
  %v4296 = vmax.f32 %v3793, 0.0
  %v4297 = vmax.f32 %v3796, 0.0
  %v4298 = vmax.f32 %v3798, 0.0
  %v4299 = vmax.f32 %v3801, 0.0
  %v4300 = vmax.f32 %v3803, 0.0
  %v4301 = vmax.f32 %v3806, 0.0
  %v4302 = vmax.f32 %v3808, 0.0
  %v4303 = vmax.f32 %v3811, 0.0
  %v4304 = vmax.f32 %v3813, 0.0
  %v4305 = vmax.f32 %v3816, 0.0
  %v4306 = vmax.f32 %v3818, 0.0
  %v4307 = vmax.f32 %v3821, 0.0
  %v4308 = vmax.f32 %v3823, 0.0
  %v4309 = vmax.f32 %v3826, 0.0
  %v4310 = vmax.f32 %v3828, 0.0
  %v4311 = vmax.f32 %v3831, 0.0
  %v4312 = vmax.f32 %v3833, 0.0
  %v4313 = vmax.f32 %v3836, 0.0
  %v4314 = vmax.f32 %v3838, 0.0
  %v4315 = vmax.f32 %v3841, 0.0
  %v4316 = vmax.f32 %v3843, 0.0
  %v4317 = vmax.f32 %v3846, 0.0
  %v4318 = vmax.f32 %v3848, 0.0
  %v4319 = vmax.f32 %v3851, 0.0
  %v4320 = vmax.f32 %v3853, 0.0
  %v4321 = vmax.f32 %v3856, 0.0
  %v4322 = vmax.f32 %v3858, 0.0
  %v4323 = vmax.f32 %v3861, 0.0
  %v4324 = vmax.f32 %v3863, 0.0
  %v4325 = vmax.f32 %v3866, 0.0
  %v4326 = vmax.f32 %v3868, 0.0
  %v4327 = vmax.f32 %v3871, 0.0
  %v4328 = vmax.f32 %v3873, 0.0
  %v4329 = vmax.f32 %v3876, 0.0
  %v4330 = vmax.f32 %v3878, 0.0
  %v4331 = vmax.f32 %v3881, 0.0
  %v4332 = vmax.f32 %v3883, 0.0
  %v4333 = vmax.f32 %v3886, 0.0
  %v4334 = vmax.f32 %v3888, 0.0
  %v4335 = vmax.f32 %v3891, 0.0
  %v4336 = vmax.f32 %v3893, 0.0
  %v4337 = vmax.f32 %v3896, 0.0
  %v4338 = vmax.f32 %v3898, 0.0
  %v4339 = vmax.f32 %v3901, 0.0
  %v4340 = vmax.f32 %v3903, 0.0
  %v4341 = vmax.f32 %v3906, 0.0
  %v4342 = vmax.f32 %v3908, 0.0
  %v4343 = vmax.f32 %v3911, 0.0
  %v4344 = vmax.f32 %v3913, 0.0
  %v4345 = vmax.f32 %v3916, 0.0
  %v4346 = vmax.f32 %v3918, 0.0
  %v4347 = vmax.f32 %v3921, 0.0
  %v4348 = vmax.f32 %v3923, 0.0
  %v4349 = vmax.f32 %v3926, 0.0
  %v4350 = vmax.f32 %v3928, 0.0
  %v4351 = vmax.f32 %v3931, 0.0
  %v4352 = vmax.f32 %v3933, 0.0
  %v4353 = vmax.f32 %v3936, 0.0
  %v4354 = vmax.f32 %v3938, 0.0
  %v4355 = vmax.f32 %v3941, 0.0
  %v4356 = vmax.f32 %v3943, 0.0
  %v4357 = vmax.f32 %v3946, 0.0
  %v4358 = vmax.f32 %v3948, 0.0
  %v4359 = vmax.f32 %v3951, 0.0
  %v4360 = vmax.f32 %v3953, 0.0
  %v4361 = vmax.f32 %v3956, 0.0
  %v4362 = vmax.f32 %v3958, 0.0
  %v4363 = vmax.f32 %v3961, 0.0
  %v4364 = vmax.f32 %v3963, 0.0
  %v4365 = vmax.f32 %v3966, 0.0
  %v4366 = vmax.f32 %v3968, 0.0
  %v4367 = vmax.f32 %v3971, 0.0
  %v4368 = vmax.f32 %v3973, 0.0
  %v4369 = vmax.f32 %v3976, 0.0
  %v4370 = vmax.f32 %v3978, 0.0
  %v4371 = vmax.f32 %v3981, 0.0
  %v4372 = vmax.f32 %v3983, 0.0
  %v4373 = vmax.f32 %v3986, 0.0
  %v4374 = vmax.f32 %v3988, 0.0
  %v4375 = vmax.f32 %v3991, 0.0
  %v4376 = vmax.f32 %v3993, 0.0
  %v4377 = vmax.f32 %v3996, 0.0
  %v4378 = vmax.f32 %v3998, 0.0
  %v4379 = vmax.f32 %v4001, 0.0
  %v4380 = vmax.f32 %v4003, 0.0
  %v4381 = vmax.f32 %v4006, 0.0
  %v4382 = vmax.f32 %v4008, 0.0
  %v4383 = vmax.f32 %v4011, 0.0
  %v4384 = vmax.f32 %v4013, 0.0
  %v4385 = vmax.f32 %v4016, 0.0
  %v4386 = vmax.f32 %v4018, 0.0
  %v4387 = vmax.f32 %v4021, 0.0
  %v4388 = vmax.f32 %v4023, 0.0
  %v4389 = vmax.f32 %v4026, 0.0
  %v4390 = vmax.f32 %v4028, 0.0
  %v4391 = vmax.f32 %v4031, 0.0
  %v4392 = vmax.f32 %v4033, 0.0
  %v4393 = vmax.f32 %v4036, 0.0
  %v4394 = vmax.f32 %v4038, 0.0
  %v4395 = vmax.f32 %v4041, 0.0
  %v4396 = vmax.f32 %v4043, 0.0
  %v4397 = vmax.f32 %v4046, 0.0
  %v4398 = vmax.f32 %v4048, 0.0
  %v4399 = vmax.f32 %v4051, 0.0
  %v4400 = vmax.f32 %v4053, 0.0
  %v4401 = vmax.f32 %v4056, 0.0
  %v4402 = vmax.f32 %v4058, 0.0
  %v4403 = vmax.f32 %v4061, 0.0
  %v4404 = vmax.f32 %v4063, 0.0
  %v4405 = vmax.f32 %v4066, 0.0
  %v4406 = vmax.f32 %v4068, 0.0
  %v4407 = vmax.f32 %v4071, 0.0
  %v4408 = vmax.f32 %v4073, 0.0
  %v4409 = vmax.f32 %v4076, 0.0
  %v4410 = vmax.f32 %v4078, 0.0
  %v4411 = vmax.f32 %v4081, 0.0
  %v4412 = vmax.f32 %v4083, 0.0
  %v4413 = vmax.f32 %v4086, 0.0
  %v4414 = vmax.f32 %v4088, 0.0
  %v4415 = vmax.f32 %v4091, 0.0
  %v4416 = vmax.f32 %v4093, 0.0
  %v4417 = vmax.f32 %v4096, 0.0
  %v4418 = vmax.f32 %v4098, 0.0
  %v4419 = vmax.f32 %v4101, 0.0
  %v4420 = vmax.f32 %v4103, 0.0
  %v4421 = vmax.f32 %v4106, 0.0
  %v4422 = vmax.f32 %v4108, 0.0
  %v4423 = vmax.f32 %v4111, 0.0
  %v4424 = vmax.f32 %v4113, 0.0
  %v4425 = vmax.f32 %v4116, 0.0
  %v4426 = vmax.f32 %v4118, 0.0
  %v4427 = vmax.f32 %v4121, 0.0
  %v4428 = vmax.f32 %v4123, 0.0
  %v4429 = vmax.f32 %v4126, 0.0
  %v4430 = vmax.f32 %v4128, 0.0
  %v4431 = vmax.f32 %v4131, 0.0
  %v4432 = vmax.f32 %v4133, 0.0
  %v4433 = vmax.f32 %v4136, 0.0
  %v4434 = vmax.f32 %v4138, 0.0
  %v4435 = vmax.f32 %v4141, 0.0
  %v4436 = vmax.f32 %v4143, 0.0
  %v4437 = vmax.f32 %v4146, 0.0
  %v4438 = vmax.f32 %v4148, 0.0
  %v4439 = vmax.f32 %v4151, 0.0
  %v4440 = vmax.f32 %v4153, 0.0
  %v4441 = vmax.f32 %v4156, 0.0
  %v4442 = vmax.f32 %v4158, 0.0
  %v4443 = vmax.f32 %v4161, 0.0
  %v4444 = vmax.f32 %v4163, 0.0
  %v4445 = vmax.f32 %v4166, 0.0
  %v4446 = vmax.f32 %v4168, 0.0
  %v4447 = vmax.f32 %v4171, 0.0
  %v4448 = vmax.f32 %v4173, 0.0
  %v4449 = vmax.f32 %v4176, 0.0
  %v4450 = vmax.f32 %v4178, 0.0
  %v4451 = vmax.f32 %v4181, 0.0
  %v4452 = vmax.f32 %v4183, 0.0
  %v4453 = vmax.f32 %v4186, 0.0
  %v4454 = vmax.f32 %v4188, 0.0
  %v4455 = vmax.f32 %v4191, 0.0
  %v4456 = vmax.f32 %v4193, 0.0
  %v4457 = vmax.f32 %v4196, 0.0
  %v4458 = vmax.f32 %v4198, 0.0
  %v4459 = vmax.f32 %v4201, 0.0
  %v4460 = vmax.f32 %v4203, 0.0
  %v4461 = vmax.f32 %v4206, 0.0
  %v4462 = vmax.f32 %v4208, 0.0
  %v4463 = vmax.f32 %v4211, 0.0
  %v4464 = vmax.f32 %v4213, 0.0
  %4715 = vrot.lane.b32.xlu0 %v4215, 4
  %v4716 = vpop.permute.xlu0 %4715
  %4717 = vrot.lane.b32.xlu0 %v4216, 4
  %v4718 = vpop.permute.xlu0 %4717
  %4719 = vrot.lane.b32.xlu0 %v4217, 4
  %v4720 = vpop.permute.xlu0 %4719
  %4721 = vrot.lane.b32.xlu0 %v4218, 4
  %v4722 = vpop.permute.xlu0 %4721
  %4723 = vrot.lane.b32.xlu0 %v4219, 4
  %v4724 = vpop.permute.xlu0 %4723
  %4725 = vrot.lane.b32.xlu0 %v4220, 4
  %v4726 = vpop.permute.xlu0 %4725
  %4727 = vrot.lane.b32.xlu0 %v4221, 4
  %v4728 = vpop.permute.xlu0 %4727
  %4729 = vrot.lane.b32.xlu0 %v4222, 4
  %v4730 = vpop.permute.xlu0 %4729
  %4731 = vrot.lane.b32.xlu0 %v4223, 4
  %v4732 = vpop.permute.xlu0 %4731
  %4733 = vrot.lane.b32.xlu0 %v4224, 4
  %v4734 = vpop.permute.xlu0 %4733
  %4735 = vrot.lane.b32.xlu0 %v4225, 4
  %v4736 = vpop.permute.xlu0 %4735
  %4737 = vrot.lane.b32.xlu0 %v4226, 4
  %v4738 = vpop.permute.xlu0 %4737
  %4739 = vrot.lane.b32.xlu0 %v4227, 4
  %v4740 = vpop.permute.xlu0 %4739
  %4741 = vrot.lane.b32.xlu0 %v4228, 4
  %v4742 = vpop.permute.xlu0 %4741
  %4743 = vrot.lane.b32.xlu0 %v4229, 4
  %v4744 = vpop.permute.xlu0 %4743
  %4745 = vrot.lane.b32.xlu0 %v4230, 4
  %v4746 = vpop.permute.xlu0 %4745
  %4747 = vrot.lane.b32.xlu0 %v4231, 4
  %v4748 = vpop.permute.xlu0 %4747
  %4749 = vrot.lane.b32.xlu0 %v4232, 4
  %v4750 = vpop.permute.xlu0 %4749
  %4751 = vrot.lane.b32.xlu0 %v4233, 4
  %v4752 = vpop.permute.xlu0 %4751
  %4753 = vrot.lane.b32.xlu0 %v4234, 4
  %v4754 = vpop.permute.xlu0 %4753
  %4755 = vrot.lane.b32.xlu0 %v4235, 4
  %v4756 = vpop.permute.xlu0 %4755
  %4757 = vrot.lane.b32.xlu0 %v4236, 4
  %v4758 = vpop.permute.xlu0 %4757
  %4759 = vrot.lane.b32.xlu0 %v4237, 4
  %v4760 = vpop.permute.xlu0 %4759
  %4761 = vrot.lane.b32.xlu0 %v4238, 4
  %v4762 = vpop.permute.xlu0 %4761
  %4763 = vrot.lane.b32.xlu0 %v4239, 4
  %v4764 = vpop.permute.xlu0 %4763
  %4765 = vrot.lane.b32.xlu0 %v4240, 4
  %v4766 = vpop.permute.xlu0 %4765
  %4767 = vrot.lane.b32.xlu0 %v4241, 4
  %v4768 = vpop.permute.xlu0 %4767
  %4769 = vrot.lane.b32.xlu0 %v4242, 4
  %v4770 = vpop.permute.xlu0 %4769
  %4771 = vrot.lane.b32.xlu0 %v4243, 4
  %v4772 = vpop.permute.xlu0 %4771
  %4773 = vrot.lane.b32.xlu0 %v4244, 4
  %v4774 = vpop.permute.xlu0 %4773
  %4775 = vrot.lane.b32.xlu0 %v4245, 4
  %v4776 = vpop.permute.xlu0 %4775
  %4777 = vrot.lane.b32.xlu0 %v4246, 4
  %v4778 = vpop.permute.xlu0 %4777
  %4779 = vrot.lane.b32.xlu0 %v4247, 4
  %v4780 = vpop.permute.xlu0 %4779
  %4781 = vrot.lane.b32.xlu0 %v4248, 4
  %v4782 = vpop.permute.xlu0 %4781
  %4783 = vrot.lane.b32.xlu0 %v4249, 4
  %v4784 = vpop.permute.xlu0 %4783
  %4785 = vrot.lane.b32.xlu0 %v4250, 4
  %v4786 = vpop.permute.xlu0 %4785
  %4787 = vrot.lane.b32.xlu0 %v4251, 4
  %v4788 = vpop.permute.xlu0 %4787
  %4789 = vrot.lane.b32.xlu0 %v4252, 4
  %v4790 = vpop.permute.xlu0 %4789
  %4791 = vrot.lane.b32.xlu0 %v4253, 4
  %v4792 = vpop.permute.xlu0 %4791
  %4793 = vrot.lane.b32.xlu0 %v4254, 4
  %v4794 = vpop.permute.xlu0 %4793
  %4795 = vrot.lane.b32.xlu0 %v4255, 4
  %v4796 = vpop.permute.xlu0 %4795
  %4797 = vrot.lane.b32.xlu0 %v4256, 4
  %v4798 = vpop.permute.xlu0 %4797
  %4799 = vrot.lane.b32.xlu0 %v4257, 4
  %v4800 = vpop.permute.xlu0 %4799
  %4801 = vrot.lane.b32.xlu0 %v4258, 4
  %v4802 = vpop.permute.xlu0 %4801
  %4803 = vrot.lane.b32.xlu0 %v4259, 4
  %v4804 = vpop.permute.xlu0 %4803
  %4805 = vrot.lane.b32.xlu0 %v4260, 4
  %v4806 = vpop.permute.xlu0 %4805
  %4807 = vrot.lane.b32.xlu0 %v4261, 4
  %v4808 = vpop.permute.xlu0 %4807
  %4809 = vrot.lane.b32.xlu0 %v4262, 4
  %v4810 = vpop.permute.xlu0 %4809
  %4811 = vrot.lane.b32.xlu0 %v4263, 4
  %v4812 = vpop.permute.xlu0 %4811
  %4813 = vrot.lane.b32.xlu0 %v4264, 4
  %v4814 = vpop.permute.xlu0 %4813
  %4815 = vrot.lane.b32.xlu0 %v4265, 4
  %v4816 = vpop.permute.xlu0 %4815
  %4817 = vrot.lane.b32.xlu0 %v4266, 4
  %v4818 = vpop.permute.xlu0 %4817
  %4819 = vrot.lane.b32.xlu0 %v4267, 4
  %v4820 = vpop.permute.xlu0 %4819
  %4821 = vrot.lane.b32.xlu0 %v4268, 4
  %v4822 = vpop.permute.xlu0 %4821
  %4823 = vrot.lane.b32.xlu0 %v4269, 4
  %v4824 = vpop.permute.xlu0 %4823
  %4825 = vrot.lane.b32.xlu0 %v4270, 4
  %v4826 = vpop.permute.xlu0 %4825
  %4827 = vrot.lane.b32.xlu0 %v4271, 4
  %v4828 = vpop.permute.xlu0 %4827
  %4829 = vrot.lane.b32.xlu0 %v4272, 4
  %v4830 = vpop.permute.xlu0 %4829
  %4831 = vrot.lane.b32.xlu0 %v4273, 4
  %v4832 = vpop.permute.xlu0 %4831
  %4833 = vrot.lane.b32.xlu0 %v4274, 4
  %v4834 = vpop.permute.xlu0 %4833
  %4835 = vrot.lane.b32.xlu0 %v4275, 4
  %v4836 = vpop.permute.xlu0 %4835
  %4837 = vrot.lane.b32.xlu0 %v4276, 4
  %v4838 = vpop.permute.xlu0 %4837
  %4839 = vrot.lane.b32.xlu0 %v4277, 4
  %v4840 = vpop.permute.xlu0 %4839
  %4841 = vrot.lane.b32.xlu0 %v4278, 4
  %v4842 = vpop.permute.xlu0 %4841
  %4843 = vrot.lane.b32.xlu0 %v4279, 4
  %v4844 = vpop.permute.xlu0 %4843
  %4845 = vrot.lane.b32.xlu0 %v4280, 4
  %v4846 = vpop.permute.xlu0 %4845
  %4847 = vrot.lane.b32.xlu0 %v4281, 4
  %v4848 = vpop.permute.xlu0 %4847
  %4849 = vrot.lane.b32.xlu0 %v4282, 4
  %v4850 = vpop.permute.xlu0 %4849
  %4851 = vrot.lane.b32.xlu0 %v4283, 4
  %v4852 = vpop.permute.xlu0 %4851
  %4853 = vrot.lane.b32.xlu0 %v4284, 4
  %v4854 = vpop.permute.xlu0 %4853
  %4855 = vrot.lane.b32.xlu0 %v4285, 4
  %v4856 = vpop.permute.xlu0 %4855
  %4857 = vrot.lane.b32.xlu0 %v4286, 4
  %v4858 = vpop.permute.xlu0 %4857
  %4859 = vrot.lane.b32.xlu0 %v4287, 4
  %v4860 = vpop.permute.xlu0 %4859
  %4861 = vrot.lane.b32.xlu0 %v4288, 4
  %v4862 = vpop.permute.xlu0 %4861
  %4863 = vrot.lane.b32.xlu0 %v4289, 4
  %v4864 = vpop.permute.xlu0 %4863
  %4865 = vrot.lane.b32.xlu0 %v4290, 4
  %v4866 = vpop.permute.xlu0 %4865
  %4867 = vrot.lane.b32.xlu0 %v4291, 4
  %v4868 = vpop.permute.xlu0 %4867
  %4869 = vrot.lane.b32.xlu0 %v4292, 4
  %v4870 = vpop.permute.xlu0 %4869
  %4871 = vrot.lane.b32.xlu0 %v4293, 4
  %v4872 = vpop.permute.xlu0 %4871
  %4873 = vrot.lane.b32.xlu0 %v4294, 4
  %v4874 = vpop.permute.xlu0 %4873
  %4875 = vrot.lane.b32.xlu0 %v4295, 4
  %v4876 = vpop.permute.xlu0 %4875
  %4877 = vrot.lane.b32.xlu0 %v4296, 4
  %v4878 = vpop.permute.xlu0 %4877
  %4879 = vrot.lane.b32.xlu0 %v4297, 4
  %v4880 = vpop.permute.xlu0 %4879
  %4881 = vrot.lane.b32.xlu0 %v4298, 4
  %v4882 = vpop.permute.xlu0 %4881
  %4883 = vrot.lane.b32.xlu0 %v4299, 4
  %v4884 = vpop.permute.xlu0 %4883
  %4885 = vrot.lane.b32.xlu0 %v4300, 4
  %v4886 = vpop.permute.xlu0 %4885
  %4887 = vrot.lane.b32.xlu0 %v4301, 4
  %v4888 = vpop.permute.xlu0 %4887
  %4889 = vrot.lane.b32.xlu0 %v4302, 4
  %v4890 = vpop.permute.xlu0 %4889
  %4891 = vrot.lane.b32.xlu0 %v4303, 4
  %v4892 = vpop.permute.xlu0 %4891
  %4893 = vrot.lane.b32.xlu0 %v4304, 4
  %v4894 = vpop.permute.xlu0 %4893
  %4895 = vrot.lane.b32.xlu0 %v4305, 4
  %v4896 = vpop.permute.xlu0 %4895
  %4897 = vrot.lane.b32.xlu0 %v4306, 4
  %v4898 = vpop.permute.xlu0 %4897
  %4899 = vrot.lane.b32.xlu0 %v4307, 4
  %v4900 = vpop.permute.xlu0 %4899
  %4901 = vrot.lane.b32.xlu0 %v4308, 4
  %v4902 = vpop.permute.xlu0 %4901
  %4903 = vrot.lane.b32.xlu0 %v4309, 4
  %v4904 = vpop.permute.xlu0 %4903
  %4905 = vrot.lane.b32.xlu0 %v4310, 4
  %v4906 = vpop.permute.xlu0 %4905
  %4907 = vrot.lane.b32.xlu0 %v4311, 4
  %v4908 = vpop.permute.xlu0 %4907
  %4909 = vrot.lane.b32.xlu0 %v4312, 4
  %v4910 = vpop.permute.xlu0 %4909
  %4911 = vrot.lane.b32.xlu0 %v4313, 4
  %v4912 = vpop.permute.xlu0 %4911
  %4913 = vrot.lane.b32.xlu0 %v4314, 4
  %v4914 = vpop.permute.xlu0 %4913
  %4915 = vrot.lane.b32.xlu0 %v4315, 4
  %v4916 = vpop.permute.xlu0 %4915
  %4917 = vrot.lane.b32.xlu0 %v4316, 4
  %v4918 = vpop.permute.xlu0 %4917
  %4919 = vrot.lane.b32.xlu0 %v4317, 4
  %v4920 = vpop.permute.xlu0 %4919
  %4921 = vrot.lane.b32.xlu0 %v4318, 4
  %v4922 = vpop.permute.xlu0 %4921
  %4923 = vrot.lane.b32.xlu0 %v4319, 4
  %v4924 = vpop.permute.xlu0 %4923
  %4925 = vrot.lane.b32.xlu0 %v4320, 4
  %v4926 = vpop.permute.xlu0 %4925
  %4927 = vrot.lane.b32.xlu0 %v4321, 4
  %v4928 = vpop.permute.xlu0 %4927
  %4929 = vrot.lane.b32.xlu0 %v4322, 4
  %v4930 = vpop.permute.xlu0 %4929
  %4931 = vrot.lane.b32.xlu0 %v4323, 4
  %v4932 = vpop.permute.xlu0 %4931
  %4933 = vrot.lane.b32.xlu0 %v4324, 4
  %v4934 = vpop.permute.xlu0 %4933
  %4935 = vrot.lane.b32.xlu0 %v4325, 4
  %v4936 = vpop.permute.xlu0 %4935
  %4937 = vrot.lane.b32.xlu0 %v4326, 4
  %v4938 = vpop.permute.xlu0 %4937
  %4939 = vrot.lane.b32.xlu0 %v4327, 4
  %v4940 = vpop.permute.xlu0 %4939
  %4941 = vrot.lane.b32.xlu0 %v4328, 4
  %v4942 = vpop.permute.xlu0 %4941
  %4943 = vrot.lane.b32.xlu0 %v4329, 4
  %v4944 = vpop.permute.xlu0 %4943
  %4945 = vrot.lane.b32.xlu0 %v4330, 4
  %v4946 = vpop.permute.xlu0 %4945
  %4947 = vrot.lane.b32.xlu0 %v4331, 4
  %v4948 = vpop.permute.xlu0 %4947
  %4949 = vrot.lane.b32.xlu0 %v4332, 4
  %v4950 = vpop.permute.xlu0 %4949
  %4951 = vrot.lane.b32.xlu0 %v4333, 4
  %v4952 = vpop.permute.xlu0 %4951
  %4953 = vrot.lane.b32.xlu0 %v4334, 4
  %v4954 = vpop.permute.xlu0 %4953
  %4955 = vrot.lane.b32.xlu0 %v4335, 4
  %v4956 = vpop.permute.xlu0 %4955
  %4957 = vrot.lane.b32.xlu0 %v4336, 4
  %v4958 = vpop.permute.xlu0 %4957
  %4959 = vrot.lane.b32.xlu0 %v4337, 4
  %v4960 = vpop.permute.xlu0 %4959
  %4961 = vrot.lane.b32.xlu0 %v4338, 4
  %v4962 = vpop.permute.xlu0 %4961
  %4963 = vrot.lane.b32.xlu0 %v4339, 4
  %v4964 = vpop.permute.xlu0 %4963
  %4965 = vrot.lane.b32.xlu0 %v4340, 4
  %v4966 = vpop.permute.xlu0 %4965
  %4967 = vrot.lane.b32.xlu0 %v4341, 4
  %v4968 = vpop.permute.xlu0 %4967
  %4969 = vrot.lane.b32.xlu0 %v4342, 4
  %v4970 = vpop.permute.xlu0 %4969
  %4971 = vrot.lane.b32.xlu0 %v4343, 4
  %v4972 = vpop.permute.xlu0 %4971
  %4973 = vrot.lane.b32.xlu0 %v4344, 4
  %v4974 = vpop.permute.xlu0 %4973
  %4975 = vrot.lane.b32.xlu0 %v4345, 4
  %v4976 = vpop.permute.xlu0 %4975
  %4977 = vrot.lane.b32.xlu0 %v4346, 4
  %v4978 = vpop.permute.xlu0 %4977
  %4979 = vrot.lane.b32.xlu0 %v4347, 4
  %v4980 = vpop.permute.xlu0 %4979
  %4981 = vrot.lane.b32.xlu0 %v4348, 4
  %v4982 = vpop.permute.xlu0 %4981
  %4983 = vrot.lane.b32.xlu0 %v4349, 4
  %v4984 = vpop.permute.xlu0 %4983
  %4985 = vrot.lane.b32.xlu0 %v4350, 4
  %v4986 = vpop.permute.xlu0 %4985
  %4987 = vrot.lane.b32.xlu0 %v4351, 4
  %v4988 = vpop.permute.xlu0 %4987
  %4989 = vrot.lane.b32.xlu0 %v4352, 4
  %v4990 = vpop.permute.xlu0 %4989
  %4991 = vrot.lane.b32.xlu0 %v4353, 4
  %v4992 = vpop.permute.xlu0 %4991
  %4993 = vrot.lane.b32.xlu0 %v4354, 4
  %v4994 = vpop.permute.xlu0 %4993
  %4995 = vrot.lane.b32.xlu0 %v4355, 4
  %v4996 = vpop.permute.xlu0 %4995
  %4997 = vrot.lane.b32.xlu0 %v4356, 4
  %v4998 = vpop.permute.xlu0 %4997
  %4999 = vrot.lane.b32.xlu0 %v4357, 4
  %v5000 = vpop.permute.xlu0 %4999
  %5001 = vrot.lane.b32.xlu0 %v4358, 4
  %v5002 = vpop.permute.xlu0 %5001
  %5003 = vrot.lane.b32.xlu0 %v4359, 4
  %v5004 = vpop.permute.xlu0 %5003
  %5005 = vrot.lane.b32.xlu0 %v4360, 4
  %v5006 = vpop.permute.xlu0 %5005
  %5007 = vrot.lane.b32.xlu0 %v4361, 4
  %v5008 = vpop.permute.xlu0 %5007
  %5009 = vrot.lane.b32.xlu0 %v4362, 4
  %v5010 = vpop.permute.xlu0 %5009
  %5011 = vrot.lane.b32.xlu0 %v4363, 4
  %v5012 = vpop.permute.xlu0 %5011
  %5013 = vrot.lane.b32.xlu0 %v4364, 4
  %v5014 = vpop.permute.xlu0 %5013
  %5015 = vrot.lane.b32.xlu0 %v4365, 4
  %v5016 = vpop.permute.xlu0 %5015
  %5017 = vrot.lane.b32.xlu0 %v4366, 4
  %v5018 = vpop.permute.xlu0 %5017
  %5019 = vrot.lane.b32.xlu0 %v4367, 4
  %v5020 = vpop.permute.xlu0 %5019
  %5021 = vrot.lane.b32.xlu0 %v4368, 4
  %v5022 = vpop.permute.xlu0 %5021
  %5023 = vrot.lane.b32.xlu0 %v4369, 4
  %v5024 = vpop.permute.xlu0 %5023
  %5025 = vrot.lane.b32.xlu0 %v4370, 4
  %v5026 = vpop.permute.xlu0 %5025
  %5027 = vrot.lane.b32.xlu0 %v4371, 4
  %v5028 = vpop.permute.xlu0 %5027
  %5029 = vrot.lane.b32.xlu0 %v4372, 4
  %v5030 = vpop.permute.xlu0 %5029
  %5031 = vrot.lane.b32.xlu0 %v4373, 4
  %v5032 = vpop.permute.xlu0 %5031
  %5033 = vrot.lane.b32.xlu0 %v4374, 4
  %v5034 = vpop.permute.xlu0 %5033
  %5035 = vrot.lane.b32.xlu0 %v4375, 4
  %v5036 = vpop.permute.xlu0 %5035
  %5037 = vrot.lane.b32.xlu0 %v4376, 4
  %v5038 = vpop.permute.xlu0 %5037
  %5039 = vrot.lane.b32.xlu0 %v4377, 4
  %v5040 = vpop.permute.xlu0 %5039
  %5041 = vrot.lane.b32.xlu0 %v4378, 4
  %v5042 = vpop.permute.xlu0 %5041
  %5043 = vrot.lane.b32.xlu0 %v4379, 4
  %v5044 = vpop.permute.xlu0 %5043
  %5045 = vrot.lane.b32.xlu0 %v4380, 4
  %v5046 = vpop.permute.xlu0 %5045
  %5047 = vrot.lane.b32.xlu0 %v4381, 4
  %v5048 = vpop.permute.xlu0 %5047
  %5049 = vrot.lane.b32.xlu0 %v4382, 4
  %v5050 = vpop.permute.xlu0 %5049
  %5051 = vrot.lane.b32.xlu0 %v4383, 4
  %v5052 = vpop.permute.xlu0 %5051
  %5053 = vrot.lane.b32.xlu0 %v4384, 4
  %v5054 = vpop.permute.xlu0 %5053
  %5055 = vrot.lane.b32.xlu0 %v4385, 4
  %v5056 = vpop.permute.xlu0 %5055
  %5057 = vrot.lane.b32.xlu0 %v4386, 4
  %v5058 = vpop.permute.xlu0 %5057
  %5059 = vrot.lane.b32.xlu0 %v4387, 4
  %v5060 = vpop.permute.xlu0 %5059
  %5061 = vrot.lane.b32.xlu0 %v4388, 4
  %v5062 = vpop.permute.xlu0 %5061
  %5063 = vrot.lane.b32.xlu0 %v4389, 4
  %v5064 = vpop.permute.xlu0 %5063
  %5065 = vrot.lane.b32.xlu0 %v4390, 4
  %v5066 = vpop.permute.xlu0 %5065
  %5067 = vrot.lane.b32.xlu0 %v4391, 4
  %v5068 = vpop.permute.xlu0 %5067
  %5069 = vrot.lane.b32.xlu0 %v4392, 4
  %v5070 = vpop.permute.xlu0 %5069
  %5071 = vrot.lane.b32.xlu0 %v4393, 4
  %v5072 = vpop.permute.xlu0 %5071
  %5073 = vrot.lane.b32.xlu0 %v4394, 4
  %v5074 = vpop.permute.xlu0 %5073
  %5075 = vrot.lane.b32.xlu0 %v4395, 4
  %v5076 = vpop.permute.xlu0 %5075
  %5077 = vrot.lane.b32.xlu0 %v4396, 4
  %v5078 = vpop.permute.xlu0 %5077
  %5079 = vrot.lane.b32.xlu0 %v4397, 4
  %v5080 = vpop.permute.xlu0 %5079
  %5081 = vrot.lane.b32.xlu0 %v4398, 4
  %v5082 = vpop.permute.xlu0 %5081
  %5083 = vrot.lane.b32.xlu0 %v4399, 4
  %v5084 = vpop.permute.xlu0 %5083
  %5085 = vrot.lane.b32.xlu0 %v4400, 4
  %v5086 = vpop.permute.xlu0 %5085
  %5087 = vrot.lane.b32.xlu0 %v4401, 4
  %v5088 = vpop.permute.xlu0 %5087
  %5089 = vrot.lane.b32.xlu0 %v4402, 4
  %v5090 = vpop.permute.xlu0 %5089
  %5091 = vrot.lane.b32.xlu0 %v4403, 4
  %v5092 = vpop.permute.xlu0 %5091
  %5093 = vrot.lane.b32.xlu0 %v4404, 4
  %v5094 = vpop.permute.xlu0 %5093
  %5095 = vrot.lane.b32.xlu0 %v4405, 4
  %v5096 = vpop.permute.xlu0 %5095
  %5097 = vrot.lane.b32.xlu0 %v4406, 4
  %v5098 = vpop.permute.xlu0 %5097
  %5099 = vrot.lane.b32.xlu0 %v4407, 4
  %v5100 = vpop.permute.xlu0 %5099
  %5101 = vrot.lane.b32.xlu0 %v4408, 4
  %v5102 = vpop.permute.xlu0 %5101
  %5103 = vrot.lane.b32.xlu0 %v4409, 4
  %v5104 = vpop.permute.xlu0 %5103
  %5105 = vrot.lane.b32.xlu0 %v4410, 4
  %v5106 = vpop.permute.xlu0 %5105
  %5107 = vrot.lane.b32.xlu0 %v4411, 4
  %v5108 = vpop.permute.xlu0 %5107
  %5109 = vrot.lane.b32.xlu0 %v4412, 4
  %v5110 = vpop.permute.xlu0 %5109
  %5111 = vrot.lane.b32.xlu0 %v4413, 4
  %v5112 = vpop.permute.xlu0 %5111
  %5113 = vrot.lane.b32.xlu0 %v4414, 4
  %v5114 = vpop.permute.xlu0 %5113
  %5115 = vrot.lane.b32.xlu0 %v4415, 4
  %v5116 = vpop.permute.xlu0 %5115
  %5117 = vrot.lane.b32.xlu0 %v4416, 4
  %v5118 = vpop.permute.xlu0 %5117
  %5119 = vrot.lane.b32.xlu0 %v4417, 4
  %v5120 = vpop.permute.xlu0 %5119
  %5121 = vrot.lane.b32.xlu0 %v4418, 4
  %v5122 = vpop.permute.xlu0 %5121
  %5123 = vrot.lane.b32.xlu0 %v4419, 4
  %v5124 = vpop.permute.xlu0 %5123
  %5125 = vrot.lane.b32.xlu0 %v4420, 4
  %v5126 = vpop.permute.xlu0 %5125
  %5127 = vrot.lane.b32.xlu0 %v4421, 4
  %v5128 = vpop.permute.xlu0 %5127
  %5129 = vrot.lane.b32.xlu0 %v4422, 4
  %v5130 = vpop.permute.xlu0 %5129
  %5131 = vrot.lane.b32.xlu0 %v4423, 4
  %v5132 = vpop.permute.xlu0 %5131
  %5133 = vrot.lane.b32.xlu0 %v4424, 4
  %v5134 = vpop.permute.xlu0 %5133
  %5135 = vrot.lane.b32.xlu0 %v4425, 4
  %v5136 = vpop.permute.xlu0 %5135
  %5137 = vrot.lane.b32.xlu0 %v4426, 4
  %v5138 = vpop.permute.xlu0 %5137
  %5139 = vrot.lane.b32.xlu0 %v4427, 4
  %v5140 = vpop.permute.xlu0 %5139
  %5141 = vrot.lane.b32.xlu0 %v4428, 4
  %v5142 = vpop.permute.xlu0 %5141
  %5143 = vrot.lane.b32.xlu0 %v4429, 4
  %v5144 = vpop.permute.xlu0 %5143
  %5145 = vrot.lane.b32.xlu0 %v4430, 4
  %v5146 = vpop.permute.xlu0 %5145
  %5147 = vrot.lane.b32.xlu0 %v4431, 4
  %v5148 = vpop.permute.xlu0 %5147
  %5149 = vrot.lane.b32.xlu0 %v4432, 4
  %v5150 = vpop.permute.xlu0 %5149
  %5151 = vrot.lane.b32.xlu0 %v4433, 4
  %v5152 = vpop.permute.xlu0 %5151
  %5153 = vrot.lane.b32.xlu0 %v4434, 4
  %v5154 = vpop.permute.xlu0 %5153
  %5155 = vrot.lane.b32.xlu0 %v4435, 4
  %v5156 = vpop.permute.xlu0 %5155
  %5157 = vrot.lane.b32.xlu0 %v4436, 4
  %v5158 = vpop.permute.xlu0 %5157
  %5159 = vrot.lane.b32.xlu0 %v4437, 4
  %v5160 = vpop.permute.xlu0 %5159
  %5161 = vrot.lane.b32.xlu0 %v4438, 4
  %v5162 = vpop.permute.xlu0 %5161
  %5163 = vrot.lane.b32.xlu0 %v4439, 4
  %v5164 = vpop.permute.xlu0 %5163
  %5165 = vrot.lane.b32.xlu0 %v4440, 4
  %v5166 = vpop.permute.xlu0 %5165
  %5167 = vrot.lane.b32.xlu0 %v4441, 4
  %v5168 = vpop.permute.xlu0 %5167
  %5169 = vrot.lane.b32.xlu0 %v4442, 4
  %v5170 = vpop.permute.xlu0 %5169
  %5171 = vrot.lane.b32.xlu0 %v4443, 4
  %v5172 = vpop.permute.xlu0 %5171
  %5173 = vrot.lane.b32.xlu0 %v4444, 4
  %v5174 = vpop.permute.xlu0 %5173
  %5175 = vrot.lane.b32.xlu0 %v4445, 4
  %v5176 = vpop.permute.xlu0 %5175
  %5177 = vrot.lane.b32.xlu0 %v4446, 4
  %v5178 = vpop.permute.xlu0 %5177
  %5179 = vrot.lane.b32.xlu0 %v4447, 4
  %v5180 = vpop.permute.xlu0 %5179
  %5181 = vrot.lane.b32.xlu0 %v4448, 4
  %v5182 = vpop.permute.xlu0 %5181
  %5183 = vrot.lane.b32.xlu0 %v4449, 4
  %v5184 = vpop.permute.xlu0 %5183
  %5185 = vrot.lane.b32.xlu0 %v4450, 4
  %v5186 = vpop.permute.xlu0 %5185
  %5187 = vrot.lane.b32.xlu0 %v4451, 4
  %v5188 = vpop.permute.xlu0 %5187
  %5189 = vrot.lane.b32.xlu0 %v4452, 4
  %v5190 = vpop.permute.xlu0 %5189
  %5191 = vrot.lane.b32.xlu0 %v4453, 4
  %v5192 = vpop.permute.xlu0 %5191
  %5193 = vrot.lane.b32.xlu0 %v4454, 4
  %v5194 = vpop.permute.xlu0 %5193
  %5195 = vrot.lane.b32.xlu0 %v4455, 4
  %v5196 = vpop.permute.xlu0 %5195
  %5197 = vrot.lane.b32.xlu0 %v4456, 4
  %v5198 = vpop.permute.xlu0 %5197
  %5199 = vrot.lane.b32.xlu0 %v4457, 4
  %v5200 = vpop.permute.xlu0 %5199
  %5201 = vrot.lane.b32.xlu0 %v4458, 4
  %v5202 = vpop.permute.xlu0 %5201
  %5203 = vrot.lane.b32.xlu0 %v4459, 4
  %v5204 = vpop.permute.xlu0 %5203
  %5205 = vrot.lane.b32.xlu0 %v4460, 4
  %v5206 = vpop.permute.xlu0 %5205
  %5207 = vrot.lane.b32.xlu0 %v4461, 4
  %v5208 = vpop.permute.xlu0 %5207
  %5209 = vrot.lane.b32.xlu0 %v4462, 4
  %v5210 = vpop.permute.xlu0 %5209
  %5211 = vrot.lane.b32.xlu0 %v4463, 4
  %v5212 = vpop.permute.xlu0 %5211
  %5213 = vrot.lane.b32.xlu0 %v4464, 4
  %v5214 = vpop.permute.xlu0 %5213
  %vm5465 = vcmask 31744
  %v5466 = vsel %vm5465, %v27, %v4716
  %v5467 = vsel %vm5465, %v28, %v4718
  %v5468 = vsel %vm5465, %v29, %v4720
  %v5469 = vsel %vm5465, %v30, %v4722
  %v5470 = vsel %vm5465, %v31, %v4724
  %v5471 = vsel %vm5465, %v32, %v4726
  %v5472 = vsel %vm5465, %v33, %v4728
  %v5473 = vsel %vm5465, %v34, %v4730
  %v5474 = vsel %vm5465, %v35, %v4732
  %v5475 = vsel %vm5465, %v36, %v4734
  %v5476 = vsel %vm5465, %v37, %v4736
  %v5477 = vsel %vm5465, %v38, %v4738
  %v5478 = vsel %vm5465, %v39, %v4740
  %v5479 = vsel %vm5465, %v40, %v4742
  %v5480 = vsel %vm5465, %v41, %v4744
  %v5481 = vsel %vm5465, %v42, %v4746
  %v5482 = vsel %vm5465, %v43, %v4748
  %v5483 = vsel %vm5465, %v44, %v4750
  %v5484 = vsel %vm5465, %v45, %v4752
  %v5485 = vsel %vm5465, %v46, %v4754
  %v5486 = vsel %vm5465, %v47, %v4756
  %v5487 = vsel %vm5465, %v48, %v4758
  %v5488 = vsel %vm5465, %v49, %v4760
  %v5489 = vsel %vm5465, %v50, %v4762
  %v5490 = vsel %vm5465, %v51, %v4764
  %v5491 = vsel %vm5465, %v52, %v4766
  %v5492 = vsel %vm5465, %v53, %v4768
  %v5493 = vsel %vm5465, %v54, %v4770
  %v5494 = vsel %vm5465, %v55, %v4772
  %v5495 = vsel %vm5465, %v56, %v4774
  %v5496 = vsel %vm5465, %v57, %v4776
  %v5497 = vsel %vm5465, %v58, %v4778
  %v5498 = vsel %vm5465, %v59, %v4780
  %v5499 = vsel %vm5465, %v60, %v4782
  %v5500 = vsel %vm5465, %v61, %v4784
  %v5501 = vsel %vm5465, %v62, %v4786
  %v5502 = vsel %vm5465, %v63, %v4788
  %v5503 = vsel %vm5465, %v64, %v4790
  %v5504 = vsel %vm5465, %v65, %v4792
  %v5505 = vsel %vm5465, %v66, %v4794
  %v5506 = vsel %vm5465, %v67, %v4796
  %v5507 = vsel %vm5465, %v68, %v4798
  %v5508 = vsel %vm5465, %v69, %v4800
  %v5509 = vsel %vm5465, %v70, %v4802
  %v5510 = vsel %vm5465, %v71, %v4804
  %v5511 = vsel %vm5465, %v72, %v4806
  %v5512 = vsel %vm5465, %v73, %v4808
  %v5513 = vsel %vm5465, %v74, %v4810
  %v5514 = vsel %vm5465, %v75, %v4812
  %v5515 = vsel %vm5465, %v76, %v4814
  %v5516 = vsel %vm5465, %v77, %v4816
  %v5517 = vsel %vm5465, %v78, %v4818
  %v5518 = vsel %vm5465, %v79, %v4820
  %v5519 = vsel %vm5465, %v80, %v4822
  %v5520 = vsel %vm5465, %v81, %v4824
  %v5521 = vsel %vm5465, %v82, %v4826
  %v5522 = vsel %vm5465, %v83, %v4828
  %v5523 = vsel %vm5465, %v84, %v4830
  %v5524 = vsel %vm5465, %v85, %v4832
  %v5525 = vsel %vm5465, %v86, %v4834
  %v5526 = vsel %vm5465, %v87, %v4836
  %v5527 = vsel %vm5465, %v88, %v4838
  %v5528 = vsel %vm5465, %v89, %v4840
  %v5529 = vsel %vm5465, %v90, %v4842
  %v5530 = vsel %vm5465, %v91, %v4844
  %v5531 = vsel %vm5465, %v92, %v4846
  %v5532 = vsel %vm5465, %v93, %v4848
  %v5533 = vsel %vm5465, %v94, %v4850
  %v5534 = vsel %vm5465, %v95, %v4852
  %v5535 = vsel %vm5465, %v96, %v4854
  %v5536 = vsel %vm5465, %v97, %v4856
  %v5537 = vsel %vm5465, %v98, %v4858
  %v5538 = vsel %vm5465, %v99, %v4860
  %v5539 = vsel %vm5465, %v100, %v4862
  %v5540 = vsel %vm5465, %v101, %v4864
  %v5541 = vsel %vm5465, %v102, %v4866
  %v5542 = vsel %vm5465, %v103, %v4868
  %v5543 = vsel %vm5465, %v104, %v4870
  %v5544 = vsel %vm5465, %v105, %v4872
  %v5545 = vsel %vm5465, %v106, %v4874
  %v5546 = vsel %vm5465, %v107, %v4876
  %v5547 = vsel %vm5465, %v108, %v4878
  %v5548 = vsel %vm5465, %v109, %v4880
  %v5549 = vsel %vm5465, %v110, %v4882
  %v5550 = vsel %vm5465, %v111, %v4884
  %v5551 = vsel %vm5465, %v112, %v4886
  %v5552 = vsel %vm5465, %v113, %v4888
  %v5553 = vsel %vm5465, %v114, %v4890
  %v5554 = vsel %vm5465, %v115, %v4892
  %v5555 = vsel %vm5465, %v116, %v4894
  %v5556 = vsel %vm5465, %v117, %v4896
  %v5557 = vsel %vm5465, %v118, %v4898
  %v5558 = vsel %vm5465, %v119, %v4900
  %v5559 = vsel %vm5465, %v120, %v4902
  %v5560 = vsel %vm5465, %v121, %v4904
  %v5561 = vsel %vm5465, %v122, %v4906
  %v5562 = vsel %vm5465, %v123, %v4908
  %v5563 = vsel %vm5465, %v124, %v4910
  %v5564 = vsel %vm5465, %v125, %v4912
  %v5565 = vsel %vm5465, %v126, %v4914
  %v5566 = vsel %vm5465, %v127, %v4916
  %v5567 = vsel %vm5465, %v128, %v4918
  %v5568 = vsel %vm5465, %v129, %v4920
  %v5569 = vsel %vm5465, %v130, %v4922
  %v5570 = vsel %vm5465, %v131, %v4924
  %v5571 = vsel %vm5465, %v132, %v4926
  %v5572 = vsel %vm5465, %v133, %v4928
  %v5573 = vsel %vm5465, %v134, %v4930
  %v5574 = vsel %vm5465, %v135, %v4932
  %v5575 = vsel %vm5465, %v136, %v4934
  %v5576 = vsel %vm5465, %v137, %v4936
  %v5577 = vsel %vm5465, %v138, %v4938
  %v5578 = vsel %vm5465, %v139, %v4940
  %v5579 = vsel %vm5465, %v140, %v4942
  %v5580 = vsel %vm5465, %v141, %v4944
  %v5581 = vsel %vm5465, %v142, %v4946
  %v5582 = vsel %vm5465, %v143, %v4948
  %v5583 = vsel %vm5465, %v144, %v4950
  %v5584 = vsel %vm5465, %v145, %v4952
  %v5585 = vsel %vm5465, %v146, %v4954
  %v5586 = vsel %vm5465, %v147, %v4956
  %v5587 = vsel %vm5465, %v148, %v4958
  %v5588 = vsel %vm5465, %v149, %v4960
  %v5589 = vsel %vm5465, %v150, %v4962
  %v5590 = vsel %vm5465, %v151, %v4964
  %v5591 = vsel %vm5465, %v152, %v4966
  %v5592 = vsel %vm5465, %v153, %v4968
  %v5593 = vsel %vm5465, %v154, %v4970
  %v5594 = vsel %vm5465, %v155, %v4972
  %v5595 = vsel %vm5465, %v156, %v4974
  %v5596 = vsel %vm5465, %v157, %v4976
  %v5597 = vsel %vm5465, %v158, %v4978
  %v5598 = vsel %vm5465, %v159, %v4980
  %v5599 = vsel %vm5465, %v160, %v4982
  %v5600 = vsel %vm5465, %v161, %v4984
  %v5601 = vsel %vm5465, %v162, %v4986
  %v5602 = vsel %vm5465, %v163, %v4988
  %v5603 = vsel %vm5465, %v164, %v4990
  %v5604 = vsel %vm5465, %v165, %v4992
  %v5605 = vsel %vm5465, %v166, %v4994
  %v5606 = vsel %vm5465, %v167, %v4996
  %v5607 = vsel %vm5465, %v168, %v4998
  %v5608 = vsel %vm5465, %v169, %v5000
  %v5609 = vsel %vm5465, %v170, %v5002
  %v5610 = vsel %vm5465, %v171, %v5004
  %v5611 = vsel %vm5465, %v172, %v5006
  %v5612 = vsel %vm5465, %v173, %v5008
  %v5613 = vsel %vm5465, %v174, %v5010
  %v5614 = vsel %vm5465, %v175, %v5012
  %v5615 = vsel %vm5465, %v176, %v5014
  %v5616 = vsel %vm5465, %v177, %v5016
  %v5617 = vsel %vm5465, %v178, %v5018
  %v5618 = vsel %vm5465, %v179, %v5020
  %v5619 = vsel %vm5465, %v180, %v5022
  %v5620 = vsel %vm5465, %v181, %v5024
  %v5621 = vsel %vm5465, %v182, %v5026
  %v5622 = vsel %vm5465, %v183, %v5028
  %v5623 = vsel %vm5465, %v184, %v5030
  %v5624 = vsel %vm5465, %v185, %v5032
  %v5625 = vsel %vm5465, %v186, %v5034
  %v5626 = vsel %vm5465, %v187, %v5036
  %v5627 = vsel %vm5465, %v188, %v5038
  %v5628 = vsel %vm5465, %v189, %v5040
  %v5629 = vsel %vm5465, %v190, %v5042
  %v5630 = vsel %vm5465, %v191, %v5044
  %v5631 = vsel %vm5465, %v192, %v5046
  %v5632 = vsel %vm5465, %v193, %v5048
  %v5633 = vsel %vm5465, %v194, %v5050
  %v5634 = vsel %vm5465, %v195, %v5052
  %v5635 = vsel %vm5465, %v196, %v5054
  %v5636 = vsel %vm5465, %v197, %v5056
  %v5637 = vsel %vm5465, %v198, %v5058
  %v5638 = vsel %vm5465, %v199, %v5060
  %v5639 = vsel %vm5465, %v200, %v5062
  %v5640 = vsel %vm5465, %v201, %v5064
  %v5641 = vsel %vm5465, %v202, %v5066
  %v5642 = vsel %vm5465, %v203, %v5068
  %v5643 = vsel %vm5465, %v204, %v5070
  %v5644 = vsel %vm5465, %v205, %v5072
  %v5645 = vsel %vm5465, %v206, %v5074
  %v5646 = vsel %vm5465, %v207, %v5076
  %v5647 = vsel %vm5465, %v208, %v5078
  %v5648 = vsel %vm5465, %v209, %v5080
  %v5649 = vsel %vm5465, %v210, %v5082
  %v5650 = vsel %vm5465, %v211, %v5084
  %v5651 = vsel %vm5465, %v212, %v5086
  %v5652 = vsel %vm5465, %v213, %v5088
  %v5653 = vsel %vm5465, %v214, %v5090
  %v5654 = vsel %vm5465, %v215, %v5092
  %v5655 = vsel %vm5465, %v216, %v5094
  %v5656 = vsel %vm5465, %v217, %v5096
  %v5657 = vsel %vm5465, %v218, %v5098
  %v5658 = vsel %vm5465, %v219, %v5100
  %v5659 = vsel %vm5465, %v220, %v5102
  %v5660 = vsel %vm5465, %v221, %v5104
  %v5661 = vsel %vm5465, %v222, %v5106
  %v5662 = vsel %vm5465, %v223, %v5108
  %v5663 = vsel %vm5465, %v224, %v5110
  %v5664 = vsel %vm5465, %v225, %v5112
  %v5665 = vsel %vm5465, %v226, %v5114
  %v5666 = vsel %vm5465, %v227, %v5116
  %v5667 = vsel %vm5465, %v228, %v5118
  %v5668 = vsel %vm5465, %v229, %v5120
  %v5669 = vsel %vm5465, %v230, %v5122
  %v5670 = vsel %vm5465, %v231, %v5124
  %v5671 = vsel %vm5465, %v232, %v5126
  %v5672 = vsel %vm5465, %v233, %v5128
  %v5673 = vsel %vm5465, %v234, %v5130
  %v5674 = vsel %vm5465, %v235, %v5132
  %v5675 = vsel %vm5465, %v236, %v5134
  %v5676 = vsel %vm5465, %v237, %v5136
  %v5677 = vsel %vm5465, %v238, %v5138
  %v5678 = vsel %vm5465, %v239, %v5140
  %v5679 = vsel %vm5465, %v240, %v5142
  %v5680 = vsel %vm5465, %v241, %v5144
  %v5681 = vsel %vm5465, %v242, %v5146
  %v5682 = vsel %vm5465, %v243, %v5148
  %v5683 = vsel %vm5465, %v244, %v5150
  %v5684 = vsel %vm5465, %v245, %v5152
  %v5685 = vsel %vm5465, %v246, %v5154
  %v5686 = vsel %vm5465, %v247, %v5156
  %v5687 = vsel %vm5465, %v248, %v5158
  %v5688 = vsel %vm5465, %v249, %v5160
  %v5689 = vsel %vm5465, %v250, %v5162
  %v5690 = vsel %vm5465, %v251, %v5164
  %v5691 = vsel %vm5465, %v252, %v5166
  %v5692 = vsel %vm5465, %v253, %v5168
  %v5693 = vsel %vm5465, %v254, %v5170
  %v5694 = vsel %vm5465, %v255, %v5172
  %v5695 = vsel %vm5465, %v256, %v5174
  %v5696 = vsel %vm5465, %v257, %v5176
  %v5697 = vsel %vm5465, %v258, %v5178
  %v5698 = vsel %vm5465, %v259, %v5180
  %v5699 = vsel %vm5465, %v260, %v5182
  %v5700 = vsel %vm5465, %v261, %v5184
  %v5701 = vsel %vm5465, %v262, %v5186
  %v5702 = vsel %vm5465, %v263, %v5188
  %v5703 = vsel %vm5465, %v264, %v5190
  %v5704 = vsel %vm5465, %v265, %v5192
  %v5705 = vsel %vm5465, %v266, %v5194
  %v5706 = vsel %vm5465, %v267, %v5196
  %v5707 = vsel %vm5465, %v268, %v5198
  %v5708 = vsel %vm5465, %v269, %v5200
  %v5709 = vsel %vm5465, %v270, %v5202
  %v5710 = vsel %vm5465, %v271, %v5204
  %v5711 = vsel %vm5465, %v272, %v5206
  %v5712 = vsel %vm5465, %v273, %v5208
  %v5713 = vsel %vm5465, %v274, %v5210
  %v5714 = vsel %vm5465, %v275, %v5212
  %v5715 = vsel %vm5465, %v276, %v5214
  %vm5716 = vcmask 228352
  %5717 = vst.msk [vmem:[%s7] sm:$0xff] %vm5716, %v5466
  %5718 = vst.msk [vmem:[%s7 + $0x8] sm:$0xff] %vm5716, %v5467
  %5719 = vst.msk [vmem:[%s7 + $0x10] sm:$0xff] %vm5716, %v5468
  %5720 = vst.msk [vmem:[%s7 + $0x18] sm:$0xff] %vm5716, %v5469
  %5721 = vst.msk [vmem:[%s7 + $0x20] sm:$0xff] %vm5716, %v5470
  %5722 = vst.msk [vmem:[%s7 + $0x28] sm:$0xff] %vm5716, %v5471
  %5723 = vst.msk [vmem:[%s7 + $0x30] sm:$0xff] %vm5716, %v5472
  %5724 = vst.msk [vmem:[%s7 + $0x38] sm:$0xff] %vm5716, %v5473
  %5725 = vst.msk [vmem:[%s7 + $0x40] sm:$0xff] %vm5716, %v5474
  %5726 = vst.msk [vmem:[%s7 + $0x48] sm:$0xff] %vm5716, %v5475
  %5727 = vst.msk [vmem:[%s7 + $0x50] sm:$0xff] %vm5716, %v5476
  %5728 = vst.msk [vmem:[%s7 + $0x58] sm:$0xff] %vm5716, %v5477
  %5729 = vst.msk [vmem:[%s7 + $0x60] sm:$0xff] %vm5716, %v5478
  %5730 = vst.msk [vmem:[%s7 + $0x68] sm:$0xff] %vm5716, %v5479
  %5731 = vst.msk [vmem:[%s7 + $0x70] sm:$0xff] %vm5716, %v5480
  %5732 = vst.msk [vmem:[%s7 + $0x78] sm:$0xff] %vm5716, %v5481
  %5733 = vst.msk [vmem:[%s7 + $0x80] sm:$0xff] %vm5716, %v5482
  %5734 = vst.msk [vmem:[%s7 + $0x88] sm:$0xff] %vm5716, %v5483
  %5735 = vst.msk [vmem:[%s7 + $0x90] sm:$0xff] %vm5716, %v5484
  %5736 = vst.msk [vmem:[%s7 + $0x98] sm:$0xff] %vm5716, %v5485
  %5737 = vst.msk [vmem:[%s7 + $0xa0] sm:$0xff] %vm5716, %v5486
  %5738 = vst.msk [vmem:[%s7 + $0xa8] sm:$0xff] %vm5716, %v5487
  %5739 = vst.msk [vmem:[%s7 + $0xb0] sm:$0xff] %vm5716, %v5488
  %5740 = vst.msk [vmem:[%s7 + $0xb8] sm:$0xff] %vm5716, %v5489
  %5741 = vst.msk [vmem:[%s7 + $0xc0] sm:$0xff] %vm5716, %v5490
  %5742 = vst.msk [vmem:[%s7 + $0xc8] sm:$0xff] %vm5716, %v5491
  %5743 = vst.msk [vmem:[%s7 + $0xd0] sm:$0xff] %vm5716, %v5492
  %5744 = vst.msk [vmem:[%s7 + $0xd8] sm:$0xff] %vm5716, %v5493
  %5745 = vst.msk [vmem:[%s7 + $0xe0] sm:$0xff] %vm5716, %v5494
  %5746 = vst.msk [vmem:[%s7 + $0xe8] sm:$0xff] %vm5716, %v5495
  %5747 = vst.msk [vmem:[%s7 + $0xf0] sm:$0xff] %vm5716, %v5496
  %5748 = vst.msk [vmem:[%s7 + $0xf8] sm:$0xff] %vm5716, %v5497
  %5749 = vst.msk [vmem:[%s7 + $0x100] sm:$0xff] %vm5716, %v5498
  %5750 = vst.msk [vmem:[%s7 + $0x108] sm:$0xff] %vm5716, %v5499
  %5751 = vst.msk [vmem:[%s7 + $0x110] sm:$0xff] %vm5716, %v5500
  %5752 = vst.msk [vmem:[%s7 + $0x118] sm:$0xff] %vm5716, %v5501
  %5753 = vst.msk [vmem:[%s7 + $0x120] sm:$0xff] %vm5716, %v5502
  %5754 = vst.msk [vmem:[%s7 + $0x128] sm:$0xff] %vm5716, %v5503
  %5755 = vst.msk [vmem:[%s7 + $0x130] sm:$0xff] %vm5716, %v5504
  %5756 = vst.msk [vmem:[%s7 + $0x138] sm:$0xff] %vm5716, %v5505
  %5757 = vst.msk [vmem:[%s7 + $0x140] sm:$0xff] %vm5716, %v5506
  %5758 = vst.msk [vmem:[%s7 + $0x148] sm:$0xff] %vm5716, %v5507
  %5759 = vst.msk [vmem:[%s7 + $0x150] sm:$0xff] %vm5716, %v5508
  %5760 = vst.msk [vmem:[%s7 + $0x158] sm:$0xff] %vm5716, %v5509
  %5761 = vst.msk [vmem:[%s7 + $0x160] sm:$0xff] %vm5716, %v5510
  %5762 = vst.msk [vmem:[%s7 + $0x168] sm:$0xff] %vm5716, %v5511
  %5763 = vst.msk [vmem:[%s7 + $0x170] sm:$0xff] %vm5716, %v5512
  %5764 = vst.msk [vmem:[%s7 + $0x178] sm:$0xff] %vm5716, %v5513
  %5765 = vst.msk [vmem:[%s7 + $0x180] sm:$0xff] %vm5716, %v5514
  %5766 = vst.msk [vmem:[%s7 + $0x188] sm:$0xff] %vm5716, %v5515
  %5767 = vst.msk [vmem:[%s7 + $0x190] sm:$0xff] %vm5716, %v5516
  %5768 = vst.msk [vmem:[%s7 + $0x198] sm:$0xff] %vm5716, %v5517
  %5769 = vst.msk [vmem:[%s7 + $0x1a0] sm:$0xff] %vm5716, %v5518
  %5770 = vst.msk [vmem:[%s7 + $0x1a8] sm:$0xff] %vm5716, %v5519
  %5771 = vst.msk [vmem:[%s7 + $0x1b0] sm:$0xff] %vm5716, %v5520
  %5772 = vst.msk [vmem:[%s7 + $0x1b8] sm:$0xff] %vm5716, %v5521
  %5773 = vst.msk [vmem:[%s7 + $0x1c0] sm:$0xff] %vm5716, %v5522
  %5774 = vst.msk [vmem:[%s7 + $0x1c8] sm:$0xff] %vm5716, %v5523
  %5775 = vst.msk [vmem:[%s7 + $0x1d0] sm:$0xff] %vm5716, %v5524
  %5776 = vst.msk [vmem:[%s7 + $0x1d8] sm:$0xff] %vm5716, %v5525
  %5777 = vst.msk [vmem:[%s7 + $0x1e0] sm:$0xff] %vm5716, %v5526
  %5778 = vst.msk [vmem:[%s7 + $0x1e8] sm:$0xff] %vm5716, %v5527
  %5779 = vst.msk [vmem:[%s7 + $0x1f0] sm:$0xff] %vm5716, %v5528
  %5780 = vst.msk [vmem:[%s7 + $0x1f8] sm:$0xff] %vm5716, %v5529
  %5781 = vst.msk [vmem:[%s7 + $0x200] sm:$0xff] %vm5716, %v5530
  %5782 = vst.msk [vmem:[%s7 + $0x208] sm:$0xff] %vm5716, %v5531
  %5783 = vst.msk [vmem:[%s7 + $0x210] sm:$0xff] %vm5716, %v5532
  %5784 = vst.msk [vmem:[%s7 + $0x218] sm:$0xff] %vm5716, %v5533
  %5785 = vst.msk [vmem:[%s7 + $0x220] sm:$0xff] %vm5716, %v5534
  %5786 = vst.msk [vmem:[%s7 + $0x228] sm:$0xff] %vm5716, %v5535
  %5787 = vst.msk [vmem:[%s7 + $0x230] sm:$0xff] %vm5716, %v5536
  %5788 = vst.msk [vmem:[%s7 + $0x238] sm:$0xff] %vm5716, %v5537
  %5789 = vst.msk [vmem:[%s7 + $0x240] sm:$0xff] %vm5716, %v5538
  %5790 = vst.msk [vmem:[%s7 + $0x248] sm:$0xff] %vm5716, %v5539
  %5791 = vst.msk [vmem:[%s7 + $0x250] sm:$0xff] %vm5716, %v5540
  %5792 = vst.msk [vmem:[%s7 + $0x258] sm:$0xff] %vm5716, %v5541
  %5793 = vst.msk [vmem:[%s7 + $0x260] sm:$0xff] %vm5716, %v5542
  %5794 = vst.msk [vmem:[%s7 + $0x268] sm:$0xff] %vm5716, %v5543
  %5795 = vst.msk [vmem:[%s7 + $0x270] sm:$0xff] %vm5716, %v5544
  %5796 = vst.msk [vmem:[%s7 + $0x278] sm:$0xff] %vm5716, %v5545
  %5797 = vst.msk [vmem:[%s7 + $0x280] sm:$0xff] %vm5716, %v5546
  %5798 = vst.msk [vmem:[%s7 + $0x288] sm:$0xff] %vm5716, %v5547
  %5799 = vst.msk [vmem:[%s7 + $0x290] sm:$0xff] %vm5716, %v5548
  %5800 = vst.msk [vmem:[%s7 + $0x298] sm:$0xff] %vm5716, %v5549
  %5801 = vst.msk [vmem:[%s7 + $0x2a0] sm:$0xff] %vm5716, %v5550
  %5802 = vst.msk [vmem:[%s7 + $0x2a8] sm:$0xff] %vm5716, %v5551
  %5803 = vst.msk [vmem:[%s7 + $0x2b0] sm:$0xff] %vm5716, %v5552
  %5804 = vst.msk [vmem:[%s7 + $0x2b8] sm:$0xff] %vm5716, %v5553
  %5805 = vst.msk [vmem:[%s7 + $0x2c0] sm:$0xff] %vm5716, %v5554
  %5806 = vst.msk [vmem:[%s7 + $0x2c8] sm:$0xff] %vm5716, %v5555
  %5807 = vst.msk [vmem:[%s7 + $0x2d0] sm:$0xff] %vm5716, %v5556
  %5808 = vst.msk [vmem:[%s7 + $0x2d8] sm:$0xff] %vm5716, %v5557
  %5809 = vst.msk [vmem:[%s7 + $0x2e0] sm:$0xff] %vm5716, %v5558
  %5810 = vst.msk [vmem:[%s7 + $0x2e8] sm:$0xff] %vm5716, %v5559
  %5811 = vst.msk [vmem:[%s7 + $0x2f0] sm:$0xff] %vm5716, %v5560
  %5812 = vst.msk [vmem:[%s7 + $0x2f8] sm:$0xff] %vm5716, %v5561
  %5813 = vst.msk [vmem:[%s7 + $0x300] sm:$0xff] %vm5716, %v5562
  %5814 = vst.msk [vmem:[%s7 + $0x308] sm:$0xff] %vm5716, %v5563
  %5815 = vst.msk [vmem:[%s7 + $0x310] sm:$0xff] %vm5716, %v5564
  %5816 = vst.msk [vmem:[%s7 + $0x318] sm:$0xff] %vm5716, %v5565
  %5817 = vst.msk [vmem:[%s7 + $0x320] sm:$0xff] %vm5716, %v5566
  %5818 = vst.msk [vmem:[%s7 + $0x328] sm:$0xff] %vm5716, %v5567
  %5819 = vst.msk [vmem:[%s7 + $0x330] sm:$0xff] %vm5716, %v5568
  %5820 = vst.msk [vmem:[%s7 + $0x338] sm:$0xff] %vm5716, %v5569
  %5821 = vst.msk [vmem:[%s7 + $0x340] sm:$0xff] %vm5716, %v5570
  %5822 = vst.msk [vmem:[%s7 + $0x348] sm:$0xff] %vm5716, %v5571
  %5823 = vst.msk [vmem:[%s7 + $0x350] sm:$0xff] %vm5716, %v5572
  %5824 = vst.msk [vmem:[%s7 + $0x358] sm:$0xff] %vm5716, %v5573
  %5825 = vst.msk [vmem:[%s7 + $0x360] sm:$0xff] %vm5716, %v5574
  %5826 = vst.msk [vmem:[%s7 + $0x368] sm:$0xff] %vm5716, %v5575
  %5827 = vst.msk [vmem:[%s7 + $0x370] sm:$0xff] %vm5716, %v5576
  %5828 = vst.msk [vmem:[%s7 + $0x378] sm:$0xff] %vm5716, %v5577
  %5829 = vst.msk [vmem:[%s7 + $0x380] sm:$0xff] %vm5716, %v5578
  %5830 = vst.msk [vmem:[%s7 + $0x388] sm:$0xff] %vm5716, %v5579
  %5831 = vst.msk [vmem:[%s7 + $0x390] sm:$0xff] %vm5716, %v5580
  %5832 = vst.msk [vmem:[%s7 + $0x398] sm:$0xff] %vm5716, %v5581
  %5833 = vst.msk [vmem:[%s7 + $0x3a0] sm:$0xff] %vm5716, %v5582
  %5834 = vst.msk [vmem:[%s7 + $0x3a8] sm:$0xff] %vm5716, %v5583
  %5835 = vst.msk [vmem:[%s7 + $0x3b0] sm:$0xff] %vm5716, %v5584
  %5836 = vst.msk [vmem:[%s7 + $0x3b8] sm:$0xff] %vm5716, %v5585
  %5837 = vst.msk [vmem:[%s7 + $0x3c0] sm:$0xff] %vm5716, %v5586
  %5838 = vst.msk [vmem:[%s7 + $0x3c8] sm:$0xff] %vm5716, %v5587
  %5839 = vst.msk [vmem:[%s7 + $0x3d0] sm:$0xff] %vm5716, %v5588
  %5840 = vst.msk [vmem:[%s7 + $0x3d8] sm:$0xff] %vm5716, %v5589
  %5841 = vst.msk [vmem:[%s7 + $0x3e0] sm:$0xff] %vm5716, %v5590
  %5842 = vst.msk [vmem:[%s7 + $0x3e8] sm:$0xff] %vm5716, %v5591
  %5843 = vst.msk [vmem:[%s7 + $0x3f0] sm:$0xff] %vm5716, %v5592
  %5844 = vst.msk [vmem:[%s7 + $0x3f8] sm:$0xff] %vm5716, %v5593
  %5845 = vst.msk [vmem:[%s7 + $0x400] sm:$0xff] %vm5716, %v5594
  %5846 = vst.msk [vmem:[%s7 + $0x408] sm:$0xff] %vm5716, %v5595
  %5847 = vst.msk [vmem:[%s7 + $0x410] sm:$0xff] %vm5716, %v5596
  %5848 = vst.msk [vmem:[%s7 + $0x418] sm:$0xff] %vm5716, %v5597
  %5849 = vst.msk [vmem:[%s7 + $0x420] sm:$0xff] %vm5716, %v5598
  %5850 = vst.msk [vmem:[%s7 + $0x428] sm:$0xff] %vm5716, %v5599
  %5851 = vst.msk [vmem:[%s7 + $0x430] sm:$0xff] %vm5716, %v5600
  %5852 = vst.msk [vmem:[%s7 + $0x438] sm:$0xff] %vm5716, %v5601
  %5853 = vst.msk [vmem:[%s7 + $0x440] sm:$0xff] %vm5716, %v5602
  %5854 = vst.msk [vmem:[%s7 + $0x448] sm:$0xff] %vm5716, %v5603
  %5855 = vst.msk [vmem:[%s7 + $0x450] sm:$0xff] %vm5716, %v5604
  %5856 = vst.msk [vmem:[%s7 + $0x458] sm:$0xff] %vm5716, %v5605
  %5857 = vst.msk [vmem:[%s7 + $0x460] sm:$0xff] %vm5716, %v5606
  %5858 = vst.msk [vmem:[%s7 + $0x468] sm:$0xff] %vm5716, %v5607
  %5859 = vst.msk [vmem:[%s7 + $0x470] sm:$0xff] %vm5716, %v5608
  %5860 = vst.msk [vmem:[%s7 + $0x478] sm:$0xff] %vm5716, %v5609
  %5861 = vst.msk [vmem:[%s7 + $0x480] sm:$0xff] %vm5716, %v5610
  %5862 = vst.msk [vmem:[%s7 + $0x488] sm:$0xff] %vm5716, %v5611
  %5863 = vst.msk [vmem:[%s7 + $0x490] sm:$0xff] %vm5716, %v5612
  %5864 = vst.msk [vmem:[%s7 + $0x498] sm:$0xff] %vm5716, %v5613
  %5865 = vst.msk [vmem:[%s7 + $0x4a0] sm:$0xff] %vm5716, %v5614
  %5866 = vst.msk [vmem:[%s7 + $0x4a8] sm:$0xff] %vm5716, %v5615
  %5867 = vst.msk [vmem:[%s7 + $0x4b0] sm:$0xff] %vm5716, %v5616
  %5868 = vst.msk [vmem:[%s7 + $0x4b8] sm:$0xff] %vm5716, %v5617
  %5869 = vst.msk [vmem:[%s7 + $0x4c0] sm:$0xff] %vm5716, %v5618
  %5870 = vst.msk [vmem:[%s7 + $0x4c8] sm:$0xff] %vm5716, %v5619
  %5871 = vst.msk [vmem:[%s7 + $0x4d0] sm:$0xff] %vm5716, %v5620
  %5872 = vst.msk [vmem:[%s7 + $0x4d8] sm:$0xff] %vm5716, %v5621
  %5873 = vst.msk [vmem:[%s7 + $0x4e0] sm:$0xff] %vm5716, %v5622
  %5874 = vst.msk [vmem:[%s7 + $0x4e8] sm:$0xff] %vm5716, %v5623
  %5875 = vst.msk [vmem:[%s7 + $0x4f0] sm:$0xff] %vm5716, %v5624
  %5876 = vst.msk [vmem:[%s7 + $0x4f8] sm:$0xff] %vm5716, %v5625
  %5877 = vst.msk [vmem:[%s7 + $0x500] sm:$0xff] %vm5716, %v5626
  %5878 = vst.msk [vmem:[%s7 + $0x508] sm:$0xff] %vm5716, %v5627
  %5879 = vst.msk [vmem:[%s7 + $0x510] sm:$0xff] %vm5716, %v5628
  %5880 = vst.msk [vmem:[%s7 + $0x518] sm:$0xff] %vm5716, %v5629
  %5881 = vst.msk [vmem:[%s7 + $0x520] sm:$0xff] %vm5716, %v5630
  %5882 = vst.msk [vmem:[%s7 + $0x528] sm:$0xff] %vm5716, %v5631
  %5883 = vst.msk [vmem:[%s7 + $0x530] sm:$0xff] %vm5716, %v5632
  %5884 = vst.msk [vmem:[%s7 + $0x538] sm:$0xff] %vm5716, %v5633
  %5885 = vst.msk [vmem:[%s7 + $0x540] sm:$0xff] %vm5716, %v5634
  %5886 = vst.msk [vmem:[%s7 + $0x548] sm:$0xff] %vm5716, %v5635
  %5887 = vst.msk [vmem:[%s7 + $0x550] sm:$0xff] %vm5716, %v5636
  %5888 = vst.msk [vmem:[%s7 + $0x558] sm:$0xff] %vm5716, %v5637
  %5889 = vst.msk [vmem:[%s7 + $0x560] sm:$0xff] %vm5716, %v5638
  %5890 = vst.msk [vmem:[%s7 + $0x568] sm:$0xff] %vm5716, %v5639
  %5891 = vst.msk [vmem:[%s7 + $0x570] sm:$0xff] %vm5716, %v5640
  %5892 = vst.msk [vmem:[%s7 + $0x578] sm:$0xff] %vm5716, %v5641
  %5893 = vst.msk [vmem:[%s7 + $0x580] sm:$0xff] %vm5716, %v5642
  %5894 = vst.msk [vmem:[%s7 + $0x588] sm:$0xff] %vm5716, %v5643
  %5895 = vst.msk [vmem:[%s7 + $0x590] sm:$0xff] %vm5716, %v5644
  %5896 = vst.msk [vmem:[%s7 + $0x598] sm:$0xff] %vm5716, %v5645
  %5897 = vst.msk [vmem:[%s7 + $0x5a0] sm:$0xff] %vm5716, %v5646
  %5898 = vst.msk [vmem:[%s7 + $0x5a8] sm:$0xff] %vm5716, %v5647
  %5899 = vst.msk [vmem:[%s7 + $0x5b0] sm:$0xff] %vm5716, %v5648
  %5900 = vst.msk [vmem:[%s7 + $0x5b8] sm:$0xff] %vm5716, %v5649
  %5901 = vst.msk [vmem:[%s7 + $0x5c0] sm:$0xff] %vm5716, %v5650
  %5902 = vst.msk [vmem:[%s7 + $0x5c8] sm:$0xff] %vm5716, %v5651
  %5903 = vst.msk [vmem:[%s7 + $0x5d0] sm:$0xff] %vm5716, %v5652
  %5904 = vst.msk [vmem:[%s7 + $0x5d8] sm:$0xff] %vm5716, %v5653
  %5905 = vst.msk [vmem:[%s7 + $0x5e0] sm:$0xff] %vm5716, %v5654
  %5906 = vst.msk [vmem:[%s7 + $0x5e8] sm:$0xff] %vm5716, %v5655
  %5907 = vst.msk [vmem:[%s7 + $0x5f0] sm:$0xff] %vm5716, %v5656
  %5908 = vst.msk [vmem:[%s7 + $0x5f8] sm:$0xff] %vm5716, %v5657
  %5909 = vst.msk [vmem:[%s7 + $0x600] sm:$0xff] %vm5716, %v5658
  %5910 = vst.msk [vmem:[%s7 + $0x608] sm:$0xff] %vm5716, %v5659
  %5911 = vst.msk [vmem:[%s7 + $0x610] sm:$0xff] %vm5716, %v5660
  %5912 = vst.msk [vmem:[%s7 + $0x618] sm:$0xff] %vm5716, %v5661
  %5913 = vst.msk [vmem:[%s7 + $0x620] sm:$0xff] %vm5716, %v5662
  %5914 = vst.msk [vmem:[%s7 + $0x628] sm:$0xff] %vm5716, %v5663
  %5915 = vst.msk [vmem:[%s7 + $0x630] sm:$0xff] %vm5716, %v5664
  %5916 = vst.msk [vmem:[%s7 + $0x638] sm:$0xff] %vm5716, %v5665
  %5917 = vst.msk [vmem:[%s7 + $0x640] sm:$0xff] %vm5716, %v5666
  %5918 = vst.msk [vmem:[%s7 + $0x648] sm:$0xff] %vm5716, %v5667
  %5919 = vst.msk [vmem:[%s7 + $0x650] sm:$0xff] %vm5716, %v5668
  %5920 = vst.msk [vmem:[%s7 + $0x658] sm:$0xff] %vm5716, %v5669
  %5921 = vst.msk [vmem:[%s7 + $0x660] sm:$0xff] %vm5716, %v5670
  %5922 = vst.msk [vmem:[%s7 + $0x668] sm:$0xff] %vm5716, %v5671
  %5923 = vst.msk [vmem:[%s7 + $0x670] sm:$0xff] %vm5716, %v5672
  %5924 = vst.msk [vmem:[%s7 + $0x678] sm:$0xff] %vm5716, %v5673
  %5925 = vst.msk [vmem:[%s7 + $0x680] sm:$0xff] %vm5716, %v5674
  %5926 = vst.msk [vmem:[%s7 + $0x688] sm:$0xff] %vm5716, %v5675
  %5927 = vst.msk [vmem:[%s7 + $0x690] sm:$0xff] %vm5716, %v5676
  %5928 = vst.msk [vmem:[%s7 + $0x698] sm:$0xff] %vm5716, %v5677
  %5929 = vst.msk [vmem:[%s7 + $0x6a0] sm:$0xff] %vm5716, %v5678
  %5930 = vst.msk [vmem:[%s7 + $0x6a8] sm:$0xff] %vm5716, %v5679
  %5931 = vst.msk [vmem:[%s7 + $0x6b0] sm:$0xff] %vm5716, %v5680
  %5932 = vst.msk [vmem:[%s7 + $0x6b8] sm:$0xff] %vm5716, %v5681
  %5933 = vst.msk [vmem:[%s7 + $0x6c0] sm:$0xff] %vm5716, %v5682
  %5934 = vst.msk [vmem:[%s7 + $0x6c8] sm:$0xff] %vm5716, %v5683
  %5935 = vst.msk [vmem:[%s7 + $0x6d0] sm:$0xff] %vm5716, %v5684
  %5936 = vst.msk [vmem:[%s7 + $0x6d8] sm:$0xff] %vm5716, %v5685
  %5937 = vst.msk [vmem:[%s7 + $0x6e0] sm:$0xff] %vm5716, %v5686
  %5938 = vst.msk [vmem:[%s7 + $0x6e8] sm:$0xff] %vm5716, %v5687
  %5939 = vst.msk [vmem:[%s7 + $0x6f0] sm:$0xff] %vm5716, %v5688
  %5940 = vst.msk [vmem:[%s7 + $0x6f8] sm:$0xff] %vm5716, %v5689
  %5941 = vst.msk [vmem:[%s7 + $0x700] sm:$0xff] %vm5716, %v5690
  %5942 = vst.msk [vmem:[%s7 + $0x708] sm:$0xff] %vm5716, %v5691
  %5943 = vst.msk [vmem:[%s7 + $0x710] sm:$0xff] %vm5716, %v5692
  %5944 = vst.msk [vmem:[%s7 + $0x718] sm:$0xff] %vm5716, %v5693
  %5945 = vst.msk [vmem:[%s7 + $0x720] sm:$0xff] %vm5716, %v5694
  %5946 = vst.msk [vmem:[%s7 + $0x728] sm:$0xff] %vm5716, %v5695
  %5947 = vst.msk [vmem:[%s7 + $0x730] sm:$0xff] %vm5716, %v5696
  %5948 = vst.msk [vmem:[%s7 + $0x738] sm:$0xff] %vm5716, %v5697
  %5949 = vst.msk [vmem:[%s7 + $0x740] sm:$0xff] %vm5716, %v5698
  %5950 = vst.msk [vmem:[%s7 + $0x748] sm:$0xff] %vm5716, %v5699
  %5951 = vst.msk [vmem:[%s7 + $0x750] sm:$0xff] %vm5716, %v5700
  %5952 = vst.msk [vmem:[%s7 + $0x758] sm:$0xff] %vm5716, %v5701
  %5953 = vst.msk [vmem:[%s7 + $0x760] sm:$0xff] %vm5716, %v5702
  %5954 = vst.msk [vmem:[%s7 + $0x768] sm:$0xff] %vm5716, %v5703
  %5955 = vst.msk [vmem:[%s7 + $0x770] sm:$0xff] %vm5716, %v5704
  %5956 = vst.msk [vmem:[%s7 + $0x778] sm:$0xff] %vm5716, %v5705
  %5957 = vst.msk [vmem:[%s7 + $0x780] sm:$0xff] %vm5716, %v5706
  %5958 = vst.msk [vmem:[%s7 + $0x788] sm:$0xff] %vm5716, %v5707
  %5959 = vst.msk [vmem:[%s7 + $0x790] sm:$0xff] %vm5716, %v5708
  %5960 = vst.msk [vmem:[%s7 + $0x798] sm:$0xff] %vm5716, %v5709
  %5961 = vst.msk [vmem:[%s7 + $0x7a0] sm:$0xff] %vm5716, %v5710
  %5962 = vst.msk [vmem:[%s7 + $0x7a8] sm:$0xff] %vm5716, %v5711
  %5963 = vst.msk [vmem:[%s7 + $0x7b0] sm:$0xff] %vm5716, %v5712
  %5964 = vst.msk [vmem:[%s7 + $0x7b8] sm:$0xff] %vm5716, %v5713
  %5965 = vst.msk [vmem:[%s7 + $0x7c0] sm:$0xff] %vm5716, %v5714
  %5966 = vst.msk [vmem:[%s7 + $0x7c8] sm:$0xff] %vm5716, %v5715
  // Predicated region
  $region30: #{tpu_custom_call.1} parent=0 // pred_check
    _
  $region31: #{tpu_custom_call.1} parent=0 // pred_check_branch
    %5968 = sbr.rel (0) target = $region33
  $region32: #{tpu_custom_call.1} parent=0 // pred_region
    _
  $region33: #{tpu_custom_call.1} parent=0 // pred_fallthru
    _
  // Predicated region
  $region34: #{tpu_custom_call.1} parent=0 // pred_check
    _
  $region35: #{tpu_custom_call.1} parent=0 // pred_check_branch
    %5970 = sbr.rel (0) target = $region37
  $region36: #{tpu_custom_call.1} parent=0 // pred_region
    _
  $region37: #{tpu_custom_call.1} parent=0 // pred_fallthru
    _

</llo_original>
